<compile_context>
chip_gen: v7x
topology: tpu7x:2x2x1
jax: 0.10.0
libtpu: 0.0.40
codegen_flags: <defaults>
</compile_context>

<pallas_src>
import jax
import jax.numpy as jnp
from jax.experimental import pallas as pl
from jax.experimental.pallas import tpu as pltpu

HIDDEN = 512
OUT = 2
OUT_PAD = 128          # lane-dense output width; wrapper slices back to OUT
EPS = 1e-5
N_BN_LAYERS = 4


def domain_classifier_kernel(x_ref, w_ref, gb_ref, w5_ref, b5_ref, o_ref):
    B = x_ref.shape[0]
    inv_b = jnp.float32(1.0 / B)
    gb = gb_ref[...]                                   # (8, 512) f32: rows 0-3 gamma, 4-7 beta
    h = x_ref[...]                                     # (B, 512) f32
    for i in range(N_BN_LAYERS):
        # Linear (no bias: cancelled by BN mean subtraction), bf16 MXU, f32 acc.
        y = jnp.dot(h.astype(jnp.bfloat16), w_ref[i],
                    preferred_element_type=jnp.float32)            # (B, 512) f32
        # Single-pass batch stats.
        mu = jnp.sum(y, axis=0, keepdims=True) * inv_b             # (1, 512)
        ex2 = jnp.sum(y * y, axis=0, keepdims=True) * inv_b        # (1, 512)
        var = ex2 - mu * mu                                        # biased, as BN training
        gamma = gb[i:i + 1, :]
        beta = gb[N_BN_LAYERS + i:N_BN_LAYERS + i + 1, :]
        scale = gamma * jax.lax.rsqrt(var + EPS)                   # EUP
        shift = beta - mu * scale
        h = jnp.maximum(y * scale + shift, 0.0)                    # one FMA + relu
    # Final Linear(512, 2), padded to 128 lanes for an unmasked store.
    y = jnp.dot(h.astype(jnp.bfloat16), w5_ref[...],
                preferred_element_type=jnp.float32) + b5_ref[...]
    o_ref[...] = y.astype(o_ref.dtype)


def domain_classifier(x, packed):
    """x: (B, 512) f32; packed: (w_stack, gb, w5_pad, b5_pad) from pack_params."""
    B = x.shape[0]
    operands = (x,) + tuple(packed)
    total_bytes = sum(int(a.size) * a.dtype.itemsize for a in operands) + B * OUT_PAD * 4
    vmem_limit = int(min(max(2 * total_bytes + (4 << 20), 16 << 20), 48 << 20))
    out = pl.pallas_call(
        domain_classifier_kernel,
        out_shape=jax.ShapeDtypeStruct((B, OUT_PAD), jnp.float32),
        # Whole problem (bf16 weights ~2.1 MiB + tiny activations) lives in VMEM; no grid.
        in_specs=[pl.BlockSpec(memory_space=pltpu.MemorySpace.VMEM)] * len(operands),
        out_specs=pl.BlockSpec(memory_space=pltpu.MemorySpace.VMEM),
        compiler_params=pltpu.CompilerParams(vmem_limit_bytes=vmem_limit),
    )(*operands)
    return out[:, :OUT]


def init_params(key):
    """PyTorch-equivalent parameters in f32 (weights stored transposed: (in, out))."""
    keys = jax.random.split(key, 10)
    params = []
    k = 0
    bound = 1.0 / jnp.sqrt(HIDDEN)
    for _ in range(N_BN_LAYERS):
        w = jax.random.uniform(keys[k], (HIDDEN, HIDDEN), jnp.float32, -bound, bound)
        b = jax.random.uniform(keys[k + 1], (1, HIDDEN), jnp.float32, -bound, bound)
        k += 2
        gamma = jnp.ones((1, HIDDEN), jnp.float32)
        beta = jnp.zeros((1, HIDDEN), jnp.float32)
        params.extend([w, b, gamma, beta])
    w5 = jax.random.uniform(keys[k], (HIDDEN, OUT), jnp.float32, -bound, bound)
    b5 = jax.random.uniform(keys[k + 1], (1, OUT), jnp.float32, -bound, bound)
    params.extend([w5, b5])
    return tuple(params)


def pack_params(params):
    """Module-layout params -> 4 kernel operands (bf16 weights, f32 BN affine, padded head)."""
    ws, gs, bs = [], [], []
    for i in range(N_BN_LAYERS):
        w, _b, g, be = params[4 * i: 4 * i + 4]      # _b dropped: cancelled by BN mean
        ws.append(w)
        gs.append(g)
        bs.append(be)
    w_stack = jnp.stack(ws, axis=0).astype(jnp.bfloat16)              # (4, 512, 512) bf16
    gb = jnp.concatenate(gs + bs, axis=0).astype(jnp.float32)         # (8, 512) f32
    w5, b5 = params[16], params[17]
    w5_pad = (jnp.zeros((HIDDEN, OUT_PAD), jnp.float32)
              .at[:, :OUT].set(w5).astype(jnp.bfloat16))              # (512, 128) bf16
    b5_pad = jnp.zeros((1, OUT_PAD), jnp.float32).at[:, :OUT].set(b5) # (1, 128) f32
    return (w_stack, gb, w5_pad, b5_pad)


def _reference(x, params):
    """Pure-JAX f32 reference with the full original module semantics (incl. biases)."""
    h = x
    for i in range(N_BN_LAYERS):
        w, b, g, be = params[4 * i: 4 * i + 4]
        y = h @ w + b
        mu = jnp.mean(y, axis=0, keepdims=True)
        var = jnp.mean((y - mu) ** 2, axis=0, keepdims=True)
        h = jnp.maximum((y - mu) * jax.lax.rsqrt(var + EPS) * g + be, 0.0)
    return h @ params[16] + params[17]


if __name__ == "__main__":
    key = jax.random.PRNGKey(0)
    k_x, k_p = jax.random.split(key)
    B = 8  # batch size; feature dim 512 as implied by Linear(512, ...)
    x = jax.random.normal(k_x, (B, HIDDEN), jnp.float32)
    params = init_params(k_p)
    packed = pack_params(params)

    out = domain_classifier(x, packed)
    out = jax.block_until_ready(out)

    ref = _reference(x, params)
    assert out.shape == (B, OUT)
    max_err = float(jnp.max(jnp.abs(out - ref)))
    assert jnp.allclose(out, ref, atol=5e-2, rtol=5e-2), f"mismatch vs reference, max|err|={max_err}"

    print("KERNEL_OK")
</pallas_src>

<mosaic_0001>
module attributes {stable_mosaic.version = 11 : i64} {
  func.func @domain_classifier_kernel(%arg0: memref<8x512xf32, #tpu.memory_space<vmem>>, %arg1: memref<4x512x512xbf16, #tpu.memory_space<vmem>>, %arg2: memref<8x512xf32, #tpu.memory_space<vmem>>, %arg3: memref<512x128xbf16, #tpu.memory_space<vmem>>, %arg4: memref<1x128xf32, #tpu.memory_space<vmem>>, %arg5: memref<8x128xf32, #tpu.memory_space<vmem>>) attributes {dimension_semantics = [], scalar_prefetch = 0 : i64, scratch_operands = 0 : i64, tpu.core_type = #tpu.core_type<tc>} {
    %c0 = arith.constant 0 : index
    %c0_0 = arith.constant 0 : index
    %0 = vector.load %arg2[%c0, %c0_0] : memref<8x512xf32, #tpu.memory_space<vmem>>, vector<8x512xf32>
    %c0_1 = arith.constant 0 : index
    %c0_2 = arith.constant 0 : index
    %1 = vector.load %arg0[%c0_1, %c0_2] : memref<8x512xf32, #tpu.memory_space<vmem>>, vector<8x512xf32>
    %2 = arith.truncf %1 : vector<8x512xf32> to vector<8x512xbf16>
    %c0_3 = arith.constant 0 : index
    %c0_4 = arith.constant 0 : index
    %c0_5 = arith.constant 0 : index
    %3 = vector.load %arg1[%c0_3, %c0_4, %c0_5] : memref<4x512x512xbf16, #tpu.memory_space<vmem>>, vector<1x512x512xbf16>
    %4 = vector.shape_cast %3 : vector<1x512x512xbf16> to vector<512x512xbf16>
    %cst = arith.constant dense<0.000000e+00> : vector<8x512xf32>
    %5 = tpu.matmul %2, %4, %cst {dimension_numbers = #tpu.dot_dimension_numbers<[1], [0], [0], [1], [0, 0, 1, 1], [], []>} : vector<8x512xbf16>, vector<512x512xbf16>, vector<8x512xf32> -> vector<8x512xf32>
    %cst_6 = arith.constant dense<0.000000e+00> : vector<512xf32>
    %6 = vector.multi_reduction <add>, %5, %cst_6 [0] : vector<8x512xf32> to vector<512xf32>
    %7 = vector.shape_cast %6 : vector<512xf32> to vector<1x512xf32>
    %cst_7 = arith.constant 1.250000e-01 : f32
    %8 = vector.broadcast %cst_7 : f32 to vector<1x512xf32>
    %9 = arith.mulf %7, %8 : vector<1x512xf32>
    %10 = arith.mulf %5, %5 : vector<8x512xf32>
    %cst_8 = arith.constant dense<0.000000e+00> : vector<512xf32>
    %11 = vector.multi_reduction <add>, %10, %cst_8 [0] : vector<8x512xf32> to vector<512xf32>
    %12 = vector.shape_cast %11 : vector<512xf32> to vector<1x512xf32>
    %cst_9 = arith.constant 1.250000e-01 : f32
    %13 = vector.broadcast %cst_9 : f32 to vector<1x512xf32>
    %14 = arith.mulf %12, %13 : vector<1x512xf32>
    %15 = arith.mulf %9, %9 : vector<1x512xf32>
    %16 = arith.subf %14, %15 : vector<1x512xf32>
    %17 = vector.extract_strided_slice %0 {offsets = [0, 0], sizes = [1, 512], strides = [1, 1]} : vector<8x512xf32> to vector<1x512xf32>
    %18 = vector.extract_strided_slice %0 {offsets = [4, 0], sizes = [1, 512], strides = [1, 1]} : vector<8x512xf32> to vector<1x512xf32>
    %cst_10 = arith.constant 9.99999974E-6 : f32
    %19 = vector.broadcast %cst_10 : f32 to vector<1x512xf32>
    %20 = arith.addf %16, %19 : vector<1x512xf32>
    %21 = math.rsqrt %20 : vector<1x512xf32>
    %22 = arith.mulf %17, %21 : vector<1x512xf32>
    %23 = arith.mulf %9, %22 : vector<1x512xf32>
    %24 = arith.subf %18, %23 : vector<1x512xf32>
    %25 = vector.broadcast %22 : vector<1x512xf32> to vector<8x512xf32>
    %26 = arith.mulf %5, %25 : vector<8x512xf32>
    %27 = vector.broadcast %24 : vector<1x512xf32> to vector<8x512xf32>
    %28 = arith.addf %26, %27 : vector<8x512xf32>
    %cst_11 = arith.constant 0.000000e+00 : f32
    %29 = vector.broadcast %cst_11 : f32 to vector<8x512xf32>
    %30 = arith.maximumf %28, %29 : vector<8x512xf32>
    %31 = arith.truncf %30 : vector<8x512xf32> to vector<8x512xbf16>
    %c1 = arith.constant 1 : index
    %c0_12 = arith.constant 0 : index
    %c0_13 = arith.constant 0 : index
    %32 = vector.load %arg1[%c1, %c0_12, %c0_13] : memref<4x512x512xbf16, #tpu.memory_space<vmem>>, vector<1x512x512xbf16>
    %33 = vector.shape_cast %32 : vector<1x512x512xbf16> to vector<512x512xbf16>
    %cst_14 = arith.constant dense<0.000000e+00> : vector<8x512xf32>
    %34 = tpu.matmul %31, %33, %cst_14 {dimension_numbers = #tpu.dot_dimension_numbers<[1], [0], [0], [1], [0, 0, 1, 1], [], []>} : vector<8x512xbf16>, vector<512x512xbf16>, vector<8x512xf32> -> vector<8x512xf32>
    %cst_15 = arith.constant dense<0.000000e+00> : vector<512xf32>
    %35 = vector.multi_reduction <add>, %34, %cst_15 [0] : vector<8x512xf32> to vector<512xf32>
    %36 = vector.shape_cast %35 : vector<512xf32> to vector<1x512xf32>
    %cst_16 = arith.constant 1.250000e-01 : f32
    %37 = vector.broadcast %cst_16 : f32 to vector<1x512xf32>
    %38 = arith.mulf %36, %37 : vector<1x512xf32>
    %39 = arith.mulf %34, %34 : vector<8x512xf32>
    %cst_17 = arith.constant dense<0.000000e+00> : vector<512xf32>
    %40 = vector.multi_reduction <add>, %39, %cst_17 [0] : vector<8x512xf32> to vector<512xf32>
    %41 = vector.shape_cast %40 : vector<512xf32> to vector<1x512xf32>
    %cst_18 = arith.constant 1.250000e-01 : f32
    %42 = vector.broadcast %cst_18 : f32 to vector<1x512xf32>
    %43 = arith.mulf %41, %42 : vector<1x512xf32>
    %44 = arith.mulf %38, %38 : vector<1x512xf32>
    %45 = arith.subf %43, %44 : vector<1x512xf32>
    %46 = vector.extract_strided_slice %0 {offsets = [1, 0], sizes = [1, 512], strides = [1, 1]} : vector<8x512xf32> to vector<1x512xf32>
    %47 = vector.extract_strided_slice %0 {offsets = [5, 0], sizes = [1, 512], strides = [1, 1]} : vector<8x512xf32> to vector<1x512xf32>
    %cst_19 = arith.constant 9.99999974E-6 : f32
    %48 = vector.broadcast %cst_19 : f32 to vector<1x512xf32>
    %49 = arith.addf %45, %48 : vector<1x512xf32>
    %50 = math.rsqrt %49 : vector<1x512xf32>
    %51 = arith.mulf %46, %50 : vector<1x512xf32>
    %52 = arith.mulf %38, %51 : vector<1x512xf32>
    %53 = arith.subf %47, %52 : vector<1x512xf32>
    %54 = vector.broadcast %51 : vector<1x512xf32> to vector<8x512xf32>
    %55 = arith.mulf %34, %54 : vector<8x512xf32>
    %56 = vector.broadcast %53 : vector<1x512xf32> to vector<8x512xf32>
    %57 = arith.addf %55, %56 : vector<8x512xf32>
    %cst_20 = arith.constant 0.000000e+00 : f32
    %58 = vector.broadcast %cst_20 : f32 to vector<8x512xf32>
    %59 = arith.maximumf %57, %58 : vector<8x512xf32>
    %60 = arith.truncf %59 : vector<8x512xf32> to vector<8x512xbf16>
    %c2 = arith.constant 2 : index
    %c0_21 = arith.constant 0 : index
    %c0_22 = arith.constant 0 : index
    %61 = vector.load %arg1[%c2, %c0_21, %c0_22] : memref<4x512x512xbf16, #tpu.memory_space<vmem>>, vector<1x512x512xbf16>
    %62 = vector.shape_cast %61 : vector<1x512x512xbf16> to vector<512x512xbf16>
    %cst_23 = arith.constant dense<0.000000e+00> : vector<8x512xf32>
    %63 = tpu.matmul %60, %62, %cst_23 {dimension_numbers = #tpu.dot_dimension_numbers<[1], [0], [0], [1], [0, 0, 1, 1], [], []>} : vector<8x512xbf16>, vector<512x512xbf16>, vector<8x512xf32> -> vector<8x512xf32>
    %cst_24 = arith.constant dense<0.000000e+00> : vector<512xf32>
    %64 = vector.multi_reduction <add>, %63, %cst_24 [0] : vector<8x512xf32> to vector<512xf32>
    %65 = vector.shape_cast %64 : vector<512xf32> to vector<1x512xf32>
    %cst_25 = arith.constant 1.250000e-01 : f32
    %66 = vector.broadcast %cst_25 : f32 to vector<1x512xf32>
    %67 = arith.mulf %65, %66 : vector<1x512xf32>
    %68 = arith.mulf %63, %63 : vector<8x512xf32>
    %cst_26 = arith.constant dense<0.000000e+00> : vector<512xf32>
    %69 = vector.multi_reduction <add>, %68, %cst_26 [0] : vector<8x512xf32> to vector<512xf32>
    %70 = vector.shape_cast %69 : vector<512xf32> to vector<1x512xf32>
    %cst_27 = arith.constant 1.250000e-01 : f32
    %71 = vector.broadcast %cst_27 : f32 to vector<1x512xf32>
    %72 = arith.mulf %70, %71 : vector<1x512xf32>
    %73 = arith.mulf %67, %67 : vector<1x512xf32>
    %74 = arith.subf %72, %73 : vector<1x512xf32>
    %75 = vector.extract_strided_slice %0 {offsets = [2, 0], sizes = [1, 512], strides = [1, 1]} : vector<8x512xf32> to vector<1x512xf32>
    %76 = vector.extract_strided_slice %0 {offsets = [6, 0], sizes = [1, 512], strides = [1, 1]} : vector<8x512xf32> to vector<1x512xf32>
    %cst_28 = arith.constant 9.99999974E-6 : f32
    %77 = vector.broadcast %cst_28 : f32 to vector<1x512xf32>
    %78 = arith.addf %74, %77 : vector<1x512xf32>
    %79 = math.rsqrt %78 : vector<1x512xf32>
    %80 = arith.mulf %75, %79 : vector<1x512xf32>
    %81 = arith.mulf %67, %80 : vector<1x512xf32>
    %82 = arith.subf %76, %81 : vector<1x512xf32>
    %83 = vector.broadcast %80 : vector<1x512xf32> to vector<8x512xf32>
    %84 = arith.mulf %63, %83 : vector<8x512xf32>
    %85 = vector.broadcast %82 : vector<1x512xf32> to vector<8x512xf32>
    %86 = arith.addf %84, %85 : vector<8x512xf32>
    %cst_29 = arith.constant 0.000000e+00 : f32
    %87 = vector.broadcast %cst_29 : f32 to vector<8x512xf32>
    %88 = arith.maximumf %86, %87 : vector<8x512xf32>
    %89 = arith.truncf %88 : vector<8x512xf32> to vector<8x512xbf16>
    %c3 = arith.constant 3 : index
    %c0_30 = arith.constant 0 : index
    %c0_31 = arith.constant 0 : index
    %90 = vector.load %arg1[%c3, %c0_30, %c0_31] : memref<4x512x512xbf16, #tpu.memory_space<vmem>>, vector<1x512x512xbf16>
    %91 = vector.shape_cast %90 : vector<1x512x512xbf16> to vector<512x512xbf16>
    %cst_32 = arith.constant dense<0.000000e+00> : vector<8x512xf32>
    %92 = tpu.matmul %89, %91, %cst_32 {dimension_numbers = #tpu.dot_dimension_numbers<[1], [0], [0], [1], [0, 0, 1, 1], [], []>} : vector<8x512xbf16>, vector<512x512xbf16>, vector<8x512xf32> -> vector<8x512xf32>
    %cst_33 = arith.constant dense<0.000000e+00> : vector<512xf32>
    %93 = vector.multi_reduction <add>, %92, %cst_33 [0] : vector<8x512xf32> to vector<512xf32>
    %94 = vector.shape_cast %93 : vector<512xf32> to vector<1x512xf32>
    %cst_34 = arith.constant 1.250000e-01 : f32
    %95 = vector.broadcast %cst_34 : f32 to vector<1x512xf32>
    %96 = arith.mulf %94, %95 : vector<1x512xf32>
    %97 = arith.mulf %92, %92 : vector<8x512xf32>
    %cst_35 = arith.constant dense<0.000000e+00> : vector<512xf32>
    %98 = vector.multi_reduction <add>, %97, %cst_35 [0] : vector<8x512xf32> to vector<512xf32>
    %99 = vector.shape_cast %98 : vector<512xf32> to vector<1x512xf32>
    %cst_36 = arith.constant 1.250000e-01 : f32
    %100 = vector.broadcast %cst_36 : f32 to vector<1x512xf32>
    %101 = arith.mulf %99, %100 : vector<1x512xf32>
    %102 = arith.mulf %96, %96 : vector<1x512xf32>
    %103 = arith.subf %101, %102 : vector<1x512xf32>
    %104 = vector.extract_strided_slice %0 {offsets = [3, 0], sizes = [1, 512], strides = [1, 1]} : vector<8x512xf32> to vector<1x512xf32>
    %105 = vector.extract_strided_slice %0 {offsets = [7, 0], sizes = [1, 512], strides = [1, 1]} : vector<8x512xf32> to vector<1x512xf32>
    %cst_37 = arith.constant 9.99999974E-6 : f32
    %106 = vector.broadcast %cst_37 : f32 to vector<1x512xf32>
    %107 = arith.addf %103, %106 : vector<1x512xf32>
    %108 = math.rsqrt %107 : vector<1x512xf32>
    %109 = arith.mulf %104, %108 : vector<1x512xf32>
    %110 = arith.mulf %96, %109 : vector<1x512xf32>
    %111 = arith.subf %105, %110 : vector<1x512xf32>
    %112 = vector.broadcast %109 : vector<1x512xf32> to vector<8x512xf32>
    %113 = arith.mulf %92, %112 : vector<8x512xf32>
    %114 = vector.broadcast %111 : vector<1x512xf32> to vector<8x512xf32>
    %115 = arith.addf %113, %114 : vector<8x512xf32>
    %cst_38 = arith.constant 0.000000e+00 : f32
    %116 = vector.broadcast %cst_38 : f32 to vector<8x512xf32>
    %117 = arith.maximumf %115, %116 : vector<8x512xf32>
    %118 = arith.truncf %117 : vector<8x512xf32> to vector<8x512xbf16>
    %c0_39 = arith.constant 0 : index
    %c0_40 = arith.constant 0 : index
    %119 = vector.load %arg3[%c0_39, %c0_40] : memref<512x128xbf16, #tpu.memory_space<vmem>>, vector<512x128xbf16>
    %cst_41 = arith.constant dense<0.000000e+00> : vector<8x128xf32>
    %120 = tpu.matmul %118, %119, %cst_41 {dimension_numbers = #tpu.dot_dimension_numbers<[1], [0], [0], [1], [0, 0, 1, 1], [], []>} : vector<8x512xbf16>, vector<512x128xbf16>, vector<8x128xf32> -> vector<8x128xf32>
    %c0_42 = arith.constant 0 : index
    %c0_43 = arith.constant 0 : index
    %121 = vector.load %arg4[%c0_42, %c0_43] : memref<1x128xf32, #tpu.memory_space<vmem>>, vector<1x128xf32>
    %122 = vector.broadcast %121 : vector<1x128xf32> to vector<8x128xf32>
    %123 = arith.addf %120, %122 : vector<8x128xf32>
    %c0_44 = arith.constant 0 : index
    %c0_45 = arith.constant 0 : index
    %124 = vector.load %arg5[%c0_44, %c0_45] : memref<8x128xf32, #tpu.memory_space<vmem>>, vector<8x128xf32>
    tpu.vector_store %arg5[%c0_44, %c0_45], %123 {strides = array<i32>} : memref<8x128xf32, #tpu.memory_space<vmem>>, vector<8x128xf32>,
    return
  }
}

</mosaic_0001>

<llo_original>
// kernel: tpu_custom_call.1
$region0: #{tpu_custom_call.1}
  #allocation0 [shape = 'u32[]', space=smem, size = 0x4, offset = 0x4, fixed_abs, tag = 'smem constant byte address 0x4 - core index']
  #allocation1 [shape = 'u32[144,128]{1,0:T(1,128)}', space=vmem, size = 0x12000, scoped, tag = 'internal scratch']
  %s0 = inlined_call_operand.hbm [shape: f32[8,512], index: 0, kind: input, shape index: {}]
  %s1 = inlined_call_operand.hbm [shape: bf16[4,512,512], index: 1, kind: input, shape index: {}]
  %s2 = inlined_call_operand.hbm [shape: f32[8,512], index: 2, kind: input, shape index: {}]
  %s3 = inlined_call_operand.hbm [shape: bf16[512,128], index: 3, kind: input, shape index: {}]
  %s4 = inlined_call_operand.hbm [shape: f32[1,128], index: 4, kind: input, shape index: {}]
  %s5 = inlined_call_operand.hbm [shape: f32[8,128], index: 5, kind: output, shape index: {}]
  %s6 = sld [smem:[#allocation0]]
  $region50: #{tpu_custom_call.1} parent=0
    _
  %s8 = ssub.s32 1, %s6
  %s9 = scalar_select 0, %s8, %s6
  $region1: #{tpu_custom_call.1} parent=0
    #allocation2 [shape = 'u8[16384]{0}', space=vmem, size = 0x4000, scoped, tag = 'input window, operand 0, single buffered']
    #allocation3 [shape = 's32[1]{0}', space=sflag, size = 0x4, scoped, tag = 'scoped memory for tpu_custom_call.1']
    #allocation4 [shape = 's32[1]{0}', space=sflag, size = 0x4, scoped, tag = 'scoped memory for tpu_custom_call.1']
    #allocation5 [shape = 'u8[2097152]{0}', space=vmem, size = 0x200000, scoped, tag = 'input window, operand 1, single buffered']
    #allocation6 [shape = 's32[1]{0}', space=sflag, size = 0x4, scoped, tag = 'scoped memory for tpu_custom_call.1']
    #allocation7 [shape = 'u8[16384]{0}', space=vmem, size = 0x4000, scoped, tag = 'input window, operand 2, single buffered']
    #allocation8 [shape = 'u8[131072]{0}', space=vmem, size = 0x20000, scoped, tag = 'input window, operand 3, single buffered']
    #allocation9 [shape = 's32[1]{0}', space=sflag, size = 0x4, scoped, tag = 'scoped memory for tpu_custom_call.1']
    #allocation10 [shape = 'u8[512]{0}', space=vmem, size = 0x400, scoped, tag = 'input window, operand 4, single buffered']
    #allocation11 [shape = 'u8[4096]{0}', space=vmem, size = 0x1000, scoped, tag = 'output window, operand 0, single buffered']
    %10 = vsyncpa [#allocation3], 0
    %11 = vsyncpa [#allocation6], 0
    %12 = vsyncpa [#allocation9], 0
    %13 = vsyncpa [#allocation4], 0
    // Predicated region
    $region2: #{tpu_custom_call.1} parent=1 // pred_check
      _
    $region3: #{tpu_custom_call.1} parent=1 // pred_check_branch
      %15 = sbr.rel (0) target = $region5
    $region4: #{tpu_custom_call.1} parent=1 // pred_region
      %s17 = ssub.s32 512, 512
      %18 = vsyncadd [#allocation3], %s17
      %s20 = sshll.u32 [#allocation2], 4
      %s21 = int_to_ptr.vmem [resolvable:$true] %s20
      %23 = dma.hbm_to_vmem [thread:$0]  %s0, 512, %s21, [#allocation3]
    $region5: #{tpu_custom_call.1} parent=1 // pred_fallthru
      _
    // Predicated region
    $region6: #{tpu_custom_call.1} parent=1 // pred_check
      _
    $region7: #{tpu_custom_call.1} parent=1 // pred_check_branch
      %25 = sbr.rel (0) target = $region9
    $region8: #{tpu_custom_call.1} parent=1 // pred_region
      %s27 = ssub.s32 65536, 65536
      %28 = vsyncadd [#allocation6], %s27
      %s29 = sshll.u32 [#allocation5], 4
      %s30 = int_to_ptr.vmem [resolvable:$true] %s29
      %35 = dma.hbm_to_vmem [thread:$0]  %s1, 65536, %s30, [#allocation6], 256, 256, 16
    $region9: #{tpu_custom_call.1} parent=1 // pred_fallthru
      _
    // Predicated region
    $region10: #{tpu_custom_call.1} parent=1 // pred_check
      _
    $region11: #{tpu_custom_call.1} parent=1 // pred_check_branch
      %37 = sbr.rel (0) target = $region13
    $region12: #{tpu_custom_call.1} parent=1 // pred_region
      %s39 = ssub.s32 512, 512
      %40 = vsyncadd [#allocation6], %s39
      %s42 = sshll.u32 [#allocation7], 4
      %s43 = int_to_ptr.vmem [resolvable:$true] %s42
      %45 = dma.hbm_to_vmem [thread:$0]  %s2, 512, %s43, [#allocation6]
    $region13: #{tpu_custom_call.1} parent=1 // pred_fallthru
      _
    // Predicated region
    $region14: #{tpu_custom_call.1} parent=1 // pred_check
      _
    $region15: #{tpu_custom_call.1} parent=1 // pred_check_branch
      %47 = sbr.rel (0) target = $region17
    $region16: #{tpu_custom_call.1} parent=1 // pred_region
      %s49 = ssub.s32 4096, 4096
      %50 = vsyncadd [#allocation9], %s49
      %s51 = sshll.u32 [#allocation8], 4
      %s52 = int_to_ptr.vmem [resolvable:$true] %s51
      %57 = dma.hbm_to_vmem [thread:$0]  %s3, 4096, %s52, [#allocation9], 64, 64, 4
    $region17: #{tpu_custom_call.1} parent=1 // pred_fallthru
      _
    // Predicated region
    $region18: #{tpu_custom_call.1} parent=1 // pred_check
      _
    $region19: #{tpu_custom_call.1} parent=1 // pred_check_branch
      %59 = sbr.rel (0) target = $region21
    $region20: #{tpu_custom_call.1} parent=1 // pred_region
      %s61 = ssub.s32 16, 16
      %62 = vsyncadd [#allocation9], %s61
      %s64 = sshll.u32 [#allocation10], 4
      %s65 = int_to_ptr.vmem [resolvable:$true] %s64
      %67 = dma.hbm_to_vmem [thread:$0]  %s4, 16, %s65, [#allocation9]
    $region21: #{tpu_custom_call.1} parent=1 // pred_fallthru
      _
    // Predicated region
    $region22: #{tpu_custom_call.1} parent=1 // pred_check
      _
    $region23: #{tpu_custom_call.1} parent=1 // pred_check_branch
      %69 = sbr.rel (0) target = $region25
    $region24: #{tpu_custom_call.1} parent=1 // pred_region
      %70 = dma.done [#allocation3], 512
    $region25: #{tpu_custom_call.1} parent=1 // pred_fallthru
      _
    // Predicated region
    $region26: #{tpu_custom_call.1} parent=1 // pred_check
      _
    $region27: #{tpu_custom_call.1} parent=1 // pred_check_branch
      %72 = sbr.rel (0) target = $region29
    $region28: #{tpu_custom_call.1} parent=1 // pred_region
      %73 = dma.done [#allocation6], 65536
    $region29: #{tpu_custom_call.1} parent=1 // pred_fallthru
      _
    // Predicated region
    $region30: #{tpu_custom_call.1} parent=1 // pred_check
      _
    $region31: #{tpu_custom_call.1} parent=1 // pred_check_branch
      %75 = sbr.rel (0) target = $region33
    $region32: #{tpu_custom_call.1} parent=1 // pred_region
      %76 = dma.done [#allocation6], 512
    $region33: #{tpu_custom_call.1} parent=1 // pred_fallthru
      _
    // Predicated region
    $region34: #{tpu_custom_call.1} parent=1 // pred_check
      _
    $region35: #{tpu_custom_call.1} parent=1 // pred_check_branch
      %78 = sbr.rel (0) target = $region37
    $region36: #{tpu_custom_call.1} parent=1 // pred_region
      %79 = dma.done [#allocation9], 4096
    $region37: #{tpu_custom_call.1} parent=1 // pred_fallthru
      _
    // Predicated region
    $region38: #{tpu_custom_call.1} parent=1 // pred_check
      _
    $region39: #{tpu_custom_call.1} parent=1 // pred_check_branch
      %81 = sbr.rel (0) target = $region41
    $region40: #{tpu_custom_call.1} parent=1 // pred_region
      %82 = dma.done [#allocation9], 16
    $region41: #{tpu_custom_call.1} parent=1 // pred_fallthru
      _
    %v84 = vld [vmem:[#allocation7] sm:$0xff]
    %v85 = vld [vmem:[#allocation7 + $0x8] sm:$0xff]
    %v86 = vld [vmem:[#allocation7 + $0x10] sm:$0xff]
    %v87 = vld [vmem:[#allocation7 + $0x18] sm:$0xff]
    %v88 = vld [vmem:[#allocation2] sm:$0xff]
    %v89 = vld [vmem:[#allocation2 + $0x8] sm:$0xff]
    %v90 = vld [vmem:[#allocation2 + $0x10] sm:$0xff]
    %v91 = vld [vmem:[#allocation2 + $0x18] sm:$0xff]
    %v92 = vpack.c.bf16 %v88, %v88
    %v93 = vpack.c.bf16 %v89, %v89
    %v94 = vpack.c.bf16 %v90, %v90
    %v95 = vpack.c.bf16 %v91, %v91
    %v96 = vld [vmem:[#allocation5] sm:$0xff]
    %v97 = vld [vmem:[#allocation5 + $0x8] sm:$0xff]
    %v98 = vld [vmem:[#allocation5 + $0x10] sm:$0xff]
    %v99 = vld [vmem:[#allocation5 + $0x18] sm:$0xff]
    %v100 = vld [vmem:[#allocation5 + $0x20] sm:$0xff]
    %v101 = vld [vmem:[#allocation5 + $0x28] sm:$0xff]
    %v102 = vld [vmem:[#allocation5 + $0x30] sm:$0xff]
    %v103 = vld [vmem:[#allocation5 + $0x38] sm:$0xff]
    %v104 = vld [vmem:[#allocation5 + $0x40] sm:$0xff]
    %v105 = vld [vmem:[#allocation5 + $0x48] sm:$0xff]
    %v106 = vld [vmem:[#allocation5 + $0x50] sm:$0xff]
    %v107 = vld [vmem:[#allocation5 + $0x58] sm:$0xff]
    %v108 = vld [vmem:[#allocation5 + $0x60] sm:$0xff]
    %v109 = vld [vmem:[#allocation5 + $0x68] sm:$0xff]
    %v110 = vld [vmem:[#allocation5 + $0x70] sm:$0xff]
    %v111 = vld [vmem:[#allocation5 + $0x78] sm:$0xff]
    %v112 = vld [vmem:[#allocation5 + $0x80] sm:$0xff]
    %v113 = vld [vmem:[#allocation5 + $0x88] sm:$0xff]
    %v114 = vld [vmem:[#allocation5 + $0x90] sm:$0xff]
    %v115 = vld [vmem:[#allocation5 + $0x98] sm:$0xff]
    %v116 = vld [vmem:[#allocation5 + $0xa0] sm:$0xff]
    %v117 = vld [vmem:[#allocation5 + $0xa8] sm:$0xff]
    %v118 = vld [vmem:[#allocation5 + $0xb0] sm:$0xff]
    %v119 = vld [vmem:[#allocation5 + $0xb8] sm:$0xff]
    %v120 = vld [vmem:[#allocation5 + $0xc0] sm:$0xff]
    %v121 = vld [vmem:[#allocation5 + $0xc8] sm:$0xff]
    %v122 = vld [vmem:[#allocation5 + $0xd0] sm:$0xff]
    %v123 = vld [vmem:[#allocation5 + $0xd8] sm:$0xff]
    %v124 = vld [vmem:[#allocation5 + $0xe0] sm:$0xff]
    %v125 = vld [vmem:[#allocation5 + $0xe8] sm:$0xff]
    %v126 = vld [vmem:[#allocation5 + $0xf0] sm:$0xff]
    %v127 = vld [vmem:[#allocation5 + $0xf8] sm:$0xff]
    %v128 = vld [vmem:[#allocation5 + $0x100] sm:$0xff]
    %v129 = vld [vmem:[#allocation5 + $0x108] sm:$0xff]
    %v130 = vld [vmem:[#allocation5 + $0x110] sm:$0xff]
    %v131 = vld [vmem:[#allocation5 + $0x118] sm:$0xff]
    %v132 = vld [vmem:[#allocation5 + $0x120] sm:$0xff]
    %v133 = vld [vmem:[#allocation5 + $0x128] sm:$0xff]
    %v134 = vld [vmem:[#allocation5 + $0x130] sm:$0xff]
    %v135 = vld [vmem:[#allocation5 + $0x138] sm:$0xff]
    %v136 = vld [vmem:[#allocation5 + $0x140] sm:$0xff]
    %v137 = vld [vmem:[#allocation5 + $0x148] sm:$0xff]
    %v138 = vld [vmem:[#allocation5 + $0x150] sm:$0xff]
    %v139 = vld [vmem:[#allocation5 + $0x158] sm:$0xff]
    %v140 = vld [vmem:[#allocation5 + $0x160] sm:$0xff]
    %v141 = vld [vmem:[#allocation5 + $0x168] sm:$0xff]
    %v142 = vld [vmem:[#allocation5 + $0x170] sm:$0xff]
    %v143 = vld [vmem:[#allocation5 + $0x178] sm:$0xff]
    %v144 = vld [vmem:[#allocation5 + $0x180] sm:$0xff]
    %v145 = vld [vmem:[#allocation5 + $0x188] sm:$0xff]
    %v146 = vld [vmem:[#allocation5 + $0x190] sm:$0xff]
    %v147 = vld [vmem:[#allocation5 + $0x198] sm:$0xff]
    %v148 = vld [vmem:[#allocation5 + $0x1a0] sm:$0xff]
    %v149 = vld [vmem:[#allocation5 + $0x1a8] sm:$0xff]
    %v150 = vld [vmem:[#allocation5 + $0x1b0] sm:$0xff]
    %v151 = vld [vmem:[#allocation5 + $0x1b8] sm:$0xff]
    %v152 = vld [vmem:[#allocation5 + $0x1c0] sm:$0xff]
    %v153 = vld [vmem:[#allocation5 + $0x1c8] sm:$0xff]
    %v154 = vld [vmem:[#allocation5 + $0x1d0] sm:$0xff]
    %v155 = vld [vmem:[#allocation5 + $0x1d8] sm:$0xff]
    %v156 = vld [vmem:[#allocation5 + $0x1e0] sm:$0xff]
    %v157 = vld [vmem:[#allocation5 + $0x1e8] sm:$0xff]
    %v158 = vld [vmem:[#allocation5 + $0x1f0] sm:$0xff]
    %v159 = vld [vmem:[#allocation5 + $0x1f8] sm:$0xff]
    %v160 = vld [vmem:[#allocation5 + $0x200] sm:$0xff]
    %v161 = vld [vmem:[#allocation5 + $0x208] sm:$0xff]
    %v162 = vld [vmem:[#allocation5 + $0x210] sm:$0xff]
    %v163 = vld [vmem:[#allocation5 + $0x218] sm:$0xff]
    %v164 = vld [vmem:[#allocation5 + $0x220] sm:$0xff]
    %v165 = vld [vmem:[#allocation5 + $0x228] sm:$0xff]
    %v166 = vld [vmem:[#allocation5 + $0x230] sm:$0xff]
    %v167 = vld [vmem:[#allocation5 + $0x238] sm:$0xff]
    %v168 = vld [vmem:[#allocation5 + $0x240] sm:$0xff]
    %v169 = vld [vmem:[#allocation5 + $0x248] sm:$0xff]
    %v170 = vld [vmem:[#allocation5 + $0x250] sm:$0xff]
    %v171 = vld [vmem:[#allocation5 + $0x258] sm:$0xff]
    %v172 = vld [vmem:[#allocation5 + $0x260] sm:$0xff]
    %v173 = vld [vmem:[#allocation5 + $0x268] sm:$0xff]
    %v174 = vld [vmem:[#allocation5 + $0x270] sm:$0xff]
    %v175 = vld [vmem:[#allocation5 + $0x278] sm:$0xff]
    %v176 = vld [vmem:[#allocation5 + $0x280] sm:$0xff]
    %v177 = vld [vmem:[#allocation5 + $0x288] sm:$0xff]
    %v178 = vld [vmem:[#allocation5 + $0x290] sm:$0xff]
    %v179 = vld [vmem:[#allocation5 + $0x298] sm:$0xff]
    %v180 = vld [vmem:[#allocation5 + $0x2a0] sm:$0xff]
    %v181 = vld [vmem:[#allocation5 + $0x2a8] sm:$0xff]
    %v182 = vld [vmem:[#allocation5 + $0x2b0] sm:$0xff]
    %v183 = vld [vmem:[#allocation5 + $0x2b8] sm:$0xff]
    %v184 = vld [vmem:[#allocation5 + $0x2c0] sm:$0xff]
    %v185 = vld [vmem:[#allocation5 + $0x2c8] sm:$0xff]
    %v186 = vld [vmem:[#allocation5 + $0x2d0] sm:$0xff]
    %v187 = vld [vmem:[#allocation5 + $0x2d8] sm:$0xff]
    %v188 = vld [vmem:[#allocation5 + $0x2e0] sm:$0xff]
    %v189 = vld [vmem:[#allocation5 + $0x2e8] sm:$0xff]
    %v190 = vld [vmem:[#allocation5 + $0x2f0] sm:$0xff]
    %v191 = vld [vmem:[#allocation5 + $0x2f8] sm:$0xff]
    %v192 = vld [vmem:[#allocation5 + $0x300] sm:$0xff]
    %v193 = vld [vmem:[#allocation5 + $0x308] sm:$0xff]
    %v194 = vld [vmem:[#allocation5 + $0x310] sm:$0xff]
    %v195 = vld [vmem:[#allocation5 + $0x318] sm:$0xff]
    %v196 = vld [vmem:[#allocation5 + $0x320] sm:$0xff]
    %v197 = vld [vmem:[#allocation5 + $0x328] sm:$0xff]
    %v198 = vld [vmem:[#allocation5 + $0x330] sm:$0xff]
    %v199 = vld [vmem:[#allocation5 + $0x338] sm:$0xff]
    %v200 = vld [vmem:[#allocation5 + $0x340] sm:$0xff]
    %v201 = vld [vmem:[#allocation5 + $0x348] sm:$0xff]
    %v202 = vld [vmem:[#allocation5 + $0x350] sm:$0xff]
    %v203 = vld [vmem:[#allocation5 + $0x358] sm:$0xff]
    %v204 = vld [vmem:[#allocation5 + $0x360] sm:$0xff]
    %v205 = vld [vmem:[#allocation5 + $0x368] sm:$0xff]
    %v206 = vld [vmem:[#allocation5 + $0x370] sm:$0xff]
    %v207 = vld [vmem:[#allocation5 + $0x378] sm:$0xff]
    %v208 = vld [vmem:[#allocation5 + $0x380] sm:$0xff]
    %v209 = vld [vmem:[#allocation5 + $0x388] sm:$0xff]
    %v210 = vld [vmem:[#allocation5 + $0x390] sm:$0xff]
    %v211 = vld [vmem:[#allocation5 + $0x398] sm:$0xff]
    %v212 = vld [vmem:[#allocation5 + $0x3a0] sm:$0xff]
    %v213 = vld [vmem:[#allocation5 + $0x3a8] sm:$0xff]
    %v214 = vld [vmem:[#allocation5 + $0x3b0] sm:$0xff]
    %v215 = vld [vmem:[#allocation5 + $0x3b8] sm:$0xff]
    %v216 = vld [vmem:[#allocation5 + $0x3c0] sm:$0xff]
    %v217 = vld [vmem:[#allocation5 + $0x3c8] sm:$0xff]
    %v218 = vld [vmem:[#allocation5 + $0x3d0] sm:$0xff]
    %v219 = vld [vmem:[#allocation5 + $0x3d8] sm:$0xff]
    %v220 = vld [vmem:[#allocation5 + $0x3e0] sm:$0xff]
    %v221 = vld [vmem:[#allocation5 + $0x3e8] sm:$0xff]
    %v222 = vld [vmem:[#allocation5 + $0x3f0] sm:$0xff]
    %v223 = vld [vmem:[#allocation5 + $0x3f8] sm:$0xff]
    %v352 = vunpack.c.l.b16 %v96
    %v353 = vunpack.c.h.b16 %v96
    %v354 = vunpack.c.l.b16 %v97
    %v355 = vunpack.c.h.b16 %v97
    %v356 = vunpack.c.l.b16 %v98
    %v357 = vunpack.c.h.b16 %v98
    %v358 = vunpack.c.l.b16 %v99
    %v359 = vunpack.c.h.b16 %v99
    %v360 = vunpack.c.l.b16 %v100
    %v361 = vunpack.c.h.b16 %v100
    %v362 = vunpack.c.l.b16 %v101
    %v363 = vunpack.c.h.b16 %v101
    %v364 = vunpack.c.l.b16 %v102
    %v365 = vunpack.c.h.b16 %v102
    %v366 = vunpack.c.l.b16 %v103
    %v367 = vunpack.c.h.b16 %v103
    %v368 = vunpack.c.l.b16 %v104
    %v369 = vunpack.c.h.b16 %v104
    %v370 = vunpack.c.l.b16 %v105
    %v371 = vunpack.c.h.b16 %v105
    %v372 = vunpack.c.l.b16 %v106
    %v373 = vunpack.c.h.b16 %v106
    %v374 = vunpack.c.l.b16 %v107
    %v375 = vunpack.c.h.b16 %v107
    %v376 = vunpack.c.l.b16 %v108
    %v377 = vunpack.c.h.b16 %v108
    %v378 = vunpack.c.l.b16 %v109
    %v379 = vunpack.c.h.b16 %v109
    %v380 = vunpack.c.l.b16 %v110
    %v381 = vunpack.c.h.b16 %v110
    %v382 = vunpack.c.l.b16 %v111
    %v383 = vunpack.c.h.b16 %v111
    %v384 = vunpack.c.l.b16 %v112
    %v385 = vunpack.c.h.b16 %v112
    %v386 = vunpack.c.l.b16 %v113
    %v387 = vunpack.c.h.b16 %v113
    %v388 = vunpack.c.l.b16 %v114
    %v389 = vunpack.c.h.b16 %v114
    %v390 = vunpack.c.l.b16 %v115
    %v391 = vunpack.c.h.b16 %v115
    %v392 = vunpack.c.l.b16 %v116
    %v393 = vunpack.c.h.b16 %v116
    %v394 = vunpack.c.l.b16 %v117
    %v395 = vunpack.c.h.b16 %v117
    %v396 = vunpack.c.l.b16 %v118
    %v397 = vunpack.c.h.b16 %v118
    %v398 = vunpack.c.l.b16 %v119
    %v399 = vunpack.c.h.b16 %v119
    %v400 = vunpack.c.l.b16 %v120
    %v401 = vunpack.c.h.b16 %v120
    %v402 = vunpack.c.l.b16 %v121
    %v403 = vunpack.c.h.b16 %v121
    %v404 = vunpack.c.l.b16 %v122
    %v405 = vunpack.c.h.b16 %v122
    %v406 = vunpack.c.l.b16 %v123
    %v407 = vunpack.c.h.b16 %v123
    %v408 = vunpack.c.l.b16 %v124
    %v409 = vunpack.c.h.b16 %v124
    %v410 = vunpack.c.l.b16 %v125
    %v411 = vunpack.c.h.b16 %v125
    %v412 = vunpack.c.l.b16 %v126
    %v413 = vunpack.c.h.b16 %v126
    %v414 = vunpack.c.l.b16 %v127
    %v415 = vunpack.c.h.b16 %v127
    %v416 = vunpack.c.l.b16 %v128
    %v417 = vunpack.c.h.b16 %v128
    %v418 = vunpack.c.l.b16 %v129
    %v419 = vunpack.c.h.b16 %v129
    %v420 = vunpack.c.l.b16 %v130
    %v421 = vunpack.c.h.b16 %v130
    %v422 = vunpack.c.l.b16 %v131
    %v423 = vunpack.c.h.b16 %v131
    %v424 = vunpack.c.l.b16 %v132
    %v425 = vunpack.c.h.b16 %v132
    %v426 = vunpack.c.l.b16 %v133
    %v427 = vunpack.c.h.b16 %v133
    %v428 = vunpack.c.l.b16 %v134
    %v429 = vunpack.c.h.b16 %v134
    %v430 = vunpack.c.l.b16 %v135
    %v431 = vunpack.c.h.b16 %v135
    %v432 = vunpack.c.l.b16 %v136
    %v433 = vunpack.c.h.b16 %v136
    %v434 = vunpack.c.l.b16 %v137
    %v435 = vunpack.c.h.b16 %v137
    %v436 = vunpack.c.l.b16 %v138
    %v437 = vunpack.c.h.b16 %v138
    %v438 = vunpack.c.l.b16 %v139
    %v439 = vunpack.c.h.b16 %v139
    %v440 = vunpack.c.l.b16 %v140
    %v441 = vunpack.c.h.b16 %v140
    %v442 = vunpack.c.l.b16 %v141
    %v443 = vunpack.c.h.b16 %v141
    %v444 = vunpack.c.l.b16 %v142
    %v445 = vunpack.c.h.b16 %v142
    %v446 = vunpack.c.l.b16 %v143
    %v447 = vunpack.c.h.b16 %v143
    %v448 = vunpack.c.l.b16 %v144
    %v449 = vunpack.c.h.b16 %v144
    %v450 = vunpack.c.l.b16 %v145
    %v451 = vunpack.c.h.b16 %v145
    %v452 = vunpack.c.l.b16 %v146
    %v453 = vunpack.c.h.b16 %v146
    %v454 = vunpack.c.l.b16 %v147
    %v455 = vunpack.c.h.b16 %v147
    %v456 = vunpack.c.l.b16 %v148
    %v457 = vunpack.c.h.b16 %v148
    %v458 = vunpack.c.l.b16 %v149
    %v459 = vunpack.c.h.b16 %v149
    %v460 = vunpack.c.l.b16 %v150
    %v461 = vunpack.c.h.b16 %v150
    %v462 = vunpack.c.l.b16 %v151
    %v463 = vunpack.c.h.b16 %v151
    %v464 = vunpack.c.l.b16 %v152
    %v465 = vunpack.c.h.b16 %v152
    %v466 = vunpack.c.l.b16 %v153
    %v467 = vunpack.c.h.b16 %v153
    %v468 = vunpack.c.l.b16 %v154
    %v469 = vunpack.c.h.b16 %v154
    %v470 = vunpack.c.l.b16 %v155
    %v471 = vunpack.c.h.b16 %v155
    %v472 = vunpack.c.l.b16 %v156
    %v473 = vunpack.c.h.b16 %v156
    %v474 = vunpack.c.l.b16 %v157
    %v475 = vunpack.c.h.b16 %v157
    %v476 = vunpack.c.l.b16 %v158
    %v477 = vunpack.c.h.b16 %v158
    %v478 = vunpack.c.l.b16 %v159
    %v479 = vunpack.c.h.b16 %v159
    %v480 = vunpack.c.l.b16 %v160
    %v481 = vunpack.c.h.b16 %v160
    %v482 = vunpack.c.l.b16 %v161
    %v483 = vunpack.c.h.b16 %v161
    %v484 = vunpack.c.l.b16 %v162
    %v485 = vunpack.c.h.b16 %v162
    %v486 = vunpack.c.l.b16 %v163
    %v487 = vunpack.c.h.b16 %v163
    %v488 = vunpack.c.l.b16 %v164
    %v489 = vunpack.c.h.b16 %v164
    %v490 = vunpack.c.l.b16 %v165
    %v491 = vunpack.c.h.b16 %v165
    %v492 = vunpack.c.l.b16 %v166
    %v493 = vunpack.c.h.b16 %v166
    %v494 = vunpack.c.l.b16 %v167
    %v495 = vunpack.c.h.b16 %v167
    %v496 = vunpack.c.l.b16 %v168
    %v497 = vunpack.c.h.b16 %v168
    %v498 = vunpack.c.l.b16 %v169
    %v499 = vunpack.c.h.b16 %v169
    %v500 = vunpack.c.l.b16 %v170
    %v501 = vunpack.c.h.b16 %v170
    %v502 = vunpack.c.l.b16 %v171
    %v503 = vunpack.c.h.b16 %v171
    %v504 = vunpack.c.l.b16 %v172
    %v505 = vunpack.c.h.b16 %v172
    %v506 = vunpack.c.l.b16 %v173
    %v507 = vunpack.c.h.b16 %v173
    %v508 = vunpack.c.l.b16 %v174
    %v509 = vunpack.c.h.b16 %v174
    %v510 = vunpack.c.l.b16 %v175
    %v511 = vunpack.c.h.b16 %v175
    %v512 = vunpack.c.l.b16 %v176
    %v513 = vunpack.c.h.b16 %v176
    %v514 = vunpack.c.l.b16 %v177
    %v515 = vunpack.c.h.b16 %v177
    %v516 = vunpack.c.l.b16 %v178
    %v517 = vunpack.c.h.b16 %v178
    %v518 = vunpack.c.l.b16 %v179
    %v519 = vunpack.c.h.b16 %v179
    %v520 = vunpack.c.l.b16 %v180
    %v521 = vunpack.c.h.b16 %v180
    %v522 = vunpack.c.l.b16 %v181
    %v523 = vunpack.c.h.b16 %v181
    %v524 = vunpack.c.l.b16 %v182
    %v525 = vunpack.c.h.b16 %v182
    %v526 = vunpack.c.l.b16 %v183
    %v527 = vunpack.c.h.b16 %v183
    %v528 = vunpack.c.l.b16 %v184
    %v529 = vunpack.c.h.b16 %v184
    %v530 = vunpack.c.l.b16 %v185
    %v531 = vunpack.c.h.b16 %v185
    %v532 = vunpack.c.l.b16 %v186
    %v533 = vunpack.c.h.b16 %v186
    %v534 = vunpack.c.l.b16 %v187
    %v535 = vunpack.c.h.b16 %v187
    %v536 = vunpack.c.l.b16 %v188
    %v537 = vunpack.c.h.b16 %v188
    %v538 = vunpack.c.l.b16 %v189
    %v539 = vunpack.c.h.b16 %v189
    %v540 = vunpack.c.l.b16 %v190
    %v541 = vunpack.c.h.b16 %v190
    %v542 = vunpack.c.l.b16 %v191
    %v543 = vunpack.c.h.b16 %v191
    %v544 = vunpack.c.l.b16 %v192
    %v545 = vunpack.c.h.b16 %v192
    %v546 = vunpack.c.l.b16 %v193
    %v547 = vunpack.c.h.b16 %v193
    %v548 = vunpack.c.l.b16 %v194
    %v549 = vunpack.c.h.b16 %v194
    %v550 = vunpack.c.l.b16 %v195
    %v551 = vunpack.c.h.b16 %v195
    %v552 = vunpack.c.l.b16 %v196
    %v553 = vunpack.c.h.b16 %v196
    %v554 = vunpack.c.l.b16 %v197
    %v555 = vunpack.c.h.b16 %v197
    %v556 = vunpack.c.l.b16 %v198
    %v557 = vunpack.c.h.b16 %v198
    %v558 = vunpack.c.l.b16 %v199
    %v559 = vunpack.c.h.b16 %v199
    %v560 = vunpack.c.l.b16 %v200
    %v561 = vunpack.c.h.b16 %v200
    %v562 = vunpack.c.l.b16 %v201
    %v563 = vunpack.c.h.b16 %v201
    %v564 = vunpack.c.l.b16 %v202
    %v565 = vunpack.c.h.b16 %v202
    %v566 = vunpack.c.l.b16 %v203
    %v567 = vunpack.c.h.b16 %v203
    %v568 = vunpack.c.l.b16 %v204
    %v569 = vunpack.c.h.b16 %v204
    %v570 = vunpack.c.l.b16 %v205
    %v571 = vunpack.c.h.b16 %v205
    %v572 = vunpack.c.l.b16 %v206
    %v573 = vunpack.c.h.b16 %v206
    %v574 = vunpack.c.l.b16 %v207
    %v575 = vunpack.c.h.b16 %v207
    %v576 = vunpack.c.l.b16 %v208
    %v577 = vunpack.c.h.b16 %v208
    %v578 = vunpack.c.l.b16 %v209
    %v579 = vunpack.c.h.b16 %v209
    %v580 = vunpack.c.l.b16 %v210
    %v581 = vunpack.c.h.b16 %v210
    %v582 = vunpack.c.l.b16 %v211
    %v583 = vunpack.c.h.b16 %v211
    %v584 = vunpack.c.l.b16 %v212
    %v585 = vunpack.c.h.b16 %v212
    %v586 = vunpack.c.l.b16 %v213
    %v587 = vunpack.c.h.b16 %v213
    %v588 = vunpack.c.l.b16 %v214
    %v589 = vunpack.c.h.b16 %v214
    %v590 = vunpack.c.l.b16 %v215
    %v591 = vunpack.c.h.b16 %v215
    %v592 = vunpack.c.l.b16 %v216
    %v593 = vunpack.c.h.b16 %v216
    %v594 = vunpack.c.l.b16 %v217
    %v595 = vunpack.c.h.b16 %v217
    %v596 = vunpack.c.l.b16 %v218
    %v597 = vunpack.c.h.b16 %v218
    %v598 = vunpack.c.l.b16 %v219
    %v599 = vunpack.c.h.b16 %v219
    %v600 = vunpack.c.l.b16 %v220
    %v601 = vunpack.c.h.b16 %v220
    %v602 = vunpack.c.l.b16 %v221
    %v603 = vunpack.c.h.b16 %v221
    %v604 = vunpack.c.l.b16 %v222
    %v605 = vunpack.c.h.b16 %v222
    %v606 = vunpack.c.l.b16 %v223
    %v607 = vunpack.c.h.b16 %v223
    %v608 = vpack.c.b16 %v356, %v352
    %v609 = vpack.c.b16 %v357, %v353
    %v610 = vpack.c.b16 %v358, %v354
    %v611 = vpack.c.b16 %v359, %v355
    %v612 = vpack.c.b16 %v364, %v360
    %v613 = vpack.c.b16 %v365, %v361
    %v614 = vpack.c.b16 %v366, %v362
    %v615 = vpack.c.b16 %v367, %v363
    %v616 = vpack.c.b16 %v372, %v368
    %v617 = vpack.c.b16 %v373, %v369
    %v618 = vpack.c.b16 %v374, %v370
    %v619 = vpack.c.b16 %v375, %v371
    %v620 = vpack.c.b16 %v380, %v376
    %v621 = vpack.c.b16 %v381, %v377
    %v622 = vpack.c.b16 %v382, %v378
    %v623 = vpack.c.b16 %v383, %v379
    %v624 = vpack.c.b16 %v388, %v384
    %v625 = vpack.c.b16 %v389, %v385
    %v626 = vpack.c.b16 %v390, %v386
    %v627 = vpack.c.b16 %v391, %v387
    %v628 = vpack.c.b16 %v396, %v392
    %v629 = vpack.c.b16 %v397, %v393
    %v630 = vpack.c.b16 %v398, %v394
    %v631 = vpack.c.b16 %v399, %v395
    %v632 = vpack.c.b16 %v404, %v400
    %v633 = vpack.c.b16 %v405, %v401
    %v634 = vpack.c.b16 %v406, %v402
    %v635 = vpack.c.b16 %v407, %v403
    %v636 = vpack.c.b16 %v412, %v408
    %v637 = vpack.c.b16 %v413, %v409
    %v638 = vpack.c.b16 %v414, %v410
    %v639 = vpack.c.b16 %v415, %v411
    %v640 = vpack.c.b16 %v420, %v416
    %v641 = vpack.c.b16 %v421, %v417
    %v642 = vpack.c.b16 %v422, %v418
    %v643 = vpack.c.b16 %v423, %v419
    %v644 = vpack.c.b16 %v428, %v424
    %v645 = vpack.c.b16 %v429, %v425
    %v646 = vpack.c.b16 %v430, %v426
    %v647 = vpack.c.b16 %v431, %v427
    %v648 = vpack.c.b16 %v436, %v432
    %v649 = vpack.c.b16 %v437, %v433
    %v650 = vpack.c.b16 %v438, %v434
    %v651 = vpack.c.b16 %v439, %v435
    %v652 = vpack.c.b16 %v444, %v440
    %v653 = vpack.c.b16 %v445, %v441
    %v654 = vpack.c.b16 %v446, %v442
    %v655 = vpack.c.b16 %v447, %v443
    %v656 = vpack.c.b16 %v452, %v448
    %v657 = vpack.c.b16 %v453, %v449
    %v658 = vpack.c.b16 %v454, %v450
    %v659 = vpack.c.b16 %v455, %v451
    %v660 = vpack.c.b16 %v460, %v456
    %v661 = vpack.c.b16 %v461, %v457
    %v662 = vpack.c.b16 %v462, %v458
    %v663 = vpack.c.b16 %v463, %v459
    %v664 = vpack.c.b16 %v468, %v464
    %v665 = vpack.c.b16 %v469, %v465
    %v666 = vpack.c.b16 %v470, %v466
    %v667 = vpack.c.b16 %v471, %v467
    %v668 = vpack.c.b16 %v476, %v472
    %v669 = vpack.c.b16 %v477, %v473
    %v670 = vpack.c.b16 %v478, %v474
    %v671 = vpack.c.b16 %v479, %v475
    %v672 = vpack.c.b16 %v484, %v480
    %v673 = vpack.c.b16 %v485, %v481
    %v674 = vpack.c.b16 %v486, %v482
    %v675 = vpack.c.b16 %v487, %v483
    %v676 = vpack.c.b16 %v492, %v488
    %v677 = vpack.c.b16 %v493, %v489
    %v678 = vpack.c.b16 %v494, %v490
    %v679 = vpack.c.b16 %v495, %v491
    %v680 = vpack.c.b16 %v500, %v496
    %v681 = vpack.c.b16 %v501, %v497
    %v682 = vpack.c.b16 %v502, %v498
    %v683 = vpack.c.b16 %v503, %v499
    %v684 = vpack.c.b16 %v508, %v504
    %v685 = vpack.c.b16 %v509, %v505
    %v686 = vpack.c.b16 %v510, %v506
    %v687 = vpack.c.b16 %v511, %v507
    %v688 = vpack.c.b16 %v516, %v512
    %v689 = vpack.c.b16 %v517, %v513
    %v690 = vpack.c.b16 %v518, %v514
    %v691 = vpack.c.b16 %v519, %v515
    %v692 = vpack.c.b16 %v524, %v520
    %v693 = vpack.c.b16 %v525, %v521
    %v694 = vpack.c.b16 %v526, %v522
    %v695 = vpack.c.b16 %v527, %v523
    %v696 = vpack.c.b16 %v532, %v528
    %v697 = vpack.c.b16 %v533, %v529
    %v698 = vpack.c.b16 %v534, %v530
    %v699 = vpack.c.b16 %v535, %v531
    %v700 = vpack.c.b16 %v540, %v536
    %v701 = vpack.c.b16 %v541, %v537
    %v702 = vpack.c.b16 %v542, %v538
    %v703 = vpack.c.b16 %v543, %v539
    %v704 = vpack.c.b16 %v548, %v544
    %v705 = vpack.c.b16 %v549, %v545
    %v706 = vpack.c.b16 %v550, %v546
    %v707 = vpack.c.b16 %v551, %v547
    %v708 = vpack.c.b16 %v556, %v552
    %v709 = vpack.c.b16 %v557, %v553
    %v710 = vpack.c.b16 %v558, %v554
    %v711 = vpack.c.b16 %v559, %v555
    %v712 = vpack.c.b16 %v564, %v560
    %v713 = vpack.c.b16 %v565, %v561
    %v714 = vpack.c.b16 %v566, %v562
    %v715 = vpack.c.b16 %v567, %v563
    %v716 = vpack.c.b16 %v572, %v568
    %v717 = vpack.c.b16 %v573, %v569
    %v718 = vpack.c.b16 %v574, %v570
    %v719 = vpack.c.b16 %v575, %v571
    %v720 = vpack.c.b16 %v580, %v576
    %v721 = vpack.c.b16 %v581, %v577
    %v722 = vpack.c.b16 %v582, %v578
    %v723 = vpack.c.b16 %v583, %v579
    %v724 = vpack.c.b16 %v588, %v584
    %v725 = vpack.c.b16 %v589, %v585
    %v726 = vpack.c.b16 %v590, %v586
    %v727 = vpack.c.b16 %v591, %v587
    %v728 = vpack.c.b16 %v596, %v592
    %v729 = vpack.c.b16 %v597, %v593
    %v730 = vpack.c.b16 %v598, %v594
    %v731 = vpack.c.b16 %v599, %v595
    %v732 = vpack.c.b16 %v604, %v600
    %v733 = vpack.c.b16 %v605, %v601
    %v734 = vpack.c.b16 %v606, %v602
    %v735 = vpack.c.b16 %v607, %v603
    %864 = vmatprep.subr.bf16.mxu0 %v609
    %865 = vmatpush1.bf16.msra.mxu0 %v608
    %866 = vmatprep.subr.bf16.mxu0 %v613
    %867 = vmatpush1.bf16.msra.mxu0 %v612
    %868 = vmatprep.subr.bf16.mxu0 %v617
    %869 = vmatpush1.bf16.msra.mxu0 %v616
    %870 = vmatprep.subr.bf16.mxu0 %v621
    %871 = vmatpush1.bf16.msra.mxu0 %v620
    %872 = vmatprep.subr.bf16.mxu0 %v625
    %873 = vmatpush1.bf16.msra.mxu0 %v624
    %874 = vmatprep.subr.bf16.mxu0 %v629
    %875 = vmatpush1.bf16.msra.mxu0 %v628
    %876 = vmatprep.subr.bf16.mxu0 %v633
    %877 = vmatpush1.bf16.msra.mxu0 %v632
    %878 = vmatprep.subr.bf16.mxu0 %v637
    %879 = vmatpush1.bf16.msra.mxu0 %v636
    %880 = vmatprep.subr.bf16.mxu0 %v641
    %881 = vmatpush1.bf16.msra.mxu0 %v640
    %882 = vmatprep.subr.bf16.mxu0 %v645
    %883 = vmatpush1.bf16.msra.mxu0 %v644
    %884 = vmatprep.subr.bf16.mxu0 %v649
    %885 = vmatpush1.bf16.msra.mxu0 %v648
    %886 = vmatprep.subr.bf16.mxu0 %v653
    %887 = vmatpush1.bf16.msra.mxu0 %v652
    %888 = vmatprep.subr.bf16.mxu0 %v657
    %889 = vmatpush1.bf16.msra.mxu0 %v656
    %890 = vmatprep.subr.bf16.mxu0 %v661
    %891 = vmatpush1.bf16.msra.mxu0 %v660
    %892 = vmatprep.subr.bf16.mxu0 %v665
    %893 = vmatpush1.bf16.msra.mxu0 %v664
    %894 = vmatprep.subr.bf16.mxu0 %v669
    %895 = vmatpush1.bf16.msra.mxu0 %v668
    %896 = vmatprep.mubr.bf16.mxu0 %v93
    %897 = vmatmul.mubr.bf16.gmra.mrb[0].mxu0 %v92
    %v898 = vpop.f32.mrb[0].mxu0
    %v899 = vadd.f32 0.0, %v898
    %v900 = vpop.f32.mrb[0].mxu0
    %v901 = vadd.f32 0.0, %v900
    %v902 = vpop.f32.mrb[0].mxu0
    %v903 = vpop.f32.mrb[0].mxu0
    %904 = vdwg.mxu0
    %905 = vmatprep.subr.bf16.mxu0 %v673
    %906 = vmatpush1.bf16.msra.mxu0 %v672
    %907 = vmatprep.subr.bf16.mxu0 %v677
    %908 = vmatpush1.bf16.msra.mxu0 %v676
    %909 = vmatprep.subr.bf16.mxu0 %v681
    %910 = vmatpush1.bf16.msra.mxu0 %v680
    %911 = vmatprep.subr.bf16.mxu0 %v685
    %912 = vmatpush1.bf16.msra.mxu0 %v684
    %913 = vmatprep.subr.bf16.mxu0 %v689
    %914 = vmatpush1.bf16.msra.mxu0 %v688
    %915 = vmatprep.subr.bf16.mxu0 %v693
    %916 = vmatpush1.bf16.msra.mxu0 %v692
    %917 = vmatprep.subr.bf16.mxu0 %v697
    %918 = vmatpush1.bf16.msra.mxu0 %v696
    %919 = vmatprep.subr.bf16.mxu0 %v701
    %920 = vmatpush1.bf16.msra.mxu0 %v700
    %921 = vmatprep.subr.bf16.mxu0 %v705
    %922 = vmatpush1.bf16.msra.mxu0 %v704
    %923 = vmatprep.subr.bf16.mxu0 %v709
    %924 = vmatpush1.bf16.msra.mxu0 %v708
    %925 = vmatprep.subr.bf16.mxu0 %v713
    %926 = vmatpush1.bf16.msra.mxu0 %v712
    %927 = vmatprep.subr.bf16.mxu0 %v717
    %928 = vmatpush1.bf16.msra.mxu0 %v716
    %929 = vmatprep.subr.bf16.mxu0 %v721
    %930 = vmatpush1.bf16.msra.mxu0 %v720
    %931 = vmatprep.subr.bf16.mxu0 %v725
    %932 = vmatpush1.bf16.msra.mxu0 %v724
    %933 = vmatprep.subr.bf16.mxu0 %v729
    %934 = vmatpush1.bf16.msra.mxu0 %v728
    %935 = vmatprep.subr.bf16.mxu0 %v733
    %936 = vmatpush1.bf16.msra.mxu0 %v732
    %937 = vmatprep.mubr.bf16.mxu0 %v95
    %938 = vmatmul.mubr.bf16.gmra.mrb[0].mxu0 %v94
    %v939 = vpop.f32.mrb[0].mxu0
    %v940 = vadd.f32 %v899, %v939
    %v941 = vpop.f32.mrb[0].mxu0
    %v942 = vadd.f32 %v901, %v941
    %v943 = vpop.f32.mrb[0].mxu0
    %v944 = vpop.f32.mrb[0].mxu0
    %945 = vdwg.mxu0
    %946 = vmatprep.subr.bf16.mxu0 %v611
    %947 = vmatpush1.bf16.msra.mxu0 %v610
    %948 = vmatprep.subr.bf16.mxu0 %v615
    %949 = vmatpush1.bf16.msra.mxu0 %v614
    %950 = vmatprep.subr.bf16.mxu0 %v619
    %951 = vmatpush1.bf16.msra.mxu0 %v618
    %952 = vmatprep.subr.bf16.mxu0 %v623
    %953 = vmatpush1.bf16.msra.mxu0 %v622
    %954 = vmatprep.subr.bf16.mxu0 %v627
    %955 = vmatpush1.bf16.msra.mxu0 %v626
    %956 = vmatprep.subr.bf16.mxu0 %v631
    %957 = vmatpush1.bf16.msra.mxu0 %v630
    %958 = vmatprep.subr.bf16.mxu0 %v635
    %959 = vmatpush1.bf16.msra.mxu0 %v634
    %960 = vmatprep.subr.bf16.mxu0 %v639
    %961 = vmatpush1.bf16.msra.mxu0 %v638
    %962 = vmatprep.subr.bf16.mxu0 %v643
    %963 = vmatpush1.bf16.msra.mxu0 %v642
    %964 = vmatprep.subr.bf16.mxu0 %v647
    %965 = vmatpush1.bf16.msra.mxu0 %v646
    %966 = vmatprep.subr.bf16.mxu0 %v651
    %967 = vmatpush1.bf16.msra.mxu0 %v650
    %968 = vmatprep.subr.bf16.mxu0 %v655
    %969 = vmatpush1.bf16.msra.mxu0 %v654
    %970 = vmatprep.subr.bf16.mxu0 %v659
    %971 = vmatpush1.bf16.msra.mxu0 %v658
    %972 = vmatprep.subr.bf16.mxu0 %v663
    %973 = vmatpush1.bf16.msra.mxu0 %v662
    %974 = vmatprep.subr.bf16.mxu0 %v667
    %975 = vmatpush1.bf16.msra.mxu0 %v666
    %976 = vmatprep.subr.bf16.mxu0 %v671
    %977 = vmatpush1.bf16.msra.mxu0 %v670
    %978 = vmatprep.mubr.bf16.mxu0 %v93
    %979 = vmatmul.mubr.bf16.gmra.mrb[0].mxu0 %v92
    %v980 = vpop.f32.mrb[0].mxu0
    %v981 = vadd.f32 0.0, %v980
    %v982 = vpop.f32.mrb[0].mxu0
    %v983 = vadd.f32 0.0, %v982
    %v984 = vpop.f32.mrb[0].mxu0
    %v985 = vpop.f32.mrb[0].mxu0
    %986 = vdwg.mxu0
    %987 = vmatprep.subr.bf16.mxu0 %v675
    %988 = vmatpush1.bf16.msra.mxu0 %v674
    %989 = vmatprep.subr.bf16.mxu0 %v679
    %990 = vmatpush1.bf16.msra.mxu0 %v678
    %991 = vmatprep.subr.bf16.mxu0 %v683
    %992 = vmatpush1.bf16.msra.mxu0 %v682
    %993 = vmatprep.subr.bf16.mxu0 %v687
    %994 = vmatpush1.bf16.msra.mxu0 %v686
    %995 = vmatprep.subr.bf16.mxu0 %v691
    %996 = vmatpush1.bf16.msra.mxu0 %v690
    %997 = vmatprep.subr.bf16.mxu0 %v695
    %998 = vmatpush1.bf16.msra.mxu0 %v694
    %999 = vmatprep.subr.bf16.mxu0 %v699
    %1000 = vmatpush1.bf16.msra.mxu0 %v698
    %1001 = vmatprep.subr.bf16.mxu0 %v703
    %1002 = vmatpush1.bf16.msra.mxu0 %v702
    %1003 = vmatprep.subr.bf16.mxu0 %v707
    %1004 = vmatpush1.bf16.msra.mxu0 %v706
    %1005 = vmatprep.subr.bf16.mxu0 %v711
    %1006 = vmatpush1.bf16.msra.mxu0 %v710
    %1007 = vmatprep.subr.bf16.mxu0 %v715
    %1008 = vmatpush1.bf16.msra.mxu0 %v714
    %1009 = vmatprep.subr.bf16.mxu0 %v719
    %1010 = vmatpush1.bf16.msra.mxu0 %v718
    %1011 = vmatprep.subr.bf16.mxu0 %v723
    %1012 = vmatpush1.bf16.msra.mxu0 %v722
    %1013 = vmatprep.subr.bf16.mxu0 %v727
    %1014 = vmatpush1.bf16.msra.mxu0 %v726
    %1015 = vmatprep.subr.bf16.mxu0 %v731
    %1016 = vmatpush1.bf16.msra.mxu0 %v730
    %1017 = vmatprep.subr.bf16.mxu0 %v735
    %1018 = vmatpush1.bf16.msra.mxu0 %v734
    %1019 = vmatprep.mubr.bf16.mxu0 %v95
    %1020 = vmatmul.mubr.bf16.gmra.mrb[0].mxu0 %v94
    %v1021 = vpop.f32.mrb[0].mxu0
    %v1022 = vadd.f32 %v981, %v1021
    %v1023 = vpop.f32.mrb[0].mxu0
    %v1024 = vadd.f32 %v983, %v1023
    %v1025 = vpop.f32.mrb[0].mxu0
    %v1026 = vpop.f32.mrb[0].mxu0
    %1027 = vdwg.mxu0
    %v1028 = vrot.slane %v940, 4
    %v1029 = vadd.f32 %v940, %v1028
    %v1030 = vrot.slane %v1029, 2
    %v1031 = vadd.f32 %v1029, %v1030
    %v1032 = vrot.slane %v1031, 1
    %v1033 = vadd.f32 %v1031, %v1032
    %v1034 = vrot.slane %v942, 4
    %v1035 = vadd.f32 %v942, %v1034
    %v1036 = vrot.slane %v1035, 2
    %v1037 = vadd.f32 %v1035, %v1036
    %v1038 = vrot.slane %v1037, 1
    %v1039 = vadd.f32 %v1037, %v1038
    %v1040 = vrot.slane %v1022, 4
    %v1041 = vadd.f32 %v1022, %v1040
    %v1042 = vrot.slane %v1041, 2
    %v1043 = vadd.f32 %v1041, %v1042
    %v1044 = vrot.slane %v1043, 1
    %v1045 = vadd.f32 %v1043, %v1044
    %v1046 = vrot.slane %v1024, 4
    %v1047 = vadd.f32 %v1024, %v1046
    %v1048 = vrot.slane %v1047, 2
    %v1049 = vadd.f32 %v1047, %v1048
    %v1050 = vrot.slane %v1049, 1
    %v1051 = vadd.f32 %v1049, %v1050
    %v1052 = vmul.f32 %v1033, 0.125
    %v1053 = vmul.f32 %v1039, 0.125
    %v1054 = vmul.f32 %v1045, 0.125
    %v1055 = vmul.f32 %v1051, 0.125
    %v1056 = vmul.f32 %v940, %v940
    %v1057 = vmul.f32 %v942, %v942
    %v1058 = vmul.f32 %v1022, %v1022
    %v1059 = vmul.f32 %v1024, %v1024
    %v1060 = vrot.slane %v1056, 4
    %v1061 = vadd.f32 %v1056, %v1060
    %v1062 = vrot.slane %v1061, 2
    %v1063 = vadd.f32 %v1061, %v1062
    %v1064 = vrot.slane %v1063, 1
    %v1065 = vadd.f32 %v1063, %v1064
    %v1066 = vrot.slane %v1057, 4
    %v1067 = vadd.f32 %v1057, %v1066
    %v1068 = vrot.slane %v1067, 2
    %v1069 = vadd.f32 %v1067, %v1068
    %v1070 = vrot.slane %v1069, 1
    %v1071 = vadd.f32 %v1069, %v1070
    %v1072 = vrot.slane %v1058, 4
    %v1073 = vadd.f32 %v1058, %v1072
    %v1074 = vrot.slane %v1073, 2
    %v1075 = vadd.f32 %v1073, %v1074
    %v1076 = vrot.slane %v1075, 1
    %v1077 = vadd.f32 %v1075, %v1076
    %v1078 = vrot.slane %v1059, 4
    %v1079 = vadd.f32 %v1059, %v1078
    %v1080 = vrot.slane %v1079, 2
    %v1081 = vadd.f32 %v1079, %v1080
    %v1082 = vrot.slane %v1081, 1
    %v1083 = vadd.f32 %v1081, %v1082
    %v1084 = vmul.f32 %v1065, 0.125
    %v1085 = vmul.f32 %v1071, 0.125
    %v1086 = vmul.f32 %v1077, 0.125
    %v1087 = vmul.f32 %v1083, 0.125
    %v1088 = vmul.f32 %v1052, %v1052
    %v1089 = vmul.f32 %v1053, %v1053
    %v1090 = vmul.f32 %v1054, %v1054
    %v1091 = vmul.f32 %v1055, %v1055
    %v1092 = vsub.f32 %v1084, %v1088
    %v1093 = vsub.f32 %v1085, %v1089
    %v1094 = vsub.f32 %v1086, %v1090
    %v1095 = vsub.f32 %v1087, %v1091
    %v1096 = vadd.f32 %v1092, 1e-05
    %v1097 = vadd.f32 %v1093, 1e-05
    %v1098 = vadd.f32 %v1094, 1e-05
    %v1099 = vadd.f32 %v1095, 1e-05
    %v1100 = vrsqrt.pop %v1096
    %v1101 = vrsqrt.pop %v1097
    %v1102 = vrsqrt.pop %v1098
    %v1103 = vrsqrt.pop %v1099
    %v1104 = vmul.f32 %v84, %v1100
    %v1105 = vmul.f32 %v85, %v1101
    %v1106 = vmul.f32 %v86, %v1102
    %v1107 = vmul.f32 %v87, %v1103
    %v1108 = vmul.f32 %v1052, %v1104
    %v1109 = vmul.f32 %v1053, %v1105
    %v1110 = vmul.f32 %v1054, %v1106
    %v1111 = vmul.f32 %v1055, %v1107
    %v1116 = vrot.slane %v1108, 4
    %v1117 = vrot.slane %v1109, 4
    %v1118 = vrot.slane %v1110, 4
    %v1119 = vrot.slane %v1111, 4
    %v1124 = vsub.f32 %v84, %v1116
    %v1125 = vsub.f32 %v85, %v1117
    %v1126 = vsub.f32 %v86, %v1118
    %v1127 = vsub.f32 %v87, %v1119
    %v1128 = vlaneseq
    %v1129 = vshrl.u32 %v1128, 7
    %v1130 = vsub.s32 0, %v1129
    %v1131 = vrot.slane %v1104, %v1130
    %v1132 = vlaneseq
    %v1133 = vshrl.u32 %v1132, 7
    %v1134 = vsub.s32 0, %v1133
    %v1135 = vrot.slane %v1105, %v1134
    %v1136 = vlaneseq
    %v1137 = vshrl.u32 %v1136, 7
    %v1138 = vsub.s32 0, %v1137
    %v1139 = vrot.slane %v1106, %v1138
    %v1140 = vlaneseq
    %v1141 = vshrl.u32 %v1140, 7
    %v1142 = vsub.s32 0, %v1141
    %v1143 = vrot.slane %v1107, %v1142
    %v1144 = vmul.f32 %v940, %v1131
    %v1145 = vmul.f32 %v942, %v1135
    %v1146 = vmul.f32 %v1022, %v1139
    %v1147 = vmul.f32 %v1024, %v1143
    %v1148 = vlaneseq
    %v1149 = vshrl.u32 %v1148, 7
    %v1150 = vsub.s32 4, %v1149
    %v1151 = vrot.slane %v1124, %v1150
    %v1152 = vlaneseq
    %v1153 = vshrl.u32 %v1152, 7
    %v1154 = vsub.s32 4, %v1153
    %v1155 = vrot.slane %v1125, %v1154
    %v1156 = vlaneseq
    %v1157 = vshrl.u32 %v1156, 7
    %v1158 = vsub.s32 4, %v1157
    %v1159 = vrot.slane %v1126, %v1158
    %v1160 = vlaneseq
    %v1161 = vshrl.u32 %v1160, 7
    %v1162 = vsub.s32 4, %v1161
    %v1163 = vrot.slane %v1127, %v1162
    %v1164 = vadd.f32 %v1144, %v1151
    %v1165 = vadd.f32 %v1145, %v1155
    %v1166 = vadd.f32 %v1146, %v1159
    %v1167 = vadd.f32 %v1147, %v1163
    %v1168 = vmax.f32 %v1164, 0.0
    %v1169 = vmax.f32 %v1165, 0.0
    %v1170 = vmax.f32 %v1166, 0.0
    %v1171 = vmax.f32 %v1167, 0.0
    %v1172 = vpack.c.bf16 %v1168, %v1168
    %v1173 = vpack.c.bf16 %v1169, %v1169
    %v1174 = vpack.c.bf16 %v1170, %v1170
    %v1175 = vpack.c.bf16 %v1171, %v1171
    %s1176 = scalar_lea.vmem [#allocation5], 1024
    %v1177 = vld [vmem:[%s1176] sm:$0xff]
    %v1178 = vld [vmem:[%s1176 + $0x8] sm:$0xff]
    %v1179 = vld [vmem:[%s1176 + $0x10] sm:$0xff]
    %v1180 = vld [vmem:[%s1176 + $0x18] sm:$0xff]
    %v1181 = vld [vmem:[%s1176 + $0x20] sm:$0xff]
    %v1182 = vld [vmem:[%s1176 + $0x28] sm:$0xff]
    %v1183 = vld [vmem:[%s1176 + $0x30] sm:$0xff]
    %v1184 = vld [vmem:[%s1176 + $0x38] sm:$0xff]
    %v1185 = vld [vmem:[%s1176 + $0x40] sm:$0xff]
    %v1186 = vld [vmem:[%s1176 + $0x48] sm:$0xff]
    %v1187 = vld [vmem:[%s1176 + $0x50] sm:$0xff]
    %v1188 = vld [vmem:[%s1176 + $0x58] sm:$0xff]
    %v1189 = vld [vmem:[%s1176 + $0x60] sm:$0xff]
    %v1190 = vld [vmem:[%s1176 + $0x68] sm:$0xff]
    %v1191 = vld [vmem:[%s1176 + $0x70] sm:$0xff]
    %v1192 = vld [vmem:[%s1176 + $0x78] sm:$0xff]
    %v1193 = vld [vmem:[%s1176 + $0x80] sm:$0xff]
    %v1194 = vld [vmem:[%s1176 + $0x88] sm:$0xff]
    %v1195 = vld [vmem:[%s1176 + $0x90] sm:$0xff]
    %v1196 = vld [vmem:[%s1176 + $0x98] sm:$0xff]
    %v1197 = vld [vmem:[%s1176 + $0xa0] sm:$0xff]
    %v1198 = vld [vmem:[%s1176 + $0xa8] sm:$0xff]
    %v1199 = vld [vmem:[%s1176 + $0xb0] sm:$0xff]
    %v1200 = vld [vmem:[%s1176 + $0xb8] sm:$0xff]
    %v1201 = vld [vmem:[%s1176 + $0xc0] sm:$0xff]
    %v1202 = vld [vmem:[%s1176 + $0xc8] sm:$0xff]
    %v1203 = vld [vmem:[%s1176 + $0xd0] sm:$0xff]
    %v1204 = vld [vmem:[%s1176 + $0xd8] sm:$0xff]
    %v1205 = vld [vmem:[%s1176 + $0xe0] sm:$0xff]
    %v1206 = vld [vmem:[%s1176 + $0xe8] sm:$0xff]
    %v1207 = vld [vmem:[%s1176 + $0xf0] sm:$0xff]
    %v1208 = vld [vmem:[%s1176 + $0xf8] sm:$0xff]
    %v1209 = vld [vmem:[%s1176 + $0x100] sm:$0xff]
    %v1210 = vld [vmem:[%s1176 + $0x108] sm:$0xff]
    %v1211 = vld [vmem:[%s1176 + $0x110] sm:$0xff]
    %v1212 = vld [vmem:[%s1176 + $0x118] sm:$0xff]
    %v1213 = vld [vmem:[%s1176 + $0x120] sm:$0xff]
    %v1214 = vld [vmem:[%s1176 + $0x128] sm:$0xff]
    %v1215 = vld [vmem:[%s1176 + $0x130] sm:$0xff]
    %v1216 = vld [vmem:[%s1176 + $0x138] sm:$0xff]
    %v1217 = vld [vmem:[%s1176 + $0x140] sm:$0xff]
    %v1218 = vld [vmem:[%s1176 + $0x148] sm:$0xff]
    %v1219 = vld [vmem:[%s1176 + $0x150] sm:$0xff]
    %v1220 = vld [vmem:[%s1176 + $0x158] sm:$0xff]
    %v1221 = vld [vmem:[%s1176 + $0x160] sm:$0xff]
    %v1222 = vld [vmem:[%s1176 + $0x168] sm:$0xff]
    %v1223 = vld [vmem:[%s1176 + $0x170] sm:$0xff]
    %v1224 = vld [vmem:[%s1176 + $0x178] sm:$0xff]
    %v1225 = vld [vmem:[%s1176 + $0x180] sm:$0xff]
    %v1226 = vld [vmem:[%s1176 + $0x188] sm:$0xff]
    %v1227 = vld [vmem:[%s1176 + $0x190] sm:$0xff]
    %v1228 = vld [vmem:[%s1176 + $0x198] sm:$0xff]
    %v1229 = vld [vmem:[%s1176 + $0x1a0] sm:$0xff]
    %v1230 = vld [vmem:[%s1176 + $0x1a8] sm:$0xff]
    %v1231 = vld [vmem:[%s1176 + $0x1b0] sm:$0xff]
    %v1232 = vld [vmem:[%s1176 + $0x1b8] sm:$0xff]
    %v1233 = vld [vmem:[%s1176 + $0x1c0] sm:$0xff]
    %v1234 = vld [vmem:[%s1176 + $0x1c8] sm:$0xff]
    %v1235 = vld [vmem:[%s1176 + $0x1d0] sm:$0xff]
    %v1236 = vld [vmem:[%s1176 + $0x1d8] sm:$0xff]
    %v1237 = vld [vmem:[%s1176 + $0x1e0] sm:$0xff]
    %v1238 = vld [vmem:[%s1176 + $0x1e8] sm:$0xff]
    %v1239 = vld [vmem:[%s1176 + $0x1f0] sm:$0xff]
    %v1240 = vld [vmem:[%s1176 + $0x1f8] sm:$0xff]
    %v1241 = vld [vmem:[%s1176 + $0x200] sm:$0xff]
    %v1242 = vld [vmem:[%s1176 + $0x208] sm:$0xff]
    %v1243 = vld [vmem:[%s1176 + $0x210] sm:$0xff]
    %v1244 = vld [vmem:[%s1176 + $0x218] sm:$0xff]
    %v1245 = vld [vmem:[%s1176 + $0x220] sm:$0xff]
    %v1246 = vld [vmem:[%s1176 + $0x228] sm:$0xff]
    %v1247 = vld [vmem:[%s1176 + $0x230] sm:$0xff]
    %v1248 = vld [vmem:[%s1176 + $0x238] sm:$0xff]
    %v1249 = vld [vmem:[%s1176 + $0x240] sm:$0xff]
    %v1250 = vld [vmem:[%s1176 + $0x248] sm:$0xff]
    %v1251 = vld [vmem:[%s1176 + $0x250] sm:$0xff]
    %v1252 = vld [vmem:[%s1176 + $0x258] sm:$0xff]
    %v1253 = vld [vmem:[%s1176 + $0x260] sm:$0xff]
    %v1254 = vld [vmem:[%s1176 + $0x268] sm:$0xff]
    %v1255 = vld [vmem:[%s1176 + $0x270] sm:$0xff]
    %v1256 = vld [vmem:[%s1176 + $0x278] sm:$0xff]
    %v1257 = vld [vmem:[%s1176 + $0x280] sm:$0xff]
    %v1258 = vld [vmem:[%s1176 + $0x288] sm:$0xff]
    %v1259 = vld [vmem:[%s1176 + $0x290] sm:$0xff]
    %v1260 = vld [vmem:[%s1176 + $0x298] sm:$0xff]
    %v1261 = vld [vmem:[%s1176 + $0x2a0] sm:$0xff]
    %v1262 = vld [vmem:[%s1176 + $0x2a8] sm:$0xff]
    %v1263 = vld [vmem:[%s1176 + $0x2b0] sm:$0xff]
    %v1264 = vld [vmem:[%s1176 + $0x2b8] sm:$0xff]
    %v1265 = vld [vmem:[%s1176 + $0x2c0] sm:$0xff]
    %v1266 = vld [vmem:[%s1176 + $0x2c8] sm:$0xff]
    %v1267 = vld [vmem:[%s1176 + $0x2d0] sm:$0xff]
    %v1268 = vld [vmem:[%s1176 + $0x2d8] sm:$0xff]
    %v1269 = vld [vmem:[%s1176 + $0x2e0] sm:$0xff]
    %v1270 = vld [vmem:[%s1176 + $0x2e8] sm:$0xff]
    %v1271 = vld [vmem:[%s1176 + $0x2f0] sm:$0xff]
    %v1272 = vld [vmem:[%s1176 + $0x2f8] sm:$0xff]
    %v1273 = vld [vmem:[%s1176 + $0x300] sm:$0xff]
    %v1274 = vld [vmem:[%s1176 + $0x308] sm:$0xff]
    %v1275 = vld [vmem:[%s1176 + $0x310] sm:$0xff]
    %v1276 = vld [vmem:[%s1176 + $0x318] sm:$0xff]
    %v1277 = vld [vmem:[%s1176 + $0x320] sm:$0xff]
    %v1278 = vld [vmem:[%s1176 + $0x328] sm:$0xff]
    %v1279 = vld [vmem:[%s1176 + $0x330] sm:$0xff]
    %v1280 = vld [vmem:[%s1176 + $0x338] sm:$0xff]
    %v1281 = vld [vmem:[%s1176 + $0x340] sm:$0xff]
    %v1282 = vld [vmem:[%s1176 + $0x348] sm:$0xff]
    %v1283 = vld [vmem:[%s1176 + $0x350] sm:$0xff]
    %v1284 = vld [vmem:[%s1176 + $0x358] sm:$0xff]
    %v1285 = vld [vmem:[%s1176 + $0x360] sm:$0xff]
    %v1286 = vld [vmem:[%s1176 + $0x368] sm:$0xff]
    %v1287 = vld [vmem:[%s1176 + $0x370] sm:$0xff]
    %v1288 = vld [vmem:[%s1176 + $0x378] sm:$0xff]
    %v1289 = vld [vmem:[%s1176 + $0x380] sm:$0xff]
    %v1290 = vld [vmem:[%s1176 + $0x388] sm:$0xff]
    %v1291 = vld [vmem:[%s1176 + $0x390] sm:$0xff]
    %v1292 = vld [vmem:[%s1176 + $0x398] sm:$0xff]
    %v1293 = vld [vmem:[%s1176 + $0x3a0] sm:$0xff]
    %v1294 = vld [vmem:[%s1176 + $0x3a8] sm:$0xff]
    %v1295 = vld [vmem:[%s1176 + $0x3b0] sm:$0xff]
    %v1296 = vld [vmem:[%s1176 + $0x3b8] sm:$0xff]
    %v1297 = vld [vmem:[%s1176 + $0x3c0] sm:$0xff]
    %v1298 = vld [vmem:[%s1176 + $0x3c8] sm:$0xff]
    %v1299 = vld [vmem:[%s1176 + $0x3d0] sm:$0xff]
    %v1300 = vld [vmem:[%s1176 + $0x3d8] sm:$0xff]
    %v1301 = vld [vmem:[%s1176 + $0x3e0] sm:$0xff]
    %v1302 = vld [vmem:[%s1176 + $0x3e8] sm:$0xff]
    %v1303 = vld [vmem:[%s1176 + $0x3f0] sm:$0xff]
    %v1304 = vld [vmem:[%s1176 + $0x3f8] sm:$0xff]
    %v1433 = vunpack.c.l.b16 %v1177
    %v1434 = vunpack.c.h.b16 %v1177
    %v1435 = vunpack.c.l.b16 %v1178
    %v1436 = vunpack.c.h.b16 %v1178
    %v1437 = vunpack.c.l.b16 %v1179
    %v1438 = vunpack.c.h.b16 %v1179
    %v1439 = vunpack.c.l.b16 %v1180
    %v1440 = vunpack.c.h.b16 %v1180
    %v1441 = vunpack.c.l.b16 %v1181
    %v1442 = vunpack.c.h.b16 %v1181
    %v1443 = vunpack.c.l.b16 %v1182
    %v1444 = vunpack.c.h.b16 %v1182
    %v1445 = vunpack.c.l.b16 %v1183
    %v1446 = vunpack.c.h.b16 %v1183
    %v1447 = vunpack.c.l.b16 %v1184
    %v1448 = vunpack.c.h.b16 %v1184
    %v1449 = vunpack.c.l.b16 %v1185
    %v1450 = vunpack.c.h.b16 %v1185
    %v1451 = vunpack.c.l.b16 %v1186
    %v1452 = vunpack.c.h.b16 %v1186
    %v1453 = vunpack.c.l.b16 %v1187
    %v1454 = vunpack.c.h.b16 %v1187
    %v1455 = vunpack.c.l.b16 %v1188
    %v1456 = vunpack.c.h.b16 %v1188
    %v1457 = vunpack.c.l.b16 %v1189
    %v1458 = vunpack.c.h.b16 %v1189
    %v1459 = vunpack.c.l.b16 %v1190
    %v1460 = vunpack.c.h.b16 %v1190
    %v1461 = vunpack.c.l.b16 %v1191
    %v1462 = vunpack.c.h.b16 %v1191
    %v1463 = vunpack.c.l.b16 %v1192
    %v1464 = vunpack.c.h.b16 %v1192
    %v1465 = vunpack.c.l.b16 %v1193
    %v1466 = vunpack.c.h.b16 %v1193
    %v1467 = vunpack.c.l.b16 %v1194
    %v1468 = vunpack.c.h.b16 %v1194
    %v1469 = vunpack.c.l.b16 %v1195
    %v1470 = vunpack.c.h.b16 %v1195
    %v1471 = vunpack.c.l.b16 %v1196
    %v1472 = vunpack.c.h.b16 %v1196
    %v1473 = vunpack.c.l.b16 %v1197
    %v1474 = vunpack.c.h.b16 %v1197
    %v1475 = vunpack.c.l.b16 %v1198
    %v1476 = vunpack.c.h.b16 %v1198
    %v1477 = vunpack.c.l.b16 %v1199
    %v1478 = vunpack.c.h.b16 %v1199
    %v1479 = vunpack.c.l.b16 %v1200
    %v1480 = vunpack.c.h.b16 %v1200
    %v1481 = vunpack.c.l.b16 %v1201
    %v1482 = vunpack.c.h.b16 %v1201
    %v1483 = vunpack.c.l.b16 %v1202
    %v1484 = vunpack.c.h.b16 %v1202
    %v1485 = vunpack.c.l.b16 %v1203
    %v1486 = vunpack.c.h.b16 %v1203
    %v1487 = vunpack.c.l.b16 %v1204
    %v1488 = vunpack.c.h.b16 %v1204
    %v1489 = vunpack.c.l.b16 %v1205
    %v1490 = vunpack.c.h.b16 %v1205
    %v1491 = vunpack.c.l.b16 %v1206
    %v1492 = vunpack.c.h.b16 %v1206
    %v1493 = vunpack.c.l.b16 %v1207
    %v1494 = vunpack.c.h.b16 %v1207
    %v1495 = vunpack.c.l.b16 %v1208
    %v1496 = vunpack.c.h.b16 %v1208
    %v1497 = vunpack.c.l.b16 %v1209
    %v1498 = vunpack.c.h.b16 %v1209
    %v1499 = vunpack.c.l.b16 %v1210
    %v1500 = vunpack.c.h.b16 %v1210
    %v1501 = vunpack.c.l.b16 %v1211
    %v1502 = vunpack.c.h.b16 %v1211
    %v1503 = vunpack.c.l.b16 %v1212
    %v1504 = vunpack.c.h.b16 %v1212
    %v1505 = vunpack.c.l.b16 %v1213
    %v1506 = vunpack.c.h.b16 %v1213
    %v1507 = vunpack.c.l.b16 %v1214
    %v1508 = vunpack.c.h.b16 %v1214
    %v1509 = vunpack.c.l.b16 %v1215
    %v1510 = vunpack.c.h.b16 %v1215
    %v1511 = vunpack.c.l.b16 %v1216
    %v1512 = vunpack.c.h.b16 %v1216
    %v1513 = vunpack.c.l.b16 %v1217
    %v1514 = vunpack.c.h.b16 %v1217
    %v1515 = vunpack.c.l.b16 %v1218
    %v1516 = vunpack.c.h.b16 %v1218
    %v1517 = vunpack.c.l.b16 %v1219
    %v1518 = vunpack.c.h.b16 %v1219
    %v1519 = vunpack.c.l.b16 %v1220
    %v1520 = vunpack.c.h.b16 %v1220
    %v1521 = vunpack.c.l.b16 %v1221
    %v1522 = vunpack.c.h.b16 %v1221
    %v1523 = vunpack.c.l.b16 %v1222
    %v1524 = vunpack.c.h.b16 %v1222
    %v1525 = vunpack.c.l.b16 %v1223
    %v1526 = vunpack.c.h.b16 %v1223
    %v1527 = vunpack.c.l.b16 %v1224
    %v1528 = vunpack.c.h.b16 %v1224
    %v1529 = vunpack.c.l.b16 %v1225
    %v1530 = vunpack.c.h.b16 %v1225
    %v1531 = vunpack.c.l.b16 %v1226
    %v1532 = vunpack.c.h.b16 %v1226
    %v1533 = vunpack.c.l.b16 %v1227
    %v1534 = vunpack.c.h.b16 %v1227
    %v1535 = vunpack.c.l.b16 %v1228
    %v1536 = vunpack.c.h.b16 %v1228
    %v1537 = vunpack.c.l.b16 %v1229
    %v1538 = vunpack.c.h.b16 %v1229
    %v1539 = vunpack.c.l.b16 %v1230
    %v1540 = vunpack.c.h.b16 %v1230
    %v1541 = vunpack.c.l.b16 %v1231
    %v1542 = vunpack.c.h.b16 %v1231
    %v1543 = vunpack.c.l.b16 %v1232
    %v1544 = vunpack.c.h.b16 %v1232
    %v1545 = vunpack.c.l.b16 %v1233
    %v1546 = vunpack.c.h.b16 %v1233
    %v1547 = vunpack.c.l.b16 %v1234
    %v1548 = vunpack.c.h.b16 %v1234
    %v1549 = vunpack.c.l.b16 %v1235
    %v1550 = vunpack.c.h.b16 %v1235
    %v1551 = vunpack.c.l.b16 %v1236
    %v1552 = vunpack.c.h.b16 %v1236
    %v1553 = vunpack.c.l.b16 %v1237
    %v1554 = vunpack.c.h.b16 %v1237
    %v1555 = vunpack.c.l.b16 %v1238
    %v1556 = vunpack.c.h.b16 %v1238
    %v1557 = vunpack.c.l.b16 %v1239
    %v1558 = vunpack.c.h.b16 %v1239
    %v1559 = vunpack.c.l.b16 %v1240
    %v1560 = vunpack.c.h.b16 %v1240
    %v1561 = vunpack.c.l.b16 %v1241
    %v1562 = vunpack.c.h.b16 %v1241
    %v1563 = vunpack.c.l.b16 %v1242
    %v1564 = vunpack.c.h.b16 %v1242
    %v1565 = vunpack.c.l.b16 %v1243
    %v1566 = vunpack.c.h.b16 %v1243
    %v1567 = vunpack.c.l.b16 %v1244
    %v1568 = vunpack.c.h.b16 %v1244
    %v1569 = vunpack.c.l.b16 %v1245
    %v1570 = vunpack.c.h.b16 %v1245
    %v1571 = vunpack.c.l.b16 %v1246
    %v1572 = vunpack.c.h.b16 %v1246
    %v1573 = vunpack.c.l.b16 %v1247
    %v1574 = vunpack.c.h.b16 %v1247
    %v1575 = vunpack.c.l.b16 %v1248
    %v1576 = vunpack.c.h.b16 %v1248
    %v1577 = vunpack.c.l.b16 %v1249
    %v1578 = vunpack.c.h.b16 %v1249
    %v1579 = vunpack.c.l.b16 %v1250
    %v1580 = vunpack.c.h.b16 %v1250
    %v1581 = vunpack.c.l.b16 %v1251
    %v1582 = vunpack.c.h.b16 %v1251
    %v1583 = vunpack.c.l.b16 %v1252
    %v1584 = vunpack.c.h.b16 %v1252
    %v1585 = vunpack.c.l.b16 %v1253
    %v1586 = vunpack.c.h.b16 %v1253
    %v1587 = vunpack.c.l.b16 %v1254
    %v1588 = vunpack.c.h.b16 %v1254
    %v1589 = vunpack.c.l.b16 %v1255
    %v1590 = vunpack.c.h.b16 %v1255
    %v1591 = vunpack.c.l.b16 %v1256
    %v1592 = vunpack.c.h.b16 %v1256
    %v1593 = vunpack.c.l.b16 %v1257
    %v1594 = vunpack.c.h.b16 %v1257
    %v1595 = vunpack.c.l.b16 %v1258
    %v1596 = vunpack.c.h.b16 %v1258
    %v1597 = vunpack.c.l.b16 %v1259
    %v1598 = vunpack.c.h.b16 %v1259
    %v1599 = vunpack.c.l.b16 %v1260
    %v1600 = vunpack.c.h.b16 %v1260
    %v1601 = vunpack.c.l.b16 %v1261
    %v1602 = vunpack.c.h.b16 %v1261
    %v1603 = vunpack.c.l.b16 %v1262
    %v1604 = vunpack.c.h.b16 %v1262
    %v1605 = vunpack.c.l.b16 %v1263
    %v1606 = vunpack.c.h.b16 %v1263
    %v1607 = vunpack.c.l.b16 %v1264
    %v1608 = vunpack.c.h.b16 %v1264
    %v1609 = vunpack.c.l.b16 %v1265
    %v1610 = vunpack.c.h.b16 %v1265
    %v1611 = vunpack.c.l.b16 %v1266
    %v1612 = vunpack.c.h.b16 %v1266
    %v1613 = vunpack.c.l.b16 %v1267
    %v1614 = vunpack.c.h.b16 %v1267
    %v1615 = vunpack.c.l.b16 %v1268
    %v1616 = vunpack.c.h.b16 %v1268
    %v1617 = vunpack.c.l.b16 %v1269
    %v1618 = vunpack.c.h.b16 %v1269
    %v1619 = vunpack.c.l.b16 %v1270
    %v1620 = vunpack.c.h.b16 %v1270
    %v1621 = vunpack.c.l.b16 %v1271
    %v1622 = vunpack.c.h.b16 %v1271
    %v1623 = vunpack.c.l.b16 %v1272
    %v1624 = vunpack.c.h.b16 %v1272
    %v1625 = vunpack.c.l.b16 %v1273
    %v1626 = vunpack.c.h.b16 %v1273
    %v1627 = vunpack.c.l.b16 %v1274
    %v1628 = vunpack.c.h.b16 %v1274
    %v1629 = vunpack.c.l.b16 %v1275
    %v1630 = vunpack.c.h.b16 %v1275
    %v1631 = vunpack.c.l.b16 %v1276
    %v1632 = vunpack.c.h.b16 %v1276
    %v1633 = vunpack.c.l.b16 %v1277
    %v1634 = vunpack.c.h.b16 %v1277
    %v1635 = vunpack.c.l.b16 %v1278
    %v1636 = vunpack.c.h.b16 %v1278
    %v1637 = vunpack.c.l.b16 %v1279
    %v1638 = vunpack.c.h.b16 %v1279
    %v1639 = vunpack.c.l.b16 %v1280
    %v1640 = vunpack.c.h.b16 %v1280
    %v1641 = vunpack.c.l.b16 %v1281
    %v1642 = vunpack.c.h.b16 %v1281
    %v1643 = vunpack.c.l.b16 %v1282
    %v1644 = vunpack.c.h.b16 %v1282
    %v1645 = vunpack.c.l.b16 %v1283
    %v1646 = vunpack.c.h.b16 %v1283
    %v1647 = vunpack.c.l.b16 %v1284
    %v1648 = vunpack.c.h.b16 %v1284
    %v1649 = vunpack.c.l.b16 %v1285
    %v1650 = vunpack.c.h.b16 %v1285
    %v1651 = vunpack.c.l.b16 %v1286
    %v1652 = vunpack.c.h.b16 %v1286
    %v1653 = vunpack.c.l.b16 %v1287
    %v1654 = vunpack.c.h.b16 %v1287
    %v1655 = vunpack.c.l.b16 %v1288
    %v1656 = vunpack.c.h.b16 %v1288
    %v1657 = vunpack.c.l.b16 %v1289
    %v1658 = vunpack.c.h.b16 %v1289
    %v1659 = vunpack.c.l.b16 %v1290
    %v1660 = vunpack.c.h.b16 %v1290
    %v1661 = vunpack.c.l.b16 %v1291
    %v1662 = vunpack.c.h.b16 %v1291
    %v1663 = vunpack.c.l.b16 %v1292
    %v1664 = vunpack.c.h.b16 %v1292
    %v1665 = vunpack.c.l.b16 %v1293
    %v1666 = vunpack.c.h.b16 %v1293
    %v1667 = vunpack.c.l.b16 %v1294
    %v1668 = vunpack.c.h.b16 %v1294
    %v1669 = vunpack.c.l.b16 %v1295
    %v1670 = vunpack.c.h.b16 %v1295
    %v1671 = vunpack.c.l.b16 %v1296
    %v1672 = vunpack.c.h.b16 %v1296
    %v1673 = vunpack.c.l.b16 %v1297
    %v1674 = vunpack.c.h.b16 %v1297
    %v1675 = vunpack.c.l.b16 %v1298
    %v1676 = vunpack.c.h.b16 %v1298
    %v1677 = vunpack.c.l.b16 %v1299
    %v1678 = vunpack.c.h.b16 %v1299
    %v1679 = vunpack.c.l.b16 %v1300
    %v1680 = vunpack.c.h.b16 %v1300
    %v1681 = vunpack.c.l.b16 %v1301
    %v1682 = vunpack.c.h.b16 %v1301
    %v1683 = vunpack.c.l.b16 %v1302
    %v1684 = vunpack.c.h.b16 %v1302
    %v1685 = vunpack.c.l.b16 %v1303
    %v1686 = vunpack.c.h.b16 %v1303
    %v1687 = vunpack.c.l.b16 %v1304
    %v1688 = vunpack.c.h.b16 %v1304
    %v1689 = vpack.c.b16 %v1437, %v1433
    %v1690 = vpack.c.b16 %v1438, %v1434
    %v1691 = vpack.c.b16 %v1439, %v1435
    %v1692 = vpack.c.b16 %v1440, %v1436
    %v1693 = vpack.c.b16 %v1445, %v1441
    %v1694 = vpack.c.b16 %v1446, %v1442
    %v1695 = vpack.c.b16 %v1447, %v1443
    %v1696 = vpack.c.b16 %v1448, %v1444
    %v1697 = vpack.c.b16 %v1453, %v1449
    %v1698 = vpack.c.b16 %v1454, %v1450
    %v1699 = vpack.c.b16 %v1455, %v1451
    %v1700 = vpack.c.b16 %v1456, %v1452
    %v1701 = vpack.c.b16 %v1461, %v1457
    %v1702 = vpack.c.b16 %v1462, %v1458
    %v1703 = vpack.c.b16 %v1463, %v1459
    %v1704 = vpack.c.b16 %v1464, %v1460
    %v1705 = vpack.c.b16 %v1469, %v1465
    %v1706 = vpack.c.b16 %v1470, %v1466
    %v1707 = vpack.c.b16 %v1471, %v1467
    %v1708 = vpack.c.b16 %v1472, %v1468
    %v1709 = vpack.c.b16 %v1477, %v1473
    %v1710 = vpack.c.b16 %v1478, %v1474
    %v1711 = vpack.c.b16 %v1479, %v1475
    %v1712 = vpack.c.b16 %v1480, %v1476
    %v1713 = vpack.c.b16 %v1485, %v1481
    %v1714 = vpack.c.b16 %v1486, %v1482
    %v1715 = vpack.c.b16 %v1487, %v1483
    %v1716 = vpack.c.b16 %v1488, %v1484
    %v1717 = vpack.c.b16 %v1493, %v1489
    %v1718 = vpack.c.b16 %v1494, %v1490
    %v1719 = vpack.c.b16 %v1495, %v1491
    %v1720 = vpack.c.b16 %v1496, %v1492
    %v1721 = vpack.c.b16 %v1501, %v1497
    %v1722 = vpack.c.b16 %v1502, %v1498
    %v1723 = vpack.c.b16 %v1503, %v1499
    %v1724 = vpack.c.b16 %v1504, %v1500
    %v1725 = vpack.c.b16 %v1509, %v1505
    %v1726 = vpack.c.b16 %v1510, %v1506
    %v1727 = vpack.c.b16 %v1511, %v1507
    %v1728 = vpack.c.b16 %v1512, %v1508
    %v1729 = vpack.c.b16 %v1517, %v1513
    %v1730 = vpack.c.b16 %v1518, %v1514
    %v1731 = vpack.c.b16 %v1519, %v1515
    %v1732 = vpack.c.b16 %v1520, %v1516
    %v1733 = vpack.c.b16 %v1525, %v1521
    %v1734 = vpack.c.b16 %v1526, %v1522
    %v1735 = vpack.c.b16 %v1527, %v1523
    %v1736 = vpack.c.b16 %v1528, %v1524
    %v1737 = vpack.c.b16 %v1533, %v1529
    %v1738 = vpack.c.b16 %v1534, %v1530
    %v1739 = vpack.c.b16 %v1535, %v1531
    %v1740 = vpack.c.b16 %v1536, %v1532
    %v1741 = vpack.c.b16 %v1541, %v1537
    %v1742 = vpack.c.b16 %v1542, %v1538
    %v1743 = vpack.c.b16 %v1543, %v1539
    %v1744 = vpack.c.b16 %v1544, %v1540
    %v1745 = vpack.c.b16 %v1549, %v1545
    %v1746 = vpack.c.b16 %v1550, %v1546
    %v1747 = vpack.c.b16 %v1551, %v1547
    %v1748 = vpack.c.b16 %v1552, %v1548
    %v1749 = vpack.c.b16 %v1557, %v1553
    %v1750 = vpack.c.b16 %v1558, %v1554
    %v1751 = vpack.c.b16 %v1559, %v1555
    %v1752 = vpack.c.b16 %v1560, %v1556
    %v1753 = vpack.c.b16 %v1565, %v1561
    %v1754 = vpack.c.b16 %v1566, %v1562
    %v1755 = vpack.c.b16 %v1567, %v1563
    %v1756 = vpack.c.b16 %v1568, %v1564
    %v1757 = vpack.c.b16 %v1573, %v1569
    %v1758 = vpack.c.b16 %v1574, %v1570
    %v1759 = vpack.c.b16 %v1575, %v1571
    %v1760 = vpack.c.b16 %v1576, %v1572
    %v1761 = vpack.c.b16 %v1581, %v1577
    %v1762 = vpack.c.b16 %v1582, %v1578
    %v1763 = vpack.c.b16 %v1583, %v1579
    %v1764 = vpack.c.b16 %v1584, %v1580
    %v1765 = vpack.c.b16 %v1589, %v1585
    %v1766 = vpack.c.b16 %v1590, %v1586
    %v1767 = vpack.c.b16 %v1591, %v1587
    %v1768 = vpack.c.b16 %v1592, %v1588
    %v1769 = vpack.c.b16 %v1597, %v1593
    %v1770 = vpack.c.b16 %v1598, %v1594
    %v1771 = vpack.c.b16 %v1599, %v1595
    %v1772 = vpack.c.b16 %v1600, %v1596
    %v1773 = vpack.c.b16 %v1605, %v1601
    %v1774 = vpack.c.b16 %v1606, %v1602
    %v1775 = vpack.c.b16 %v1607, %v1603
    %v1776 = vpack.c.b16 %v1608, %v1604
    %v1777 = vpack.c.b16 %v1613, %v1609
    %v1778 = vpack.c.b16 %v1614, %v1610
    %v1779 = vpack.c.b16 %v1615, %v1611
    %v1780 = vpack.c.b16 %v1616, %v1612
    %v1781 = vpack.c.b16 %v1621, %v1617
    %v1782 = vpack.c.b16 %v1622, %v1618
    %v1783 = vpack.c.b16 %v1623, %v1619
    %v1784 = vpack.c.b16 %v1624, %v1620
    %v1785 = vpack.c.b16 %v1629, %v1625
    %v1786 = vpack.c.b16 %v1630, %v1626
    %v1787 = vpack.c.b16 %v1631, %v1627
    %v1788 = vpack.c.b16 %v1632, %v1628
    %v1789 = vpack.c.b16 %v1637, %v1633
    %v1790 = vpack.c.b16 %v1638, %v1634
    %v1791 = vpack.c.b16 %v1639, %v1635
    %v1792 = vpack.c.b16 %v1640, %v1636
    %v1793 = vpack.c.b16 %v1645, %v1641
    %v1794 = vpack.c.b16 %v1646, %v1642
    %v1795 = vpack.c.b16 %v1647, %v1643
    %v1796 = vpack.c.b16 %v1648, %v1644
    %v1797 = vpack.c.b16 %v1653, %v1649
    %v1798 = vpack.c.b16 %v1654, %v1650
    %v1799 = vpack.c.b16 %v1655, %v1651
    %v1800 = vpack.c.b16 %v1656, %v1652
    %v1801 = vpack.c.b16 %v1661, %v1657
    %v1802 = vpack.c.b16 %v1662, %v1658
    %v1803 = vpack.c.b16 %v1663, %v1659
    %v1804 = vpack.c.b16 %v1664, %v1660
    %v1805 = vpack.c.b16 %v1669, %v1665
    %v1806 = vpack.c.b16 %v1670, %v1666
    %v1807 = vpack.c.b16 %v1671, %v1667
    %v1808 = vpack.c.b16 %v1672, %v1668
    %v1809 = vpack.c.b16 %v1677, %v1673
    %v1810 = vpack.c.b16 %v1678, %v1674
    %v1811 = vpack.c.b16 %v1679, %v1675
    %v1812 = vpack.c.b16 %v1680, %v1676
    %v1813 = vpack.c.b16 %v1685, %v1681
    %v1814 = vpack.c.b16 %v1686, %v1682
    %v1815 = vpack.c.b16 %v1687, %v1683
    %v1816 = vpack.c.b16 %v1688, %v1684
    %1945 = vmatprep.subr.bf16.mxu0 %v1690
    %1946 = vmatpush1.bf16.msra.mxu0 %v1689
    %1947 = vmatprep.subr.bf16.mxu0 %v1694
    %1948 = vmatpush1.bf16.msra.mxu0 %v1693
    %1949 = vmatprep.subr.bf16.mxu0 %v1698
    %1950 = vmatpush1.bf16.msra.mxu0 %v1697
    %1951 = vmatprep.subr.bf16.mxu0 %v1702
    %1952 = vmatpush1.bf16.msra.mxu0 %v1701
    %1953 = vmatprep.subr.bf16.mxu0 %v1706
    %1954 = vmatpush1.bf16.msra.mxu0 %v1705
    %1955 = vmatprep.subr.bf16.mxu0 %v1710
    %1956 = vmatpush1.bf16.msra.mxu0 %v1709
    %1957 = vmatprep.subr.bf16.mxu0 %v1714
    %1958 = vmatpush1.bf16.msra.mxu0 %v1713
    %1959 = vmatprep.subr.bf16.mxu0 %v1718
    %1960 = vmatpush1.bf16.msra.mxu0 %v1717
    %1961 = vmatprep.subr.bf16.mxu0 %v1722
    %1962 = vmatpush1.bf16.msra.mxu0 %v1721
    %1963 = vmatprep.subr.bf16.mxu0 %v1726
    %1964 = vmatpush1.bf16.msra.mxu0 %v1725
    %1965 = vmatprep.subr.bf16.mxu0 %v1730
    %1966 = vmatpush1.bf16.msra.mxu0 %v1729
    %1967 = vmatprep.subr.bf16.mxu0 %v1734
    %1968 = vmatpush1.bf16.msra.mxu0 %v1733
    %1969 = vmatprep.subr.bf16.mxu0 %v1738
    %1970 = vmatpush1.bf16.msra.mxu0 %v1737
    %1971 = vmatprep.subr.bf16.mxu0 %v1742
    %1972 = vmatpush1.bf16.msra.mxu0 %v1741
    %1973 = vmatprep.subr.bf16.mxu0 %v1746
    %1974 = vmatpush1.bf16.msra.mxu0 %v1745
    %1975 = vmatprep.subr.bf16.mxu0 %v1750
    %1976 = vmatpush1.bf16.msra.mxu0 %v1749
    %1977 = vmatprep.mubr.bf16.mxu0 %v1173
    %1978 = vmatmul.mubr.bf16.gmra.mrb[0].mxu0 %v1172
    %v1979 = vpop.f32.mrb[0].mxu0
    %v1980 = vadd.f32 0.0, %v1979
    %v1981 = vpop.f32.mrb[0].mxu0
    %v1982 = vadd.f32 0.0, %v1981
    %v1983 = vpop.f32.mrb[0].mxu0
    %v1984 = vpop.f32.mrb[0].mxu0
    %1985 = vdwg.mxu0
    %1986 = vmatprep.subr.bf16.mxu0 %v1754
    %1987 = vmatpush1.bf16.msra.mxu0 %v1753
    %1988 = vmatprep.subr.bf16.mxu0 %v1758
    %1989 = vmatpush1.bf16.msra.mxu0 %v1757
    %1990 = vmatprep.subr.bf16.mxu0 %v1762
    %1991 = vmatpush1.bf16.msra.mxu0 %v1761
    %1992 = vmatprep.subr.bf16.mxu0 %v1766
    %1993 = vmatpush1.bf16.msra.mxu0 %v1765
    %1994 = vmatprep.subr.bf16.mxu0 %v1770
    %1995 = vmatpush1.bf16.msra.mxu0 %v1769
    %1996 = vmatprep.subr.bf16.mxu0 %v1774
    %1997 = vmatpush1.bf16.msra.mxu0 %v1773
    %1998 = vmatprep.subr.bf16.mxu0 %v1778
    %1999 = vmatpush1.bf16.msra.mxu0 %v1777
    %2000 = vmatprep.subr.bf16.mxu0 %v1782
    %2001 = vmatpush1.bf16.msra.mxu0 %v1781
    %2002 = vmatprep.subr.bf16.mxu0 %v1786
    %2003 = vmatpush1.bf16.msra.mxu0 %v1785
    %2004 = vmatprep.subr.bf16.mxu0 %v1790
    %2005 = vmatpush1.bf16.msra.mxu0 %v1789
    %2006 = vmatprep.subr.bf16.mxu0 %v1794
    %2007 = vmatpush1.bf16.msra.mxu0 %v1793
    %2008 = vmatprep.subr.bf16.mxu0 %v1798
    %2009 = vmatpush1.bf16.msra.mxu0 %v1797
    %2010 = vmatprep.subr.bf16.mxu0 %v1802
    %2011 = vmatpush1.bf16.msra.mxu0 %v1801
    %2012 = vmatprep.subr.bf16.mxu0 %v1806
    %2013 = vmatpush1.bf16.msra.mxu0 %v1805
    %2014 = vmatprep.subr.bf16.mxu0 %v1810
    %2015 = vmatpush1.bf16.msra.mxu0 %v1809
    %2016 = vmatprep.subr.bf16.mxu0 %v1814
    %2017 = vmatpush1.bf16.msra.mxu0 %v1813
    %2018 = vmatprep.mubr.bf16.mxu0 %v1175
    %2019 = vmatmul.mubr.bf16.gmra.mrb[0].mxu0 %v1174
    %v2020 = vpop.f32.mrb[0].mxu0
    %v2021 = vadd.f32 %v1980, %v2020
    %v2022 = vpop.f32.mrb[0].mxu0
    %v2023 = vadd.f32 %v1982, %v2022
    %v2024 = vpop.f32.mrb[0].mxu0
    %v2025 = vpop.f32.mrb[0].mxu0
    %2026 = vdwg.mxu0
    %2027 = vmatprep.subr.bf16.mxu0 %v1692
    %2028 = vmatpush1.bf16.msra.mxu0 %v1691
    %2029 = vmatprep.subr.bf16.mxu0 %v1696
    %2030 = vmatpush1.bf16.msra.mxu0 %v1695
    %2031 = vmatprep.subr.bf16.mxu0 %v1700
    %2032 = vmatpush1.bf16.msra.mxu0 %v1699
    %2033 = vmatprep.subr.bf16.mxu0 %v1704
    %2034 = vmatpush1.bf16.msra.mxu0 %v1703
    %2035 = vmatprep.subr.bf16.mxu0 %v1708
    %2036 = vmatpush1.bf16.msra.mxu0 %v1707
    %2037 = vmatprep.subr.bf16.mxu0 %v1712
    %2038 = vmatpush1.bf16.msra.mxu0 %v1711
    %2039 = vmatprep.subr.bf16.mxu0 %v1716
    %2040 = vmatpush1.bf16.msra.mxu0 %v1715
    %2041 = vmatprep.subr.bf16.mxu0 %v1720
    %2042 = vmatpush1.bf16.msra.mxu0 %v1719
    %2043 = vmatprep.subr.bf16.mxu0 %v1724
    %2044 = vmatpush1.bf16.msra.mxu0 %v1723
    %2045 = vmatprep.subr.bf16.mxu0 %v1728
    %2046 = vmatpush1.bf16.msra.mxu0 %v1727
    %2047 = vmatprep.subr.bf16.mxu0 %v1732
    %2048 = vmatpush1.bf16.msra.mxu0 %v1731
    %2049 = vmatprep.subr.bf16.mxu0 %v1736
    %2050 = vmatpush1.bf16.msra.mxu0 %v1735
    %2051 = vmatprep.subr.bf16.mxu0 %v1740
    %2052 = vmatpush1.bf16.msra.mxu0 %v1739
    %2053 = vmatprep.subr.bf16.mxu0 %v1744
    %2054 = vmatpush1.bf16.msra.mxu0 %v1743
    %2055 = vmatprep.subr.bf16.mxu0 %v1748
    %2056 = vmatpush1.bf16.msra.mxu0 %v1747
    %2057 = vmatprep.subr.bf16.mxu0 %v1752
    %2058 = vmatpush1.bf16.msra.mxu0 %v1751
    %2059 = vmatprep.mubr.bf16.mxu0 %v1173
    %2060 = vmatmul.mubr.bf16.gmra.mrb[0].mxu0 %v1172
    %v2061 = vpop.f32.mrb[0].mxu0
    %v2062 = vadd.f32 0.0, %v2061
    %v2063 = vpop.f32.mrb[0].mxu0
    %v2064 = vadd.f32 0.0, %v2063
    %v2065 = vpop.f32.mrb[0].mxu0
    %v2066 = vpop.f32.mrb[0].mxu0
    %2067 = vdwg.mxu0
    %2068 = vmatprep.subr.bf16.mxu0 %v1756
    %2069 = vmatpush1.bf16.msra.mxu0 %v1755
    %2070 = vmatprep.subr.bf16.mxu0 %v1760
    %2071 = vmatpush1.bf16.msra.mxu0 %v1759
    %2072 = vmatprep.subr.bf16.mxu0 %v1764
    %2073 = vmatpush1.bf16.msra.mxu0 %v1763
    %2074 = vmatprep.subr.bf16.mxu0 %v1768
    %2075 = vmatpush1.bf16.msra.mxu0 %v1767
    %2076 = vmatprep.subr.bf16.mxu0 %v1772
    %2077 = vmatpush1.bf16.msra.mxu0 %v1771
    %2078 = vmatprep.subr.bf16.mxu0 %v1776
    %2079 = vmatpush1.bf16.msra.mxu0 %v1775
    %2080 = vmatprep.subr.bf16.mxu0 %v1780
    %2081 = vmatpush1.bf16.msra.mxu0 %v1779
    %2082 = vmatprep.subr.bf16.mxu0 %v1784
    %2083 = vmatpush1.bf16.msra.mxu0 %v1783
    %2084 = vmatprep.subr.bf16.mxu0 %v1788
    %2085 = vmatpush1.bf16.msra.mxu0 %v1787
    %2086 = vmatprep.subr.bf16.mxu0 %v1792
    %2087 = vmatpush1.bf16.msra.mxu0 %v1791
    %2088 = vmatprep.subr.bf16.mxu0 %v1796
    %2089 = vmatpush1.bf16.msra.mxu0 %v1795
    %2090 = vmatprep.subr.bf16.mxu0 %v1800
    %2091 = vmatpush1.bf16.msra.mxu0 %v1799
    %2092 = vmatprep.subr.bf16.mxu0 %v1804
    %2093 = vmatpush1.bf16.msra.mxu0 %v1803
    %2094 = vmatprep.subr.bf16.mxu0 %v1808
    %2095 = vmatpush1.bf16.msra.mxu0 %v1807
    %2096 = vmatprep.subr.bf16.mxu0 %v1812
    %2097 = vmatpush1.bf16.msra.mxu0 %v1811
    %2098 = vmatprep.subr.bf16.mxu0 %v1816
    %2099 = vmatpush1.bf16.msra.mxu0 %v1815
    %2100 = vmatprep.mubr.bf16.mxu0 %v1175
    %2101 = vmatmul.mubr.bf16.gmra.mrb[0].mxu0 %v1174
    %v2102 = vpop.f32.mrb[0].mxu0
    %v2103 = vadd.f32 %v2062, %v2102
    %v2104 = vpop.f32.mrb[0].mxu0
    %v2105 = vadd.f32 %v2064, %v2104
    %v2106 = vpop.f32.mrb[0].mxu0
    %v2107 = vpop.f32.mrb[0].mxu0
    %2108 = vdwg.mxu0
    %v2109 = vrot.slane %v2021, 4
    %v2110 = vadd.f32 %v2021, %v2109
    %v2111 = vrot.slane %v2110, 2
    %v2112 = vadd.f32 %v2110, %v2111
    %v2113 = vrot.slane %v2112, 1
    %v2114 = vadd.f32 %v2112, %v2113
    %v2115 = vrot.slane %v2023, 4
    %v2116 = vadd.f32 %v2023, %v2115
    %v2117 = vrot.slane %v2116, 2
    %v2118 = vadd.f32 %v2116, %v2117
    %v2119 = vrot.slane %v2118, 1
    %v2120 = vadd.f32 %v2118, %v2119
    %v2121 = vrot.slane %v2103, 4
    %v2122 = vadd.f32 %v2103, %v2121
    %v2123 = vrot.slane %v2122, 2
    %v2124 = vadd.f32 %v2122, %v2123
    %v2125 = vrot.slane %v2124, 1
    %v2126 = vadd.f32 %v2124, %v2125
    %v2127 = vrot.slane %v2105, 4
    %v2128 = vadd.f32 %v2105, %v2127
    %v2129 = vrot.slane %v2128, 2
    %v2130 = vadd.f32 %v2128, %v2129
    %v2131 = vrot.slane %v2130, 1
    %v2132 = vadd.f32 %v2130, %v2131
    %v2133 = vmul.f32 %v2114, 0.125
    %v2134 = vmul.f32 %v2120, 0.125
    %v2135 = vmul.f32 %v2126, 0.125
    %v2136 = vmul.f32 %v2132, 0.125
    %v2137 = vmul.f32 %v2021, %v2021
    %v2138 = vmul.f32 %v2023, %v2023
    %v2139 = vmul.f32 %v2103, %v2103
    %v2140 = vmul.f32 %v2105, %v2105
    %v2141 = vrot.slane %v2137, 4
    %v2142 = vadd.f32 %v2137, %v2141
    %v2143 = vrot.slane %v2142, 2
    %v2144 = vadd.f32 %v2142, %v2143
    %v2145 = vrot.slane %v2144, 1
    %v2146 = vadd.f32 %v2144, %v2145
    %v2147 = vrot.slane %v2138, 4
    %v2148 = vadd.f32 %v2138, %v2147
    %v2149 = vrot.slane %v2148, 2
    %v2150 = vadd.f32 %v2148, %v2149
    %v2151 = vrot.slane %v2150, 1
    %v2152 = vadd.f32 %v2150, %v2151
    %v2153 = vrot.slane %v2139, 4
    %v2154 = vadd.f32 %v2139, %v2153
    %v2155 = vrot.slane %v2154, 2
    %v2156 = vadd.f32 %v2154, %v2155
    %v2157 = vrot.slane %v2156, 1
    %v2158 = vadd.f32 %v2156, %v2157
    %v2159 = vrot.slane %v2140, 4
    %v2160 = vadd.f32 %v2140, %v2159
    %v2161 = vrot.slane %v2160, 2
    %v2162 = vadd.f32 %v2160, %v2161
    %v2163 = vrot.slane %v2162, 1
    %v2164 = vadd.f32 %v2162, %v2163
    %v2165 = vmul.f32 %v2146, 0.125
    %v2166 = vmul.f32 %v2152, 0.125
    %v2167 = vmul.f32 %v2158, 0.125
    %v2168 = vmul.f32 %v2164, 0.125
    %v2169 = vmul.f32 %v2133, %v2133
    %v2170 = vmul.f32 %v2134, %v2134
    %v2171 = vmul.f32 %v2135, %v2135
    %v2172 = vmul.f32 %v2136, %v2136
    %v2173 = vsub.f32 %v2165, %v2169
    %v2174 = vsub.f32 %v2166, %v2170
    %v2175 = vsub.f32 %v2167, %v2171
    %v2176 = vsub.f32 %v2168, %v2172
    %v2177 = vadd.f32 %v2173, 1e-05
    %v2178 = vadd.f32 %v2174, 1e-05
    %v2179 = vadd.f32 %v2175, 1e-05
    %v2180 = vadd.f32 %v2176, 1e-05
    %v2181 = vrsqrt.pop %v2177
    %v2182 = vrsqrt.pop %v2178
    %v2183 = vrsqrt.pop %v2179
    %v2184 = vrsqrt.pop %v2180
    %v2185 = vmul.f32 %v84, %v2181
    %v2186 = vmul.f32 %v85, %v2182
    %v2187 = vmul.f32 %v86, %v2183
    %v2188 = vmul.f32 %v87, %v2184
    %v2189 = vmul.f32 %v2133, %v2185
    %v2190 = vmul.f32 %v2134, %v2186
    %v2191 = vmul.f32 %v2135, %v2187
    %v2192 = vmul.f32 %v2136, %v2188
    %v2197 = vrot.slane %v2189, 4
    %v2198 = vrot.slane %v2190, 4
    %v2199 = vrot.slane %v2191, 4
    %v2200 = vrot.slane %v2192, 4
    %v2205 = vsub.f32 %v84, %v2197
    %v2206 = vsub.f32 %v85, %v2198
    %v2207 = vsub.f32 %v86, %v2199
    %v2208 = vsub.f32 %v87, %v2200
    %v2209 = vlaneseq
    %v2210 = vshrl.u32 %v2209, 7
    %v2211 = vsub.s32 1, %v2210
    %v2212 = vrot.slane %v2185, %v2211
    %v2213 = vlaneseq
    %v2214 = vshrl.u32 %v2213, 7
    %v2215 = vsub.s32 1, %v2214
    %v2216 = vrot.slane %v2186, %v2215
    %v2217 = vlaneseq
    %v2218 = vshrl.u32 %v2217, 7
    %v2219 = vsub.s32 1, %v2218
    %v2220 = vrot.slane %v2187, %v2219
    %v2221 = vlaneseq
    %v2222 = vshrl.u32 %v2221, 7
    %v2223 = vsub.s32 1, %v2222
    %v2224 = vrot.slane %v2188, %v2223
    %v2225 = vmul.f32 %v2021, %v2212
    %v2226 = vmul.f32 %v2023, %v2216
    %v2227 = vmul.f32 %v2103, %v2220
    %v2228 = vmul.f32 %v2105, %v2224
    %v2229 = vlaneseq
    %v2230 = vshrl.u32 %v2229, 7
    %v2231 = vsub.s32 5, %v2230
    %v2232 = vrot.slane %v2205, %v2231
    %v2233 = vlaneseq
    %v2234 = vshrl.u32 %v2233, 7
    %v2235 = vsub.s32 5, %v2234
    %v2236 = vrot.slane %v2206, %v2235
    %v2237 = vlaneseq
    %v2238 = vshrl.u32 %v2237, 7
    %v2239 = vsub.s32 5, %v2238
    %v2240 = vrot.slane %v2207, %v2239
    %v2241 = vlaneseq
    %v2242 = vshrl.u32 %v2241, 7
    %v2243 = vsub.s32 5, %v2242
    %v2244 = vrot.slane %v2208, %v2243
    %v2245 = vadd.f32 %v2225, %v2232
    %v2246 = vadd.f32 %v2226, %v2236
    %v2247 = vadd.f32 %v2227, %v2240
    %v2248 = vadd.f32 %v2228, %v2244
    %v2249 = vmax.f32 %v2245, 0.0
    %v2250 = vmax.f32 %v2246, 0.0
    %v2251 = vmax.f32 %v2247, 0.0
    %v2252 = vmax.f32 %v2248, 0.0
    %v2253 = vpack.c.bf16 %v2249, %v2249
    %v2254 = vpack.c.bf16 %v2250, %v2250
    %v2255 = vpack.c.bf16 %v2251, %v2251
    %v2256 = vpack.c.bf16 %v2252, %v2252
    %s2257 = scalar_lea.vmem [#allocation5], 2048
    %v2258 = vld [vmem:[%s2257] sm:$0xff]
    %v2259 = vld [vmem:[%s2257 + $0x8] sm:$0xff]
    %v2260 = vld [vmem:[%s2257 + $0x10] sm:$0xff]
    %v2261 = vld [vmem:[%s2257 + $0x18] sm:$0xff]
    %v2262 = vld [vmem:[%s2257 + $0x20] sm:$0xff]
    %v2263 = vld [vmem:[%s2257 + $0x28] sm:$0xff]
    %v2264 = vld [vmem:[%s2257 + $0x30] sm:$0xff]
    %v2265 = vld [vmem:[%s2257 + $0x38] sm:$0xff]
    %v2266 = vld [vmem:[%s2257 + $0x40] sm:$0xff]
    %v2267 = vld [vmem:[%s2257 + $0x48] sm:$0xff]
    %v2268 = vld [vmem:[%s2257 + $0x50] sm:$0xff]
    %v2269 = vld [vmem:[%s2257 + $0x58] sm:$0xff]
    %v2270 = vld [vmem:[%s2257 + $0x60] sm:$0xff]
    %v2271 = vld [vmem:[%s2257 + $0x68] sm:$0xff]
    %v2272 = vld [vmem:[%s2257 + $0x70] sm:$0xff]
    %v2273 = vld [vmem:[%s2257 + $0x78] sm:$0xff]
    %v2274 = vld [vmem:[%s2257 + $0x80] sm:$0xff]
    %v2275 = vld [vmem:[%s2257 + $0x88] sm:$0xff]
    %v2276 = vld [vmem:[%s2257 + $0x90] sm:$0xff]
    %v2277 = vld [vmem:[%s2257 + $0x98] sm:$0xff]
    %v2278 = vld [vmem:[%s2257 + $0xa0] sm:$0xff]
    %v2279 = vld [vmem:[%s2257 + $0xa8] sm:$0xff]
    %v2280 = vld [vmem:[%s2257 + $0xb0] sm:$0xff]
    %v2281 = vld [vmem:[%s2257 + $0xb8] sm:$0xff]
    %v2282 = vld [vmem:[%s2257 + $0xc0] sm:$0xff]
    %v2283 = vld [vmem:[%s2257 + $0xc8] sm:$0xff]
    %v2284 = vld [vmem:[%s2257 + $0xd0] sm:$0xff]
    %v2285 = vld [vmem:[%s2257 + $0xd8] sm:$0xff]
    %v2286 = vld [vmem:[%s2257 + $0xe0] sm:$0xff]
    %v2287 = vld [vmem:[%s2257 + $0xe8] sm:$0xff]
    %v2288 = vld [vmem:[%s2257 + $0xf0] sm:$0xff]
    %v2289 = vld [vmem:[%s2257 + $0xf8] sm:$0xff]
    %v2290 = vld [vmem:[%s2257 + $0x100] sm:$0xff]
    %v2291 = vld [vmem:[%s2257 + $0x108] sm:$0xff]
    %v2292 = vld [vmem:[%s2257 + $0x110] sm:$0xff]
    %v2293 = vld [vmem:[%s2257 + $0x118] sm:$0xff]
    %v2294 = vld [vmem:[%s2257 + $0x120] sm:$0xff]
    %v2295 = vld [vmem:[%s2257 + $0x128] sm:$0xff]
    %v2296 = vld [vmem:[%s2257 + $0x130] sm:$0xff]
    %v2297 = vld [vmem:[%s2257 + $0x138] sm:$0xff]
    %v2298 = vld [vmem:[%s2257 + $0x140] sm:$0xff]
    %v2299 = vld [vmem:[%s2257 + $0x148] sm:$0xff]
    %v2300 = vld [vmem:[%s2257 + $0x150] sm:$0xff]
    %v2301 = vld [vmem:[%s2257 + $0x158] sm:$0xff]
    %v2302 = vld [vmem:[%s2257 + $0x160] sm:$0xff]
    %v2303 = vld [vmem:[%s2257 + $0x168] sm:$0xff]
    %v2304 = vld [vmem:[%s2257 + $0x170] sm:$0xff]
    %v2305 = vld [vmem:[%s2257 + $0x178] sm:$0xff]
    %v2306 = vld [vmem:[%s2257 + $0x180] sm:$0xff]
    %v2307 = vld [vmem:[%s2257 + $0x188] sm:$0xff]
    %v2308 = vld [vmem:[%s2257 + $0x190] sm:$0xff]
    %v2309 = vld [vmem:[%s2257 + $0x198] sm:$0xff]
    %v2310 = vld [vmem:[%s2257 + $0x1a0] sm:$0xff]
    %v2311 = vld [vmem:[%s2257 + $0x1a8] sm:$0xff]
    %v2312 = vld [vmem:[%s2257 + $0x1b0] sm:$0xff]
    %v2313 = vld [vmem:[%s2257 + $0x1b8] sm:$0xff]
    %v2314 = vld [vmem:[%s2257 + $0x1c0] sm:$0xff]
    %v2315 = vld [vmem:[%s2257 + $0x1c8] sm:$0xff]
    %v2316 = vld [vmem:[%s2257 + $0x1d0] sm:$0xff]
    %v2317 = vld [vmem:[%s2257 + $0x1d8] sm:$0xff]
    %v2318 = vld [vmem:[%s2257 + $0x1e0] sm:$0xff]
    %v2319 = vld [vmem:[%s2257 + $0x1e8] sm:$0xff]
    %v2320 = vld [vmem:[%s2257 + $0x1f0] sm:$0xff]
    %v2321 = vld [vmem:[%s2257 + $0x1f8] sm:$0xff]
    %v2322 = vld [vmem:[%s2257 + $0x200] sm:$0xff]
    %v2323 = vld [vmem:[%s2257 + $0x208] sm:$0xff]
    %v2324 = vld [vmem:[%s2257 + $0x210] sm:$0xff]
    %v2325 = vld [vmem:[%s2257 + $0x218] sm:$0xff]
    %v2326 = vld [vmem:[%s2257 + $0x220] sm:$0xff]
    %v2327 = vld [vmem:[%s2257 + $0x228] sm:$0xff]
    %v2328 = vld [vmem:[%s2257 + $0x230] sm:$0xff]
    %v2329 = vld [vmem:[%s2257 + $0x238] sm:$0xff]
    %v2330 = vld [vmem:[%s2257 + $0x240] sm:$0xff]
    %v2331 = vld [vmem:[%s2257 + $0x248] sm:$0xff]
    %v2332 = vld [vmem:[%s2257 + $0x250] sm:$0xff]
    %v2333 = vld [vmem:[%s2257 + $0x258] sm:$0xff]
    %v2334 = vld [vmem:[%s2257 + $0x260] sm:$0xff]
    %v2335 = vld [vmem:[%s2257 + $0x268] sm:$0xff]
    %v2336 = vld [vmem:[%s2257 + $0x270] sm:$0xff]
    %v2337 = vld [vmem:[%s2257 + $0x278] sm:$0xff]
    %v2338 = vld [vmem:[%s2257 + $0x280] sm:$0xff]
    %v2339 = vld [vmem:[%s2257 + $0x288] sm:$0xff]
    %v2340 = vld [vmem:[%s2257 + $0x290] sm:$0xff]
    %v2341 = vld [vmem:[%s2257 + $0x298] sm:$0xff]
    %v2342 = vld [vmem:[%s2257 + $0x2a0] sm:$0xff]
    %v2343 = vld [vmem:[%s2257 + $0x2a8] sm:$0xff]
    %v2344 = vld [vmem:[%s2257 + $0x2b0] sm:$0xff]
    %v2345 = vld [vmem:[%s2257 + $0x2b8] sm:$0xff]
    %v2346 = vld [vmem:[%s2257 + $0x2c0] sm:$0xff]
    %v2347 = vld [vmem:[%s2257 + $0x2c8] sm:$0xff]
    %v2348 = vld [vmem:[%s2257 + $0x2d0] sm:$0xff]
    %v2349 = vld [vmem:[%s2257 + $0x2d8] sm:$0xff]
    %v2350 = vld [vmem:[%s2257 + $0x2e0] sm:$0xff]
    %v2351 = vld [vmem:[%s2257 + $0x2e8] sm:$0xff]
    %v2352 = vld [vmem:[%s2257 + $0x2f0] sm:$0xff]
    %v2353 = vld [vmem:[%s2257 + $0x2f8] sm:$0xff]
    %v2354 = vld [vmem:[%s2257 + $0x300] sm:$0xff]
    %v2355 = vld [vmem:[%s2257 + $0x308] sm:$0xff]
    %v2356 = vld [vmem:[%s2257 + $0x310] sm:$0xff]
    %v2357 = vld [vmem:[%s2257 + $0x318] sm:$0xff]
    %v2358 = vld [vmem:[%s2257 + $0x320] sm:$0xff]
    %v2359 = vld [vmem:[%s2257 + $0x328] sm:$0xff]
    %v2360 = vld [vmem:[%s2257 + $0x330] sm:$0xff]
    %v2361 = vld [vmem:[%s2257 + $0x338] sm:$0xff]
    %v2362 = vld [vmem:[%s2257 + $0x340] sm:$0xff]
    %v2363 = vld [vmem:[%s2257 + $0x348] sm:$0xff]
    %v2364 = vld [vmem:[%s2257 + $0x350] sm:$0xff]
    %v2365 = vld [vmem:[%s2257 + $0x358] sm:$0xff]
    %v2366 = vld [vmem:[%s2257 + $0x360] sm:$0xff]
    %v2367 = vld [vmem:[%s2257 + $0x368] sm:$0xff]
    %v2368 = vld [vmem:[%s2257 + $0x370] sm:$0xff]
    %v2369 = vld [vmem:[%s2257 + $0x378] sm:$0xff]
    %v2370 = vld [vmem:[%s2257 + $0x380] sm:$0xff]
    %v2371 = vld [vmem:[%s2257 + $0x388] sm:$0xff]
    %v2372 = vld [vmem:[%s2257 + $0x390] sm:$0xff]
    %v2373 = vld [vmem:[%s2257 + $0x398] sm:$0xff]
    %v2374 = vld [vmem:[%s2257 + $0x3a0] sm:$0xff]
    %v2375 = vld [vmem:[%s2257 + $0x3a8] sm:$0xff]
    %v2376 = vld [vmem:[%s2257 + $0x3b0] sm:$0xff]
    %v2377 = vld [vmem:[%s2257 + $0x3b8] sm:$0xff]
    %v2378 = vld [vmem:[%s2257 + $0x3c0] sm:$0xff]
    %v2379 = vld [vmem:[%s2257 + $0x3c8] sm:$0xff]
    %v2380 = vld [vmem:[%s2257 + $0x3d0] sm:$0xff]
    %v2381 = vld [vmem:[%s2257 + $0x3d8] sm:$0xff]
    %v2382 = vld [vmem:[%s2257 + $0x3e0] sm:$0xff]
    %v2383 = vld [vmem:[%s2257 + $0x3e8] sm:$0xff]
    %v2384 = vld [vmem:[%s2257 + $0x3f0] sm:$0xff]
    %v2385 = vld [vmem:[%s2257 + $0x3f8] sm:$0xff]
    %v2514 = vunpack.c.l.b16 %v2258
    %v2515 = vunpack.c.h.b16 %v2258
    %v2516 = vunpack.c.l.b16 %v2259
    %v2517 = vunpack.c.h.b16 %v2259
    %v2518 = vunpack.c.l.b16 %v2260
    %v2519 = vunpack.c.h.b16 %v2260
    %v2520 = vunpack.c.l.b16 %v2261
    %v2521 = vunpack.c.h.b16 %v2261
    %v2522 = vunpack.c.l.b16 %v2262
    %v2523 = vunpack.c.h.b16 %v2262
    %v2524 = vunpack.c.l.b16 %v2263
    %v2525 = vunpack.c.h.b16 %v2263
    %v2526 = vunpack.c.l.b16 %v2264
    %v2527 = vunpack.c.h.b16 %v2264
    %v2528 = vunpack.c.l.b16 %v2265
    %v2529 = vunpack.c.h.b16 %v2265
    %v2530 = vunpack.c.l.b16 %v2266
    %v2531 = vunpack.c.h.b16 %v2266
    %v2532 = vunpack.c.l.b16 %v2267
    %v2533 = vunpack.c.h.b16 %v2267
    %v2534 = vunpack.c.l.b16 %v2268
    %v2535 = vunpack.c.h.b16 %v2268
    %v2536 = vunpack.c.l.b16 %v2269
    %v2537 = vunpack.c.h.b16 %v2269
    %v2538 = vunpack.c.l.b16 %v2270
    %v2539 = vunpack.c.h.b16 %v2270
    %v2540 = vunpack.c.l.b16 %v2271
    %v2541 = vunpack.c.h.b16 %v2271
    %v2542 = vunpack.c.l.b16 %v2272
    %v2543 = vunpack.c.h.b16 %v2272
    %v2544 = vunpack.c.l.b16 %v2273
    %v2545 = vunpack.c.h.b16 %v2273
    %v2546 = vunpack.c.l.b16 %v2274
    %v2547 = vunpack.c.h.b16 %v2274
    %v2548 = vunpack.c.l.b16 %v2275
    %v2549 = vunpack.c.h.b16 %v2275
    %v2550 = vunpack.c.l.b16 %v2276
    %v2551 = vunpack.c.h.b16 %v2276
    %v2552 = vunpack.c.l.b16 %v2277
    %v2553 = vunpack.c.h.b16 %v2277
    %v2554 = vunpack.c.l.b16 %v2278
    %v2555 = vunpack.c.h.b16 %v2278
    %v2556 = vunpack.c.l.b16 %v2279
    %v2557 = vunpack.c.h.b16 %v2279
    %v2558 = vunpack.c.l.b16 %v2280
    %v2559 = vunpack.c.h.b16 %v2280
    %v2560 = vunpack.c.l.b16 %v2281
    %v2561 = vunpack.c.h.b16 %v2281
    %v2562 = vunpack.c.l.b16 %v2282
    %v2563 = vunpack.c.h.b16 %v2282
    %v2564 = vunpack.c.l.b16 %v2283
    %v2565 = vunpack.c.h.b16 %v2283
    %v2566 = vunpack.c.l.b16 %v2284
    %v2567 = vunpack.c.h.b16 %v2284
    %v2568 = vunpack.c.l.b16 %v2285
    %v2569 = vunpack.c.h.b16 %v2285
    %v2570 = vunpack.c.l.b16 %v2286
    %v2571 = vunpack.c.h.b16 %v2286
    %v2572 = vunpack.c.l.b16 %v2287
    %v2573 = vunpack.c.h.b16 %v2287
    %v2574 = vunpack.c.l.b16 %v2288
    %v2575 = vunpack.c.h.b16 %v2288
    %v2576 = vunpack.c.l.b16 %v2289
    %v2577 = vunpack.c.h.b16 %v2289
    %v2578 = vunpack.c.l.b16 %v2290
    %v2579 = vunpack.c.h.b16 %v2290
    %v2580 = vunpack.c.l.b16 %v2291
    %v2581 = vunpack.c.h.b16 %v2291
    %v2582 = vunpack.c.l.b16 %v2292
    %v2583 = vunpack.c.h.b16 %v2292
    %v2584 = vunpack.c.l.b16 %v2293
    %v2585 = vunpack.c.h.b16 %v2293
    %v2586 = vunpack.c.l.b16 %v2294
    %v2587 = vunpack.c.h.b16 %v2294
    %v2588 = vunpack.c.l.b16 %v2295
    %v2589 = vunpack.c.h.b16 %v2295
    %v2590 = vunpack.c.l.b16 %v2296
    %v2591 = vunpack.c.h.b16 %v2296
    %v2592 = vunpack.c.l.b16 %v2297
    %v2593 = vunpack.c.h.b16 %v2297
    %v2594 = vunpack.c.l.b16 %v2298
    %v2595 = vunpack.c.h.b16 %v2298
    %v2596 = vunpack.c.l.b16 %v2299
    %v2597 = vunpack.c.h.b16 %v2299
    %v2598 = vunpack.c.l.b16 %v2300
    %v2599 = vunpack.c.h.b16 %v2300
    %v2600 = vunpack.c.l.b16 %v2301
    %v2601 = vunpack.c.h.b16 %v2301
    %v2602 = vunpack.c.l.b16 %v2302
    %v2603 = vunpack.c.h.b16 %v2302
    %v2604 = vunpack.c.l.b16 %v2303
    %v2605 = vunpack.c.h.b16 %v2303
    %v2606 = vunpack.c.l.b16 %v2304
    %v2607 = vunpack.c.h.b16 %v2304
    %v2608 = vunpack.c.l.b16 %v2305
    %v2609 = vunpack.c.h.b16 %v2305
    %v2610 = vunpack.c.l.b16 %v2306
    %v2611 = vunpack.c.h.b16 %v2306
    %v2612 = vunpack.c.l.b16 %v2307
    %v2613 = vunpack.c.h.b16 %v2307
    %v2614 = vunpack.c.l.b16 %v2308
    %v2615 = vunpack.c.h.b16 %v2308
    %v2616 = vunpack.c.l.b16 %v2309
    %v2617 = vunpack.c.h.b16 %v2309
    %v2618 = vunpack.c.l.b16 %v2310
    %v2619 = vunpack.c.h.b16 %v2310
    %v2620 = vunpack.c.l.b16 %v2311
    %v2621 = vunpack.c.h.b16 %v2311
    %v2622 = vunpack.c.l.b16 %v2312
    %v2623 = vunpack.c.h.b16 %v2312
    %v2624 = vunpack.c.l.b16 %v2313
    %v2625 = vunpack.c.h.b16 %v2313
    %v2626 = vunpack.c.l.b16 %v2314
    %v2627 = vunpack.c.h.b16 %v2314
    %v2628 = vunpack.c.l.b16 %v2315
    %v2629 = vunpack.c.h.b16 %v2315
    %v2630 = vunpack.c.l.b16 %v2316
    %v2631 = vunpack.c.h.b16 %v2316
    %v2632 = vunpack.c.l.b16 %v2317
    %v2633 = vunpack.c.h.b16 %v2317
    %v2634 = vunpack.c.l.b16 %v2318
    %v2635 = vunpack.c.h.b16 %v2318
    %v2636 = vunpack.c.l.b16 %v2319
    %v2637 = vunpack.c.h.b16 %v2319
    %v2638 = vunpack.c.l.b16 %v2320
    %v2639 = vunpack.c.h.b16 %v2320
    %v2640 = vunpack.c.l.b16 %v2321
    %v2641 = vunpack.c.h.b16 %v2321
    %v2642 = vunpack.c.l.b16 %v2322
    %v2643 = vunpack.c.h.b16 %v2322
    %v2644 = vunpack.c.l.b16 %v2323
    %v2645 = vunpack.c.h.b16 %v2323
    %v2646 = vunpack.c.l.b16 %v2324
    %v2647 = vunpack.c.h.b16 %v2324
    %v2648 = vunpack.c.l.b16 %v2325
    %v2649 = vunpack.c.h.b16 %v2325
    %v2650 = vunpack.c.l.b16 %v2326
    %v2651 = vunpack.c.h.b16 %v2326
    %v2652 = vunpack.c.l.b16 %v2327
    %v2653 = vunpack.c.h.b16 %v2327
    %v2654 = vunpack.c.l.b16 %v2328
    %v2655 = vunpack.c.h.b16 %v2328
    %v2656 = vunpack.c.l.b16 %v2329
    %v2657 = vunpack.c.h.b16 %v2329
    %v2658 = vunpack.c.l.b16 %v2330
    %v2659 = vunpack.c.h.b16 %v2330
    %v2660 = vunpack.c.l.b16 %v2331
    %v2661 = vunpack.c.h.b16 %v2331
    %v2662 = vunpack.c.l.b16 %v2332
    %v2663 = vunpack.c.h.b16 %v2332
    %v2664 = vunpack.c.l.b16 %v2333
    %v2665 = vunpack.c.h.b16 %v2333
    %v2666 = vunpack.c.l.b16 %v2334
    %v2667 = vunpack.c.h.b16 %v2334
    %v2668 = vunpack.c.l.b16 %v2335
    %v2669 = vunpack.c.h.b16 %v2335
    %v2670 = vunpack.c.l.b16 %v2336
    %v2671 = vunpack.c.h.b16 %v2336
    %v2672 = vunpack.c.l.b16 %v2337
    %v2673 = vunpack.c.h.b16 %v2337
    %v2674 = vunpack.c.l.b16 %v2338
    %v2675 = vunpack.c.h.b16 %v2338
    %v2676 = vunpack.c.l.b16 %v2339
    %v2677 = vunpack.c.h.b16 %v2339
    %v2678 = vunpack.c.l.b16 %v2340
    %v2679 = vunpack.c.h.b16 %v2340
    %v2680 = vunpack.c.l.b16 %v2341
    %v2681 = vunpack.c.h.b16 %v2341
    %v2682 = vunpack.c.l.b16 %v2342
    %v2683 = vunpack.c.h.b16 %v2342
    %v2684 = vunpack.c.l.b16 %v2343
    %v2685 = vunpack.c.h.b16 %v2343
    %v2686 = vunpack.c.l.b16 %v2344
    %v2687 = vunpack.c.h.b16 %v2344
    %v2688 = vunpack.c.l.b16 %v2345
    %v2689 = vunpack.c.h.b16 %v2345
    %v2690 = vunpack.c.l.b16 %v2346
    %v2691 = vunpack.c.h.b16 %v2346
    %v2692 = vunpack.c.l.b16 %v2347
    %v2693 = vunpack.c.h.b16 %v2347
    %v2694 = vunpack.c.l.b16 %v2348
    %v2695 = vunpack.c.h.b16 %v2348
    %v2696 = vunpack.c.l.b16 %v2349
    %v2697 = vunpack.c.h.b16 %v2349
    %v2698 = vunpack.c.l.b16 %v2350
    %v2699 = vunpack.c.h.b16 %v2350
    %v2700 = vunpack.c.l.b16 %v2351
    %v2701 = vunpack.c.h.b16 %v2351
    %v2702 = vunpack.c.l.b16 %v2352
    %v2703 = vunpack.c.h.b16 %v2352
    %v2704 = vunpack.c.l.b16 %v2353
    %v2705 = vunpack.c.h.b16 %v2353
    %v2706 = vunpack.c.l.b16 %v2354
    %v2707 = vunpack.c.h.b16 %v2354
    %v2708 = vunpack.c.l.b16 %v2355
    %v2709 = vunpack.c.h.b16 %v2355
    %v2710 = vunpack.c.l.b16 %v2356
    %v2711 = vunpack.c.h.b16 %v2356
    %v2712 = vunpack.c.l.b16 %v2357
    %v2713 = vunpack.c.h.b16 %v2357
    %v2714 = vunpack.c.l.b16 %v2358
    %v2715 = vunpack.c.h.b16 %v2358
    %v2716 = vunpack.c.l.b16 %v2359
    %v2717 = vunpack.c.h.b16 %v2359
    %v2718 = vunpack.c.l.b16 %v2360
    %v2719 = vunpack.c.h.b16 %v2360
    %v2720 = vunpack.c.l.b16 %v2361
    %v2721 = vunpack.c.h.b16 %v2361
    %v2722 = vunpack.c.l.b16 %v2362
    %v2723 = vunpack.c.h.b16 %v2362
    %v2724 = vunpack.c.l.b16 %v2363
    %v2725 = vunpack.c.h.b16 %v2363
    %v2726 = vunpack.c.l.b16 %v2364
    %v2727 = vunpack.c.h.b16 %v2364
    %v2728 = vunpack.c.l.b16 %v2365
    %v2729 = vunpack.c.h.b16 %v2365
    %v2730 = vunpack.c.l.b16 %v2366
    %v2731 = vunpack.c.h.b16 %v2366
    %v2732 = vunpack.c.l.b16 %v2367
    %v2733 = vunpack.c.h.b16 %v2367
    %v2734 = vunpack.c.l.b16 %v2368
    %v2735 = vunpack.c.h.b16 %v2368
    %v2736 = vunpack.c.l.b16 %v2369
    %v2737 = vunpack.c.h.b16 %v2369
    %v2738 = vunpack.c.l.b16 %v2370
    %v2739 = vunpack.c.h.b16 %v2370
    %v2740 = vunpack.c.l.b16 %v2371
    %v2741 = vunpack.c.h.b16 %v2371
    %v2742 = vunpack.c.l.b16 %v2372
    %v2743 = vunpack.c.h.b16 %v2372
    %v2744 = vunpack.c.l.b16 %v2373
    %v2745 = vunpack.c.h.b16 %v2373
    %v2746 = vunpack.c.l.b16 %v2374
    %v2747 = vunpack.c.h.b16 %v2374
    %v2748 = vunpack.c.l.b16 %v2375
    %v2749 = vunpack.c.h.b16 %v2375
    %v2750 = vunpack.c.l.b16 %v2376
    %v2751 = vunpack.c.h.b16 %v2376
    %v2752 = vunpack.c.l.b16 %v2377
    %v2753 = vunpack.c.h.b16 %v2377
    %v2754 = vunpack.c.l.b16 %v2378
    %v2755 = vunpack.c.h.b16 %v2378
    %v2756 = vunpack.c.l.b16 %v2379
    %v2757 = vunpack.c.h.b16 %v2379
    %v2758 = vunpack.c.l.b16 %v2380
    %v2759 = vunpack.c.h.b16 %v2380
    %v2760 = vunpack.c.l.b16 %v2381
    %v2761 = vunpack.c.h.b16 %v2381
    %v2762 = vunpack.c.l.b16 %v2382
    %v2763 = vunpack.c.h.b16 %v2382
    %v2764 = vunpack.c.l.b16 %v2383
    %v2765 = vunpack.c.h.b16 %v2383
    %v2766 = vunpack.c.l.b16 %v2384
    %v2767 = vunpack.c.h.b16 %v2384
    %v2768 = vunpack.c.l.b16 %v2385
    %v2769 = vunpack.c.h.b16 %v2385
    %v2770 = vpack.c.b16 %v2518, %v2514
    %v2771 = vpack.c.b16 %v2519, %v2515
    %v2772 = vpack.c.b16 %v2520, %v2516
    %v2773 = vpack.c.b16 %v2521, %v2517
    %v2774 = vpack.c.b16 %v2526, %v2522
    %v2775 = vpack.c.b16 %v2527, %v2523
    %v2776 = vpack.c.b16 %v2528, %v2524
    %v2777 = vpack.c.b16 %v2529, %v2525
    %v2778 = vpack.c.b16 %v2534, %v2530
    %v2779 = vpack.c.b16 %v2535, %v2531
    %v2780 = vpack.c.b16 %v2536, %v2532
    %v2781 = vpack.c.b16 %v2537, %v2533
    %v2782 = vpack.c.b16 %v2542, %v2538
    %v2783 = vpack.c.b16 %v2543, %v2539
    %v2784 = vpack.c.b16 %v2544, %v2540
    %v2785 = vpack.c.b16 %v2545, %v2541
    %v2786 = vpack.c.b16 %v2550, %v2546
    %v2787 = vpack.c.b16 %v2551, %v2547
    %v2788 = vpack.c.b16 %v2552, %v2548
    %v2789 = vpack.c.b16 %v2553, %v2549
    %v2790 = vpack.c.b16 %v2558, %v2554
    %v2791 = vpack.c.b16 %v2559, %v2555
    %v2792 = vpack.c.b16 %v2560, %v2556
    %v2793 = vpack.c.b16 %v2561, %v2557
    %v2794 = vpack.c.b16 %v2566, %v2562
    %v2795 = vpack.c.b16 %v2567, %v2563
    %v2796 = vpack.c.b16 %v2568, %v2564
    %v2797 = vpack.c.b16 %v2569, %v2565
    %v2798 = vpack.c.b16 %v2574, %v2570
    %v2799 = vpack.c.b16 %v2575, %v2571
    %v2800 = vpack.c.b16 %v2576, %v2572
    %v2801 = vpack.c.b16 %v2577, %v2573
    %v2802 = vpack.c.b16 %v2582, %v2578
    %v2803 = vpack.c.b16 %v2583, %v2579
    %v2804 = vpack.c.b16 %v2584, %v2580
    %v2805 = vpack.c.b16 %v2585, %v2581
    %v2806 = vpack.c.b16 %v2590, %v2586
    %v2807 = vpack.c.b16 %v2591, %v2587
    %v2808 = vpack.c.b16 %v2592, %v2588
    %v2809 = vpack.c.b16 %v2593, %v2589
    %v2810 = vpack.c.b16 %v2598, %v2594
    %v2811 = vpack.c.b16 %v2599, %v2595
    %v2812 = vpack.c.b16 %v2600, %v2596
    %v2813 = vpack.c.b16 %v2601, %v2597
    %v2814 = vpack.c.b16 %v2606, %v2602
    %v2815 = vpack.c.b16 %v2607, %v2603
    %v2816 = vpack.c.b16 %v2608, %v2604
    %v2817 = vpack.c.b16 %v2609, %v2605
    %v2818 = vpack.c.b16 %v2614, %v2610
    %v2819 = vpack.c.b16 %v2615, %v2611
    %v2820 = vpack.c.b16 %v2616, %v2612
    %v2821 = vpack.c.b16 %v2617, %v2613
    %v2822 = vpack.c.b16 %v2622, %v2618
    %v2823 = vpack.c.b16 %v2623, %v2619
    %v2824 = vpack.c.b16 %v2624, %v2620
    %v2825 = vpack.c.b16 %v2625, %v2621
    %v2826 = vpack.c.b16 %v2630, %v2626
    %v2827 = vpack.c.b16 %v2631, %v2627
    %v2828 = vpack.c.b16 %v2632, %v2628
    %v2829 = vpack.c.b16 %v2633, %v2629
    %v2830 = vpack.c.b16 %v2638, %v2634
    %v2831 = vpack.c.b16 %v2639, %v2635
    %v2832 = vpack.c.b16 %v2640, %v2636
    %v2833 = vpack.c.b16 %v2641, %v2637
    %v2834 = vpack.c.b16 %v2646, %v2642
    %v2835 = vpack.c.b16 %v2647, %v2643
    %v2836 = vpack.c.b16 %v2648, %v2644
    %v2837 = vpack.c.b16 %v2649, %v2645
    %v2838 = vpack.c.b16 %v2654, %v2650
    %v2839 = vpack.c.b16 %v2655, %v2651
    %v2840 = vpack.c.b16 %v2656, %v2652
    %v2841 = vpack.c.b16 %v2657, %v2653
    %v2842 = vpack.c.b16 %v2662, %v2658
    %v2843 = vpack.c.b16 %v2663, %v2659
    %v2844 = vpack.c.b16 %v2664, %v2660
    %v2845 = vpack.c.b16 %v2665, %v2661
    %v2846 = vpack.c.b16 %v2670, %v2666
    %v2847 = vpack.c.b16 %v2671, %v2667
    %v2848 = vpack.c.b16 %v2672, %v2668
    %v2849 = vpack.c.b16 %v2673, %v2669
    %v2850 = vpack.c.b16 %v2678, %v2674
    %v2851 = vpack.c.b16 %v2679, %v2675
    %v2852 = vpack.c.b16 %v2680, %v2676
    %v2853 = vpack.c.b16 %v2681, %v2677
    %v2854 = vpack.c.b16 %v2686, %v2682
    %v2855 = vpack.c.b16 %v2687, %v2683
    %v2856 = vpack.c.b16 %v2688, %v2684
    %v2857 = vpack.c.b16 %v2689, %v2685
    %v2858 = vpack.c.b16 %v2694, %v2690
    %v2859 = vpack.c.b16 %v2695, %v2691
    %v2860 = vpack.c.b16 %v2696, %v2692
    %v2861 = vpack.c.b16 %v2697, %v2693
    %v2862 = vpack.c.b16 %v2702, %v2698
    %v2863 = vpack.c.b16 %v2703, %v2699
    %v2864 = vpack.c.b16 %v2704, %v2700
    %v2865 = vpack.c.b16 %v2705, %v2701
    %v2866 = vpack.c.b16 %v2710, %v2706
    %v2867 = vpack.c.b16 %v2711, %v2707
    %v2868 = vpack.c.b16 %v2712, %v2708
    %v2869 = vpack.c.b16 %v2713, %v2709
    %v2870 = vpack.c.b16 %v2718, %v2714
    %v2871 = vpack.c.b16 %v2719, %v2715
    %v2872 = vpack.c.b16 %v2720, %v2716
    %v2873 = vpack.c.b16 %v2721, %v2717
    %v2874 = vpack.c.b16 %v2726, %v2722
    %v2875 = vpack.c.b16 %v2727, %v2723
    %v2876 = vpack.c.b16 %v2728, %v2724
    %v2877 = vpack.c.b16 %v2729, %v2725
    %v2878 = vpack.c.b16 %v2734, %v2730
    %v2879 = vpack.c.b16 %v2735, %v2731
    %v2880 = vpack.c.b16 %v2736, %v2732
    %v2881 = vpack.c.b16 %v2737, %v2733
    %v2882 = vpack.c.b16 %v2742, %v2738
    %v2883 = vpack.c.b16 %v2743, %v2739
    %v2884 = vpack.c.b16 %v2744, %v2740
    %v2885 = vpack.c.b16 %v2745, %v2741
    %v2886 = vpack.c.b16 %v2750, %v2746
    %v2887 = vpack.c.b16 %v2751, %v2747
    %v2888 = vpack.c.b16 %v2752, %v2748
    %v2889 = vpack.c.b16 %v2753, %v2749
    %v2890 = vpack.c.b16 %v2758, %v2754
    %v2891 = vpack.c.b16 %v2759, %v2755
    %v2892 = vpack.c.b16 %v2760, %v2756
    %v2893 = vpack.c.b16 %v2761, %v2757
    %v2894 = vpack.c.b16 %v2766, %v2762
    %v2895 = vpack.c.b16 %v2767, %v2763
    %v2896 = vpack.c.b16 %v2768, %v2764
    %v2897 = vpack.c.b16 %v2769, %v2765
    %3026 = vmatprep.subr.bf16.mxu0 %v2771
    %3027 = vmatpush1.bf16.msra.mxu0 %v2770
    %3028 = vmatprep.subr.bf16.mxu0 %v2775
    %3029 = vmatpush1.bf16.msra.mxu0 %v2774
    %3030 = vmatprep.subr.bf16.mxu0 %v2779
    %3031 = vmatpush1.bf16.msra.mxu0 %v2778
    %3032 = vmatprep.subr.bf16.mxu0 %v2783
    %3033 = vmatpush1.bf16.msra.mxu0 %v2782
    %3034 = vmatprep.subr.bf16.mxu0 %v2787
    %3035 = vmatpush1.bf16.msra.mxu0 %v2786
    %3036 = vmatprep.subr.bf16.mxu0 %v2791
    %3037 = vmatpush1.bf16.msra.mxu0 %v2790
    %3038 = vmatprep.subr.bf16.mxu0 %v2795
    %3039 = vmatpush1.bf16.msra.mxu0 %v2794
    %3040 = vmatprep.subr.bf16.mxu0 %v2799
    %3041 = vmatpush1.bf16.msra.mxu0 %v2798
    %3042 = vmatprep.subr.bf16.mxu0 %v2803
    %3043 = vmatpush1.bf16.msra.mxu0 %v2802
    %3044 = vmatprep.subr.bf16.mxu0 %v2807
    %3045 = vmatpush1.bf16.msra.mxu0 %v2806
    %3046 = vmatprep.subr.bf16.mxu0 %v2811
    %3047 = vmatpush1.bf16.msra.mxu0 %v2810
    %3048 = vmatprep.subr.bf16.mxu0 %v2815
    %3049 = vmatpush1.bf16.msra.mxu0 %v2814
    %3050 = vmatprep.subr.bf16.mxu0 %v2819
    %3051 = vmatpush1.bf16.msra.mxu0 %v2818
    %3052 = vmatprep.subr.bf16.mxu0 %v2823
    %3053 = vmatpush1.bf16.msra.mxu0 %v2822
    %3054 = vmatprep.subr.bf16.mxu0 %v2827
    %3055 = vmatpush1.bf16.msra.mxu0 %v2826
    %3056 = vmatprep.subr.bf16.mxu0 %v2831
    %3057 = vmatpush1.bf16.msra.mxu0 %v2830
    %3058 = vmatprep.mubr.bf16.mxu0 %v2254
    %3059 = vmatmul.mubr.bf16.gmra.mrb[0].mxu0 %v2253
    %v3060 = vpop.f32.mrb[0].mxu0
    %v3061 = vadd.f32 0.0, %v3060
    %v3062 = vpop.f32.mrb[0].mxu0
    %v3063 = vadd.f32 0.0, %v3062
    %v3064 = vpop.f32.mrb[0].mxu0
    %v3065 = vpop.f32.mrb[0].mxu0
    %3066 = vdwg.mxu0
    %3067 = vmatprep.subr.bf16.mxu0 %v2835
    %3068 = vmatpush1.bf16.msra.mxu0 %v2834
    %3069 = vmatprep.subr.bf16.mxu0 %v2839
    %3070 = vmatpush1.bf16.msra.mxu0 %v2838
    %3071 = vmatprep.subr.bf16.mxu0 %v2843
    %3072 = vmatpush1.bf16.msra.mxu0 %v2842
    %3073 = vmatprep.subr.bf16.mxu0 %v2847
    %3074 = vmatpush1.bf16.msra.mxu0 %v2846
    %3075 = vmatprep.subr.bf16.mxu0 %v2851
    %3076 = vmatpush1.bf16.msra.mxu0 %v2850
    %3077 = vmatprep.subr.bf16.mxu0 %v2855
    %3078 = vmatpush1.bf16.msra.mxu0 %v2854
    %3079 = vmatprep.subr.bf16.mxu0 %v2859
    %3080 = vmatpush1.bf16.msra.mxu0 %v2858
    %3081 = vmatprep.subr.bf16.mxu0 %v2863
    %3082 = vmatpush1.bf16.msra.mxu0 %v2862
    %3083 = vmatprep.subr.bf16.mxu0 %v2867
    %3084 = vmatpush1.bf16.msra.mxu0 %v2866
    %3085 = vmatprep.subr.bf16.mxu0 %v2871
    %3086 = vmatpush1.bf16.msra.mxu0 %v2870
    %3087 = vmatprep.subr.bf16.mxu0 %v2875
    %3088 = vmatpush1.bf16.msra.mxu0 %v2874
    %3089 = vmatprep.subr.bf16.mxu0 %v2879
    %3090 = vmatpush1.bf16.msra.mxu0 %v2878
    %3091 = vmatprep.subr.bf16.mxu0 %v2883
    %3092 = vmatpush1.bf16.msra.mxu0 %v2882
    %3093 = vmatprep.subr.bf16.mxu0 %v2887
    %3094 = vmatpush1.bf16.msra.mxu0 %v2886
    %3095 = vmatprep.subr.bf16.mxu0 %v2891
    %3096 = vmatpush1.bf16.msra.mxu0 %v2890
    %3097 = vmatprep.subr.bf16.mxu0 %v2895
    %3098 = vmatpush1.bf16.msra.mxu0 %v2894
    %3099 = vmatprep.mubr.bf16.mxu0 %v2256
    %3100 = vmatmul.mubr.bf16.gmra.mrb[0].mxu0 %v2255
    %v3101 = vpop.f32.mrb[0].mxu0
    %v3102 = vadd.f32 %v3061, %v3101
    %v3103 = vpop.f32.mrb[0].mxu0
    %v3104 = vadd.f32 %v3063, %v3103
    %v3105 = vpop.f32.mrb[0].mxu0
    %v3106 = vpop.f32.mrb[0].mxu0
    %3107 = vdwg.mxu0
    %3108 = vmatprep.subr.bf16.mxu0 %v2773
    %3109 = vmatpush1.bf16.msra.mxu0 %v2772
    %3110 = vmatprep.subr.bf16.mxu0 %v2777
    %3111 = vmatpush1.bf16.msra.mxu0 %v2776
    %3112 = vmatprep.subr.bf16.mxu0 %v2781
    %3113 = vmatpush1.bf16.msra.mxu0 %v2780
    %3114 = vmatprep.subr.bf16.mxu0 %v2785
    %3115 = vmatpush1.bf16.msra.mxu0 %v2784
    %3116 = vmatprep.subr.bf16.mxu0 %v2789
    %3117 = vmatpush1.bf16.msra.mxu0 %v2788
    %3118 = vmatprep.subr.bf16.mxu0 %v2793
    %3119 = vmatpush1.bf16.msra.mxu0 %v2792
    %3120 = vmatprep.subr.bf16.mxu0 %v2797
    %3121 = vmatpush1.bf16.msra.mxu0 %v2796
    %3122 = vmatprep.subr.bf16.mxu0 %v2801
    %3123 = vmatpush1.bf16.msra.mxu0 %v2800
    %3124 = vmatprep.subr.bf16.mxu0 %v2805
    %3125 = vmatpush1.bf16.msra.mxu0 %v2804
    %3126 = vmatprep.subr.bf16.mxu0 %v2809
    %3127 = vmatpush1.bf16.msra.mxu0 %v2808
    %3128 = vmatprep.subr.bf16.mxu0 %v2813
    %3129 = vmatpush1.bf16.msra.mxu0 %v2812
    %3130 = vmatprep.subr.bf16.mxu0 %v2817
    %3131 = vmatpush1.bf16.msra.mxu0 %v2816
    %3132 = vmatprep.subr.bf16.mxu0 %v2821
    %3133 = vmatpush1.bf16.msra.mxu0 %v2820
    %3134 = vmatprep.subr.bf16.mxu0 %v2825
    %3135 = vmatpush1.bf16.msra.mxu0 %v2824
    %3136 = vmatprep.subr.bf16.mxu0 %v2829
    %3137 = vmatpush1.bf16.msra.mxu0 %v2828
    %3138 = vmatprep.subr.bf16.mxu0 %v2833
    %3139 = vmatpush1.bf16.msra.mxu0 %v2832
    %3140 = vmatprep.mubr.bf16.mxu0 %v2254
    %3141 = vmatmul.mubr.bf16.gmra.mrb[0].mxu0 %v2253
    %v3142 = vpop.f32.mrb[0].mxu0
    %v3143 = vadd.f32 0.0, %v3142
    %v3144 = vpop.f32.mrb[0].mxu0
    %v3145 = vadd.f32 0.0, %v3144
    %v3146 = vpop.f32.mrb[0].mxu0
    %v3147 = vpop.f32.mrb[0].mxu0
    %3148 = vdwg.mxu0
    %3149 = vmatprep.subr.bf16.mxu0 %v2837
    %3150 = vmatpush1.bf16.msra.mxu0 %v2836
    %3151 = vmatprep.subr.bf16.mxu0 %v2841
    %3152 = vmatpush1.bf16.msra.mxu0 %v2840
    %3153 = vmatprep.subr.bf16.mxu0 %v2845
    %3154 = vmatpush1.bf16.msra.mxu0 %v2844
    %3155 = vmatprep.subr.bf16.mxu0 %v2849
    %3156 = vmatpush1.bf16.msra.mxu0 %v2848
    %3157 = vmatprep.subr.bf16.mxu0 %v2853
    %3158 = vmatpush1.bf16.msra.mxu0 %v2852
    %3159 = vmatprep.subr.bf16.mxu0 %v2857
    %3160 = vmatpush1.bf16.msra.mxu0 %v2856
    %3161 = vmatprep.subr.bf16.mxu0 %v2861
    %3162 = vmatpush1.bf16.msra.mxu0 %v2860
    %3163 = vmatprep.subr.bf16.mxu0 %v2865
    %3164 = vmatpush1.bf16.msra.mxu0 %v2864
    %3165 = vmatprep.subr.bf16.mxu0 %v2869
    %3166 = vmatpush1.bf16.msra.mxu0 %v2868
    %3167 = vmatprep.subr.bf16.mxu0 %v2873
    %3168 = vmatpush1.bf16.msra.mxu0 %v2872
    %3169 = vmatprep.subr.bf16.mxu0 %v2877
    %3170 = vmatpush1.bf16.msra.mxu0 %v2876
    %3171 = vmatprep.subr.bf16.mxu0 %v2881
    %3172 = vmatpush1.bf16.msra.mxu0 %v2880
    %3173 = vmatprep.subr.bf16.mxu0 %v2885
    %3174 = vmatpush1.bf16.msra.mxu0 %v2884
    %3175 = vmatprep.subr.bf16.mxu0 %v2889
    %3176 = vmatpush1.bf16.msra.mxu0 %v2888
    %3177 = vmatprep.subr.bf16.mxu0 %v2893
    %3178 = vmatpush1.bf16.msra.mxu0 %v2892
    %3179 = vmatprep.subr.bf16.mxu0 %v2897
    %3180 = vmatpush1.bf16.msra.mxu0 %v2896
    %3181 = vmatprep.mubr.bf16.mxu0 %v2256
    %3182 = vmatmul.mubr.bf16.gmra.mrb[0].mxu0 %v2255
    %v3183 = vpop.f32.mrb[0].mxu0
    %v3184 = vadd.f32 %v3143, %v3183
    %v3185 = vpop.f32.mrb[0].mxu0
    %v3186 = vadd.f32 %v3145, %v3185
    %v3187 = vpop.f32.mrb[0].mxu0
    %v3188 = vpop.f32.mrb[0].mxu0
    %3189 = vdwg.mxu0
    %v3190 = vrot.slane %v3102, 4
    %v3191 = vadd.f32 %v3102, %v3190
    %v3192 = vrot.slane %v3191, 2
    %v3193 = vadd.f32 %v3191, %v3192
    %v3194 = vrot.slane %v3193, 1
    %v3195 = vadd.f32 %v3193, %v3194
    %v3196 = vrot.slane %v3104, 4
    %v3197 = vadd.f32 %v3104, %v3196
    %v3198 = vrot.slane %v3197, 2
    %v3199 = vadd.f32 %v3197, %v3198
    %v3200 = vrot.slane %v3199, 1
    %v3201 = vadd.f32 %v3199, %v3200
    %v3202 = vrot.slane %v3184, 4
    %v3203 = vadd.f32 %v3184, %v3202
    %v3204 = vrot.slane %v3203, 2
    %v3205 = vadd.f32 %v3203, %v3204
    %v3206 = vrot.slane %v3205, 1
    %v3207 = vadd.f32 %v3205, %v3206
    %v3208 = vrot.slane %v3186, 4
    %v3209 = vadd.f32 %v3186, %v3208
    %v3210 = vrot.slane %v3209, 2
    %v3211 = vadd.f32 %v3209, %v3210
    %v3212 = vrot.slane %v3211, 1
    %v3213 = vadd.f32 %v3211, %v3212
    %v3214 = vmul.f32 %v3195, 0.125
    %v3215 = vmul.f32 %v3201, 0.125
    %v3216 = vmul.f32 %v3207, 0.125
    %v3217 = vmul.f32 %v3213, 0.125
    %v3218 = vmul.f32 %v3102, %v3102
    %v3219 = vmul.f32 %v3104, %v3104
    %v3220 = vmul.f32 %v3184, %v3184
    %v3221 = vmul.f32 %v3186, %v3186
    %v3222 = vrot.slane %v3218, 4
    %v3223 = vadd.f32 %v3218, %v3222
    %v3224 = vrot.slane %v3223, 2
    %v3225 = vadd.f32 %v3223, %v3224
    %v3226 = vrot.slane %v3225, 1
    %v3227 = vadd.f32 %v3225, %v3226
    %v3228 = vrot.slane %v3219, 4
    %v3229 = vadd.f32 %v3219, %v3228
    %v3230 = vrot.slane %v3229, 2
    %v3231 = vadd.f32 %v3229, %v3230
    %v3232 = vrot.slane %v3231, 1
    %v3233 = vadd.f32 %v3231, %v3232
    %v3234 = vrot.slane %v3220, 4
    %v3235 = vadd.f32 %v3220, %v3234
    %v3236 = vrot.slane %v3235, 2
    %v3237 = vadd.f32 %v3235, %v3236
    %v3238 = vrot.slane %v3237, 1
    %v3239 = vadd.f32 %v3237, %v3238
    %v3240 = vrot.slane %v3221, 4
    %v3241 = vadd.f32 %v3221, %v3240
    %v3242 = vrot.slane %v3241, 2
    %v3243 = vadd.f32 %v3241, %v3242
    %v3244 = vrot.slane %v3243, 1
    %v3245 = vadd.f32 %v3243, %v3244
    %v3246 = vmul.f32 %v3227, 0.125
    %v3247 = vmul.f32 %v3233, 0.125
    %v3248 = vmul.f32 %v3239, 0.125
    %v3249 = vmul.f32 %v3245, 0.125
    %v3250 = vmul.f32 %v3214, %v3214
    %v3251 = vmul.f32 %v3215, %v3215
    %v3252 = vmul.f32 %v3216, %v3216
    %v3253 = vmul.f32 %v3217, %v3217
    %v3254 = vsub.f32 %v3246, %v3250
    %v3255 = vsub.f32 %v3247, %v3251
    %v3256 = vsub.f32 %v3248, %v3252
    %v3257 = vsub.f32 %v3249, %v3253
    %v3258 = vadd.f32 %v3254, 1e-05
    %v3259 = vadd.f32 %v3255, 1e-05
    %v3260 = vadd.f32 %v3256, 1e-05
    %v3261 = vadd.f32 %v3257, 1e-05
    %v3262 = vrsqrt.pop %v3258
    %v3263 = vrsqrt.pop %v3259
    %v3264 = vrsqrt.pop %v3260
    %v3265 = vrsqrt.pop %v3261
    %v3266 = vmul.f32 %v84, %v3262
    %v3267 = vmul.f32 %v85, %v3263
    %v3268 = vmul.f32 %v86, %v3264
    %v3269 = vmul.f32 %v87, %v3265
    %v3270 = vmul.f32 %v3214, %v3266
    %v3271 = vmul.f32 %v3215, %v3267
    %v3272 = vmul.f32 %v3216, %v3268
    %v3273 = vmul.f32 %v3217, %v3269
    %v3278 = vrot.slane %v3270, 4
    %v3279 = vrot.slane %v3271, 4
    %v3280 = vrot.slane %v3272, 4
    %v3281 = vrot.slane %v3273, 4
    %v3286 = vsub.f32 %v84, %v3278
    %v3287 = vsub.f32 %v85, %v3279
    %v3288 = vsub.f32 %v86, %v3280
    %v3289 = vsub.f32 %v87, %v3281
    %v3290 = vlaneseq
    %v3291 = vshrl.u32 %v3290, 7
    %v3292 = vsub.s32 2, %v3291
    %v3293 = vrot.slane %v3266, %v3292
    %v3294 = vlaneseq
    %v3295 = vshrl.u32 %v3294, 7
    %v3296 = vsub.s32 2, %v3295
    %v3297 = vrot.slane %v3267, %v3296
    %v3298 = vlaneseq
    %v3299 = vshrl.u32 %v3298, 7
    %v3300 = vsub.s32 2, %v3299
    %v3301 = vrot.slane %v3268, %v3300
    %v3302 = vlaneseq
    %v3303 = vshrl.u32 %v3302, 7
    %v3304 = vsub.s32 2, %v3303
    %v3305 = vrot.slane %v3269, %v3304
    %v3306 = vmul.f32 %v3102, %v3293
    %v3307 = vmul.f32 %v3104, %v3297
    %v3308 = vmul.f32 %v3184, %v3301
    %v3309 = vmul.f32 %v3186, %v3305
    %v3310 = vlaneseq
    %v3311 = vshrl.u32 %v3310, 7
    %v3312 = vsub.s32 6, %v3311
    %v3313 = vrot.slane %v3286, %v3312
    %v3314 = vlaneseq
    %v3315 = vshrl.u32 %v3314, 7
    %v3316 = vsub.s32 6, %v3315
    %v3317 = vrot.slane %v3287, %v3316
    %v3318 = vlaneseq
    %v3319 = vshrl.u32 %v3318, 7
    %v3320 = vsub.s32 6, %v3319
    %v3321 = vrot.slane %v3288, %v3320
    %v3322 = vlaneseq
    %v3323 = vshrl.u32 %v3322, 7
    %v3324 = vsub.s32 6, %v3323
    %v3325 = vrot.slane %v3289, %v3324
    %v3326 = vadd.f32 %v3306, %v3313
    %v3327 = vadd.f32 %v3307, %v3317
    %v3328 = vadd.f32 %v3308, %v3321
    %v3329 = vadd.f32 %v3309, %v3325
    %v3330 = vmax.f32 %v3326, 0.0
    %v3331 = vmax.f32 %v3327, 0.0
    %v3332 = vmax.f32 %v3328, 0.0
    %v3333 = vmax.f32 %v3329, 0.0
    %v3334 = vpack.c.bf16 %v3330, %v3330
    %v3335 = vpack.c.bf16 %v3331, %v3331
    %v3336 = vpack.c.bf16 %v3332, %v3332
    %v3337 = vpack.c.bf16 %v3333, %v3333
    %s3338 = scalar_lea.vmem [#allocation5], 3072
    %v3339 = vld [vmem:[%s3338] sm:$0xff]
    %v3340 = vld [vmem:[%s3338 + $0x8] sm:$0xff]
    %v3341 = vld [vmem:[%s3338 + $0x10] sm:$0xff]
    %v3342 = vld [vmem:[%s3338 + $0x18] sm:$0xff]
    %v3343 = vld [vmem:[%s3338 + $0x20] sm:$0xff]
    %v3344 = vld [vmem:[%s3338 + $0x28] sm:$0xff]
    %v3345 = vld [vmem:[%s3338 + $0x30] sm:$0xff]
    %v3346 = vld [vmem:[%s3338 + $0x38] sm:$0xff]
    %v3347 = vld [vmem:[%s3338 + $0x40] sm:$0xff]
    %v3348 = vld [vmem:[%s3338 + $0x48] sm:$0xff]
    %v3349 = vld [vmem:[%s3338 + $0x50] sm:$0xff]
    %v3350 = vld [vmem:[%s3338 + $0x58] sm:$0xff]
    %v3351 = vld [vmem:[%s3338 + $0x60] sm:$0xff]
    %v3352 = vld [vmem:[%s3338 + $0x68] sm:$0xff]
    %v3353 = vld [vmem:[%s3338 + $0x70] sm:$0xff]
    %v3354 = vld [vmem:[%s3338 + $0x78] sm:$0xff]
    %v3355 = vld [vmem:[%s3338 + $0x80] sm:$0xff]
    %v3356 = vld [vmem:[%s3338 + $0x88] sm:$0xff]
    %v3357 = vld [vmem:[%s3338 + $0x90] sm:$0xff]
    %v3358 = vld [vmem:[%s3338 + $0x98] sm:$0xff]
    %v3359 = vld [vmem:[%s3338 + $0xa0] sm:$0xff]
    %v3360 = vld [vmem:[%s3338 + $0xa8] sm:$0xff]
    %v3361 = vld [vmem:[%s3338 + $0xb0] sm:$0xff]
    %v3362 = vld [vmem:[%s3338 + $0xb8] sm:$0xff]
    %v3363 = vld [vmem:[%s3338 + $0xc0] sm:$0xff]
    %v3364 = vld [vmem:[%s3338 + $0xc8] sm:$0xff]
    %v3365 = vld [vmem:[%s3338 + $0xd0] sm:$0xff]
    %v3366 = vld [vmem:[%s3338 + $0xd8] sm:$0xff]
    %v3367 = vld [vmem:[%s3338 + $0xe0] sm:$0xff]
    %v3368 = vld [vmem:[%s3338 + $0xe8] sm:$0xff]
    %v3369 = vld [vmem:[%s3338 + $0xf0] sm:$0xff]
    %v3370 = vld [vmem:[%s3338 + $0xf8] sm:$0xff]
    %v3371 = vld [vmem:[%s3338 + $0x100] sm:$0xff]
    %v3372 = vld [vmem:[%s3338 + $0x108] sm:$0xff]
    %v3373 = vld [vmem:[%s3338 + $0x110] sm:$0xff]
    %v3374 = vld [vmem:[%s3338 + $0x118] sm:$0xff]
    %v3375 = vld [vmem:[%s3338 + $0x120] sm:$0xff]
    %v3376 = vld [vmem:[%s3338 + $0x128] sm:$0xff]
    %v3377 = vld [vmem:[%s3338 + $0x130] sm:$0xff]
    %v3378 = vld [vmem:[%s3338 + $0x138] sm:$0xff]
    %v3379 = vld [vmem:[%s3338 + $0x140] sm:$0xff]
    %v3380 = vld [vmem:[%s3338 + $0x148] sm:$0xff]
    %v3381 = vld [vmem:[%s3338 + $0x150] sm:$0xff]
    %v3382 = vld [vmem:[%s3338 + $0x158] sm:$0xff]
    %v3383 = vld [vmem:[%s3338 + $0x160] sm:$0xff]
    %v3384 = vld [vmem:[%s3338 + $0x168] sm:$0xff]
    %v3385 = vld [vmem:[%s3338 + $0x170] sm:$0xff]
    %v3386 = vld [vmem:[%s3338 + $0x178] sm:$0xff]
    %v3387 = vld [vmem:[%s3338 + $0x180] sm:$0xff]
    %v3388 = vld [vmem:[%s3338 + $0x188] sm:$0xff]
    %v3389 = vld [vmem:[%s3338 + $0x190] sm:$0xff]
    %v3390 = vld [vmem:[%s3338 + $0x198] sm:$0xff]
    %v3391 = vld [vmem:[%s3338 + $0x1a0] sm:$0xff]
    %v3392 = vld [vmem:[%s3338 + $0x1a8] sm:$0xff]
    %v3393 = vld [vmem:[%s3338 + $0x1b0] sm:$0xff]
    %v3394 = vld [vmem:[%s3338 + $0x1b8] sm:$0xff]
    %v3395 = vld [vmem:[%s3338 + $0x1c0] sm:$0xff]
    %v3396 = vld [vmem:[%s3338 + $0x1c8] sm:$0xff]
    %v3397 = vld [vmem:[%s3338 + $0x1d0] sm:$0xff]
    %v3398 = vld [vmem:[%s3338 + $0x1d8] sm:$0xff]
    %v3399 = vld [vmem:[%s3338 + $0x1e0] sm:$0xff]
    %v3400 = vld [vmem:[%s3338 + $0x1e8] sm:$0xff]
    %v3401 = vld [vmem:[%s3338 + $0x1f0] sm:$0xff]
    %v3402 = vld [vmem:[%s3338 + $0x1f8] sm:$0xff]
    %v3403 = vld [vmem:[%s3338 + $0x200] sm:$0xff]
    %v3404 = vld [vmem:[%s3338 + $0x208] sm:$0xff]
    %v3405 = vld [vmem:[%s3338 + $0x210] sm:$0xff]
    %v3406 = vld [vmem:[%s3338 + $0x218] sm:$0xff]
    %v3407 = vld [vmem:[%s3338 + $0x220] sm:$0xff]
    %v3408 = vld [vmem:[%s3338 + $0x228] sm:$0xff]
    %v3409 = vld [vmem:[%s3338 + $0x230] sm:$0xff]
    %v3410 = vld [vmem:[%s3338 + $0x238] sm:$0xff]
    %v3411 = vld [vmem:[%s3338 + $0x240] sm:$0xff]
    %v3412 = vld [vmem:[%s3338 + $0x248] sm:$0xff]
    %v3413 = vld [vmem:[%s3338 + $0x250] sm:$0xff]
    %v3414 = vld [vmem:[%s3338 + $0x258] sm:$0xff]
    %v3415 = vld [vmem:[%s3338 + $0x260] sm:$0xff]
    %v3416 = vld [vmem:[%s3338 + $0x268] sm:$0xff]
    %v3417 = vld [vmem:[%s3338 + $0x270] sm:$0xff]
    %v3418 = vld [vmem:[%s3338 + $0x278] sm:$0xff]
    %v3419 = vld [vmem:[%s3338 + $0x280] sm:$0xff]
    %v3420 = vld [vmem:[%s3338 + $0x288] sm:$0xff]
    %v3421 = vld [vmem:[%s3338 + $0x290] sm:$0xff]
    %v3422 = vld [vmem:[%s3338 + $0x298] sm:$0xff]
    %v3423 = vld [vmem:[%s3338 + $0x2a0] sm:$0xff]
    %v3424 = vld [vmem:[%s3338 + $0x2a8] sm:$0xff]
    %v3425 = vld [vmem:[%s3338 + $0x2b0] sm:$0xff]
    %v3426 = vld [vmem:[%s3338 + $0x2b8] sm:$0xff]
    %v3427 = vld [vmem:[%s3338 + $0x2c0] sm:$0xff]
    %v3428 = vld [vmem:[%s3338 + $0x2c8] sm:$0xff]
    %v3429 = vld [vmem:[%s3338 + $0x2d0] sm:$0xff]
    %v3430 = vld [vmem:[%s3338 + $0x2d8] sm:$0xff]
    %v3431 = vld [vmem:[%s3338 + $0x2e0] sm:$0xff]
    %v3432 = vld [vmem:[%s3338 + $0x2e8] sm:$0xff]
    %v3433 = vld [vmem:[%s3338 + $0x2f0] sm:$0xff]
    %v3434 = vld [vmem:[%s3338 + $0x2f8] sm:$0xff]
    %v3435 = vld [vmem:[%s3338 + $0x300] sm:$0xff]
    %v3436 = vld [vmem:[%s3338 + $0x308] sm:$0xff]
    %v3437 = vld [vmem:[%s3338 + $0x310] sm:$0xff]
    %v3438 = vld [vmem:[%s3338 + $0x318] sm:$0xff]
    %v3439 = vld [vmem:[%s3338 + $0x320] sm:$0xff]
    %v3440 = vld [vmem:[%s3338 + $0x328] sm:$0xff]
    %v3441 = vld [vmem:[%s3338 + $0x330] sm:$0xff]
    %v3442 = vld [vmem:[%s3338 + $0x338] sm:$0xff]
    %v3443 = vld [vmem:[%s3338 + $0x340] sm:$0xff]
    %v3444 = vld [vmem:[%s3338 + $0x348] sm:$0xff]
    %v3445 = vld [vmem:[%s3338 + $0x350] sm:$0xff]
    %v3446 = vld [vmem:[%s3338 + $0x358] sm:$0xff]
    %v3447 = vld [vmem:[%s3338 + $0x360] sm:$0xff]
    %v3448 = vld [vmem:[%s3338 + $0x368] sm:$0xff]
    %v3449 = vld [vmem:[%s3338 + $0x370] sm:$0xff]
    %v3450 = vld [vmem:[%s3338 + $0x378] sm:$0xff]
    %v3451 = vld [vmem:[%s3338 + $0x380] sm:$0xff]
    %v3452 = vld [vmem:[%s3338 + $0x388] sm:$0xff]
    %v3453 = vld [vmem:[%s3338 + $0x390] sm:$0xff]
    %v3454 = vld [vmem:[%s3338 + $0x398] sm:$0xff]
    %v3455 = vld [vmem:[%s3338 + $0x3a0] sm:$0xff]
    %v3456 = vld [vmem:[%s3338 + $0x3a8] sm:$0xff]
    %v3457 = vld [vmem:[%s3338 + $0x3b0] sm:$0xff]
    %v3458 = vld [vmem:[%s3338 + $0x3b8] sm:$0xff]
    %v3459 = vld [vmem:[%s3338 + $0x3c0] sm:$0xff]
    %v3460 = vld [vmem:[%s3338 + $0x3c8] sm:$0xff]
    %v3461 = vld [vmem:[%s3338 + $0x3d0] sm:$0xff]
    %v3462 = vld [vmem:[%s3338 + $0x3d8] sm:$0xff]
    %v3463 = vld [vmem:[%s3338 + $0x3e0] sm:$0xff]
    %v3464 = vld [vmem:[%s3338 + $0x3e8] sm:$0xff]
    %v3465 = vld [vmem:[%s3338 + $0x3f0] sm:$0xff]
    %v3466 = vld [vmem:[%s3338 + $0x3f8] sm:$0xff]
    %v3595 = vunpack.c.l.b16 %v3339
    %v3596 = vunpack.c.h.b16 %v3339
    %v3597 = vunpack.c.l.b16 %v3340
    %v3598 = vunpack.c.h.b16 %v3340
    %v3599 = vunpack.c.l.b16 %v3341
    %v3600 = vunpack.c.h.b16 %v3341
    %v3601 = vunpack.c.l.b16 %v3342
    %v3602 = vunpack.c.h.b16 %v3342
    %v3603 = vunpack.c.l.b16 %v3343
    %v3604 = vunpack.c.h.b16 %v3343
    %v3605 = vunpack.c.l.b16 %v3344
    %v3606 = vunpack.c.h.b16 %v3344
    %v3607 = vunpack.c.l.b16 %v3345
    %v3608 = vunpack.c.h.b16 %v3345
    %v3609 = vunpack.c.l.b16 %v3346
    %v3610 = vunpack.c.h.b16 %v3346
    %v3611 = vunpack.c.l.b16 %v3347
    %v3612 = vunpack.c.h.b16 %v3347
    %v3613 = vunpack.c.l.b16 %v3348
    %v3614 = vunpack.c.h.b16 %v3348
    %v3615 = vunpack.c.l.b16 %v3349
    %v3616 = vunpack.c.h.b16 %v3349
    %v3617 = vunpack.c.l.b16 %v3350
    %v3618 = vunpack.c.h.b16 %v3350
    %v3619 = vunpack.c.l.b16 %v3351
    %v3620 = vunpack.c.h.b16 %v3351
    %v3621 = vunpack.c.l.b16 %v3352
    %v3622 = vunpack.c.h.b16 %v3352
    %v3623 = vunpack.c.l.b16 %v3353
    %v3624 = vunpack.c.h.b16 %v3353
    %v3625 = vunpack.c.l.b16 %v3354
    %v3626 = vunpack.c.h.b16 %v3354
    %v3627 = vunpack.c.l.b16 %v3355
    %v3628 = vunpack.c.h.b16 %v3355
    %v3629 = vunpack.c.l.b16 %v3356
    %v3630 = vunpack.c.h.b16 %v3356
    %v3631 = vunpack.c.l.b16 %v3357
    %v3632 = vunpack.c.h.b16 %v3357
    %v3633 = vunpack.c.l.b16 %v3358
    %v3634 = vunpack.c.h.b16 %v3358
    %v3635 = vunpack.c.l.b16 %v3359
    %v3636 = vunpack.c.h.b16 %v3359
    %v3637 = vunpack.c.l.b16 %v3360
    %v3638 = vunpack.c.h.b16 %v3360
    %v3639 = vunpack.c.l.b16 %v3361
    %v3640 = vunpack.c.h.b16 %v3361
    %v3641 = vunpack.c.l.b16 %v3362
    %v3642 = vunpack.c.h.b16 %v3362
    %v3643 = vunpack.c.l.b16 %v3363
    %v3644 = vunpack.c.h.b16 %v3363
    %v3645 = vunpack.c.l.b16 %v3364
    %v3646 = vunpack.c.h.b16 %v3364
    %v3647 = vunpack.c.l.b16 %v3365
    %v3648 = vunpack.c.h.b16 %v3365
    %v3649 = vunpack.c.l.b16 %v3366
    %v3650 = vunpack.c.h.b16 %v3366
    %v3651 = vunpack.c.l.b16 %v3367
    %v3652 = vunpack.c.h.b16 %v3367
    %v3653 = vunpack.c.l.b16 %v3368
    %v3654 = vunpack.c.h.b16 %v3368
    %v3655 = vunpack.c.l.b16 %v3369
    %v3656 = vunpack.c.h.b16 %v3369
    %v3657 = vunpack.c.l.b16 %v3370
    %v3658 = vunpack.c.h.b16 %v3370
    %v3659 = vunpack.c.l.b16 %v3371
    %v3660 = vunpack.c.h.b16 %v3371
    %v3661 = vunpack.c.l.b16 %v3372
    %v3662 = vunpack.c.h.b16 %v3372
    %v3663 = vunpack.c.l.b16 %v3373
    %v3664 = vunpack.c.h.b16 %v3373
    %v3665 = vunpack.c.l.b16 %v3374
    %v3666 = vunpack.c.h.b16 %v3374
    %v3667 = vunpack.c.l.b16 %v3375
    %v3668 = vunpack.c.h.b16 %v3375
    %v3669 = vunpack.c.l.b16 %v3376
    %v3670 = vunpack.c.h.b16 %v3376
    %v3671 = vunpack.c.l.b16 %v3377
    %v3672 = vunpack.c.h.b16 %v3377
    %v3673 = vunpack.c.l.b16 %v3378
    %v3674 = vunpack.c.h.b16 %v3378
    %v3675 = vunpack.c.l.b16 %v3379
    %v3676 = vunpack.c.h.b16 %v3379
    %v3677 = vunpack.c.l.b16 %v3380
    %v3678 = vunpack.c.h.b16 %v3380
    %v3679 = vunpack.c.l.b16 %v3381
    %v3680 = vunpack.c.h.b16 %v3381
    %v3681 = vunpack.c.l.b16 %v3382
    %v3682 = vunpack.c.h.b16 %v3382
    %v3683 = vunpack.c.l.b16 %v3383
    %v3684 = vunpack.c.h.b16 %v3383
    %v3685 = vunpack.c.l.b16 %v3384
    %v3686 = vunpack.c.h.b16 %v3384
    %v3687 = vunpack.c.l.b16 %v3385
    %v3688 = vunpack.c.h.b16 %v3385
    %v3689 = vunpack.c.l.b16 %v3386
    %v3690 = vunpack.c.h.b16 %v3386
    %v3691 = vunpack.c.l.b16 %v3387
    %v3692 = vunpack.c.h.b16 %v3387
    %v3693 = vunpack.c.l.b16 %v3388
    %v3694 = vunpack.c.h.b16 %v3388
    %v3695 = vunpack.c.l.b16 %v3389
    %v3696 = vunpack.c.h.b16 %v3389
    %v3697 = vunpack.c.l.b16 %v3390
    %v3698 = vunpack.c.h.b16 %v3390
    %v3699 = vunpack.c.l.b16 %v3391
    %v3700 = vunpack.c.h.b16 %v3391
    %v3701 = vunpack.c.l.b16 %v3392
    %v3702 = vunpack.c.h.b16 %v3392
    %v3703 = vunpack.c.l.b16 %v3393
    %v3704 = vunpack.c.h.b16 %v3393
    %v3705 = vunpack.c.l.b16 %v3394
    %v3706 = vunpack.c.h.b16 %v3394
    %v3707 = vunpack.c.l.b16 %v3395
    %v3708 = vunpack.c.h.b16 %v3395
    %v3709 = vunpack.c.l.b16 %v3396
    %v3710 = vunpack.c.h.b16 %v3396
    %v3711 = vunpack.c.l.b16 %v3397
    %v3712 = vunpack.c.h.b16 %v3397
    %v3713 = vunpack.c.l.b16 %v3398
    %v3714 = vunpack.c.h.b16 %v3398
    %v3715 = vunpack.c.l.b16 %v3399
    %v3716 = vunpack.c.h.b16 %v3399
    %v3717 = vunpack.c.l.b16 %v3400
    %v3718 = vunpack.c.h.b16 %v3400
    %v3719 = vunpack.c.l.b16 %v3401
    %v3720 = vunpack.c.h.b16 %v3401
    %v3721 = vunpack.c.l.b16 %v3402
    %v3722 = vunpack.c.h.b16 %v3402
    %v3723 = vunpack.c.l.b16 %v3403
    %v3724 = vunpack.c.h.b16 %v3403
    %v3725 = vunpack.c.l.b16 %v3404
    %v3726 = vunpack.c.h.b16 %v3404
    %v3727 = vunpack.c.l.b16 %v3405
    %v3728 = vunpack.c.h.b16 %v3405
    %v3729 = vunpack.c.l.b16 %v3406
    %v3730 = vunpack.c.h.b16 %v3406
    %v3731 = vunpack.c.l.b16 %v3407
    %v3732 = vunpack.c.h.b16 %v3407
    %v3733 = vunpack.c.l.b16 %v3408
    %v3734 = vunpack.c.h.b16 %v3408
    %v3735 = vunpack.c.l.b16 %v3409
    %v3736 = vunpack.c.h.b16 %v3409
    %v3737 = vunpack.c.l.b16 %v3410
    %v3738 = vunpack.c.h.b16 %v3410
    %v3739 = vunpack.c.l.b16 %v3411
    %v3740 = vunpack.c.h.b16 %v3411
    %v3741 = vunpack.c.l.b16 %v3412
    %v3742 = vunpack.c.h.b16 %v3412
    %v3743 = vunpack.c.l.b16 %v3413
    %v3744 = vunpack.c.h.b16 %v3413
    %v3745 = vunpack.c.l.b16 %v3414
    %v3746 = vunpack.c.h.b16 %v3414
    %v3747 = vunpack.c.l.b16 %v3415
    %v3748 = vunpack.c.h.b16 %v3415
    %v3749 = vunpack.c.l.b16 %v3416
    %v3750 = vunpack.c.h.b16 %v3416
    %v3751 = vunpack.c.l.b16 %v3417
    %v3752 = vunpack.c.h.b16 %v3417
    %v3753 = vunpack.c.l.b16 %v3418
    %v3754 = vunpack.c.h.b16 %v3418
    %v3755 = vunpack.c.l.b16 %v3419
    %v3756 = vunpack.c.h.b16 %v3419
    %v3757 = vunpack.c.l.b16 %v3420
    %v3758 = vunpack.c.h.b16 %v3420
    %v3759 = vunpack.c.l.b16 %v3421
    %v3760 = vunpack.c.h.b16 %v3421
    %v3761 = vunpack.c.l.b16 %v3422
    %v3762 = vunpack.c.h.b16 %v3422
    %v3763 = vunpack.c.l.b16 %v3423
    %v3764 = vunpack.c.h.b16 %v3423
    %v3765 = vunpack.c.l.b16 %v3424
    %v3766 = vunpack.c.h.b16 %v3424
    %v3767 = vunpack.c.l.b16 %v3425
    %v3768 = vunpack.c.h.b16 %v3425
    %v3769 = vunpack.c.l.b16 %v3426
    %v3770 = vunpack.c.h.b16 %v3426
    %v3771 = vunpack.c.l.b16 %v3427
    %v3772 = vunpack.c.h.b16 %v3427
    %v3773 = vunpack.c.l.b16 %v3428
    %v3774 = vunpack.c.h.b16 %v3428
    %v3775 = vunpack.c.l.b16 %v3429
    %v3776 = vunpack.c.h.b16 %v3429
    %v3777 = vunpack.c.l.b16 %v3430
    %v3778 = vunpack.c.h.b16 %v3430
    %v3779 = vunpack.c.l.b16 %v3431
    %v3780 = vunpack.c.h.b16 %v3431
    %v3781 = vunpack.c.l.b16 %v3432
    %v3782 = vunpack.c.h.b16 %v3432
    %v3783 = vunpack.c.l.b16 %v3433
    %v3784 = vunpack.c.h.b16 %v3433
    %v3785 = vunpack.c.l.b16 %v3434
    %v3786 = vunpack.c.h.b16 %v3434
    %v3787 = vunpack.c.l.b16 %v3435
    %v3788 = vunpack.c.h.b16 %v3435
    %v3789 = vunpack.c.l.b16 %v3436
    %v3790 = vunpack.c.h.b16 %v3436
    %v3791 = vunpack.c.l.b16 %v3437
    %v3792 = vunpack.c.h.b16 %v3437
    %v3793 = vunpack.c.l.b16 %v3438
    %v3794 = vunpack.c.h.b16 %v3438
    %v3795 = vunpack.c.l.b16 %v3439
    %v3796 = vunpack.c.h.b16 %v3439
    %v3797 = vunpack.c.l.b16 %v3440
    %v3798 = vunpack.c.h.b16 %v3440
    %v3799 = vunpack.c.l.b16 %v3441
    %v3800 = vunpack.c.h.b16 %v3441
    %v3801 = vunpack.c.l.b16 %v3442
    %v3802 = vunpack.c.h.b16 %v3442
    %v3803 = vunpack.c.l.b16 %v3443
    %v3804 = vunpack.c.h.b16 %v3443
    %v3805 = vunpack.c.l.b16 %v3444
    %v3806 = vunpack.c.h.b16 %v3444
    %v3807 = vunpack.c.l.b16 %v3445
    %v3808 = vunpack.c.h.b16 %v3445
    %v3809 = vunpack.c.l.b16 %v3446
    %v3810 = vunpack.c.h.b16 %v3446
    %v3811 = vunpack.c.l.b16 %v3447
    %v3812 = vunpack.c.h.b16 %v3447
    %v3813 = vunpack.c.l.b16 %v3448
    %v3814 = vunpack.c.h.b16 %v3448
    %v3815 = vunpack.c.l.b16 %v3449
    %v3816 = vunpack.c.h.b16 %v3449
    %v3817 = vunpack.c.l.b16 %v3450
    %v3818 = vunpack.c.h.b16 %v3450
    %v3819 = vunpack.c.l.b16 %v3451
    %v3820 = vunpack.c.h.b16 %v3451
    %v3821 = vunpack.c.l.b16 %v3452
    %v3822 = vunpack.c.h.b16 %v3452
    %v3823 = vunpack.c.l.b16 %v3453
    %v3824 = vunpack.c.h.b16 %v3453
    %v3825 = vunpack.c.l.b16 %v3454
    %v3826 = vunpack.c.h.b16 %v3454
    %v3827 = vunpack.c.l.b16 %v3455
    %v3828 = vunpack.c.h.b16 %v3455
    %v3829 = vunpack.c.l.b16 %v3456
    %v3830 = vunpack.c.h.b16 %v3456
    %v3831 = vunpack.c.l.b16 %v3457
    %v3832 = vunpack.c.h.b16 %v3457
    %v3833 = vunpack.c.l.b16 %v3458
    %v3834 = vunpack.c.h.b16 %v3458
    %v3835 = vunpack.c.l.b16 %v3459
    %v3836 = vunpack.c.h.b16 %v3459
    %v3837 = vunpack.c.l.b16 %v3460
    %v3838 = vunpack.c.h.b16 %v3460
    %v3839 = vunpack.c.l.b16 %v3461
    %v3840 = vunpack.c.h.b16 %v3461
    %v3841 = vunpack.c.l.b16 %v3462
    %v3842 = vunpack.c.h.b16 %v3462
    %v3843 = vunpack.c.l.b16 %v3463
    %v3844 = vunpack.c.h.b16 %v3463
    %v3845 = vunpack.c.l.b16 %v3464
    %v3846 = vunpack.c.h.b16 %v3464
    %v3847 = vunpack.c.l.b16 %v3465
    %v3848 = vunpack.c.h.b16 %v3465
    %v3849 = vunpack.c.l.b16 %v3466
    %v3850 = vunpack.c.h.b16 %v3466
    %v3851 = vpack.c.b16 %v3599, %v3595
    %v3852 = vpack.c.b16 %v3600, %v3596
    %v3853 = vpack.c.b16 %v3601, %v3597
    %v3854 = vpack.c.b16 %v3602, %v3598
    %v3855 = vpack.c.b16 %v3607, %v3603
    %v3856 = vpack.c.b16 %v3608, %v3604
    %v3857 = vpack.c.b16 %v3609, %v3605
    %v3858 = vpack.c.b16 %v3610, %v3606
    %v3859 = vpack.c.b16 %v3615, %v3611
    %v3860 = vpack.c.b16 %v3616, %v3612
    %v3861 = vpack.c.b16 %v3617, %v3613
    %v3862 = vpack.c.b16 %v3618, %v3614
    %v3863 = vpack.c.b16 %v3623, %v3619
    %v3864 = vpack.c.b16 %v3624, %v3620
    %v3865 = vpack.c.b16 %v3625, %v3621
    %v3866 = vpack.c.b16 %v3626, %v3622
    %v3867 = vpack.c.b16 %v3631, %v3627
    %v3868 = vpack.c.b16 %v3632, %v3628
    %v3869 = vpack.c.b16 %v3633, %v3629
    %v3870 = vpack.c.b16 %v3634, %v3630
    %v3871 = vpack.c.b16 %v3639, %v3635
    %v3872 = vpack.c.b16 %v3640, %v3636
    %v3873 = vpack.c.b16 %v3641, %v3637
    %v3874 = vpack.c.b16 %v3642, %v3638
    %v3875 = vpack.c.b16 %v3647, %v3643
    %v3876 = vpack.c.b16 %v3648, %v3644
    %v3877 = vpack.c.b16 %v3649, %v3645
    %v3878 = vpack.c.b16 %v3650, %v3646
    %v3879 = vpack.c.b16 %v3655, %v3651
    %v3880 = vpack.c.b16 %v3656, %v3652
    %v3881 = vpack.c.b16 %v3657, %v3653
    %v3882 = vpack.c.b16 %v3658, %v3654
    %v3883 = vpack.c.b16 %v3663, %v3659
    %v3884 = vpack.c.b16 %v3664, %v3660
    %v3885 = vpack.c.b16 %v3665, %v3661
    %v3886 = vpack.c.b16 %v3666, %v3662
    %v3887 = vpack.c.b16 %v3671, %v3667
    %v3888 = vpack.c.b16 %v3672, %v3668
    %v3889 = vpack.c.b16 %v3673, %v3669
    %v3890 = vpack.c.b16 %v3674, %v3670
    %v3891 = vpack.c.b16 %v3679, %v3675
    %v3892 = vpack.c.b16 %v3680, %v3676
    %v3893 = vpack.c.b16 %v3681, %v3677
    %v3894 = vpack.c.b16 %v3682, %v3678
    %v3895 = vpack.c.b16 %v3687, %v3683
    %v3896 = vpack.c.b16 %v3688, %v3684
    %v3897 = vpack.c.b16 %v3689, %v3685
    %v3898 = vpack.c.b16 %v3690, %v3686
    %v3899 = vpack.c.b16 %v3695, %v3691
    %v3900 = vpack.c.b16 %v3696, %v3692
    %v3901 = vpack.c.b16 %v3697, %v3693
    %v3902 = vpack.c.b16 %v3698, %v3694
    %v3903 = vpack.c.b16 %v3703, %v3699
    %v3904 = vpack.c.b16 %v3704, %v3700
    %v3905 = vpack.c.b16 %v3705, %v3701
    %v3906 = vpack.c.b16 %v3706, %v3702
    %v3907 = vpack.c.b16 %v3711, %v3707
    %v3908 = vpack.c.b16 %v3712, %v3708
    %v3909 = vpack.c.b16 %v3713, %v3709
    %v3910 = vpack.c.b16 %v3714, %v3710
    %v3911 = vpack.c.b16 %v3719, %v3715
    %v3912 = vpack.c.b16 %v3720, %v3716
    %v3913 = vpack.c.b16 %v3721, %v3717
    %v3914 = vpack.c.b16 %v3722, %v3718
    %v3915 = vpack.c.b16 %v3727, %v3723
    %v3916 = vpack.c.b16 %v3728, %v3724
    %v3917 = vpack.c.b16 %v3729, %v3725
    %v3918 = vpack.c.b16 %v3730, %v3726
    %v3919 = vpack.c.b16 %v3735, %v3731
    %v3920 = vpack.c.b16 %v3736, %v3732
    %v3921 = vpack.c.b16 %v3737, %v3733
    %v3922 = vpack.c.b16 %v3738, %v3734
    %v3923 = vpack.c.b16 %v3743, %v3739
    %v3924 = vpack.c.b16 %v3744, %v3740
    %v3925 = vpack.c.b16 %v3745, %v3741
    %v3926 = vpack.c.b16 %v3746, %v3742
    %v3927 = vpack.c.b16 %v3751, %v3747
    %v3928 = vpack.c.b16 %v3752, %v3748
    %v3929 = vpack.c.b16 %v3753, %v3749
    %v3930 = vpack.c.b16 %v3754, %v3750
    %v3931 = vpack.c.b16 %v3759, %v3755
    %v3932 = vpack.c.b16 %v3760, %v3756
    %v3933 = vpack.c.b16 %v3761, %v3757
    %v3934 = vpack.c.b16 %v3762, %v3758
    %v3935 = vpack.c.b16 %v3767, %v3763
    %v3936 = vpack.c.b16 %v3768, %v3764
    %v3937 = vpack.c.b16 %v3769, %v3765
    %v3938 = vpack.c.b16 %v3770, %v3766
    %v3939 = vpack.c.b16 %v3775, %v3771
    %v3940 = vpack.c.b16 %v3776, %v3772
    %v3941 = vpack.c.b16 %v3777, %v3773
    %v3942 = vpack.c.b16 %v3778, %v3774
    %v3943 = vpack.c.b16 %v3783, %v3779
    %v3944 = vpack.c.b16 %v3784, %v3780
    %v3945 = vpack.c.b16 %v3785, %v3781
    %v3946 = vpack.c.b16 %v3786, %v3782
    %v3947 = vpack.c.b16 %v3791, %v3787
    %v3948 = vpack.c.b16 %v3792, %v3788
    %v3949 = vpack.c.b16 %v3793, %v3789
    %v3950 = vpack.c.b16 %v3794, %v3790
    %v3951 = vpack.c.b16 %v3799, %v3795
    %v3952 = vpack.c.b16 %v3800, %v3796
    %v3953 = vpack.c.b16 %v3801, %v3797
    %v3954 = vpack.c.b16 %v3802, %v3798
    %v3955 = vpack.c.b16 %v3807, %v3803
    %v3956 = vpack.c.b16 %v3808, %v3804
    %v3957 = vpack.c.b16 %v3809, %v3805
    %v3958 = vpack.c.b16 %v3810, %v3806
    %v3959 = vpack.c.b16 %v3815, %v3811
    %v3960 = vpack.c.b16 %v3816, %v3812
    %v3961 = vpack.c.b16 %v3817, %v3813
    %v3962 = vpack.c.b16 %v3818, %v3814
    %v3963 = vpack.c.b16 %v3823, %v3819
    %v3964 = vpack.c.b16 %v3824, %v3820
    %v3965 = vpack.c.b16 %v3825, %v3821
    %v3966 = vpack.c.b16 %v3826, %v3822
    %v3967 = vpack.c.b16 %v3831, %v3827
    %v3968 = vpack.c.b16 %v3832, %v3828
    %v3969 = vpack.c.b16 %v3833, %v3829
    %v3970 = vpack.c.b16 %v3834, %v3830
    %v3971 = vpack.c.b16 %v3839, %v3835
    %v3972 = vpack.c.b16 %v3840, %v3836
    %v3973 = vpack.c.b16 %v3841, %v3837
    %v3974 = vpack.c.b16 %v3842, %v3838
    %v3975 = vpack.c.b16 %v3847, %v3843
    %v3976 = vpack.c.b16 %v3848, %v3844
    %v3977 = vpack.c.b16 %v3849, %v3845
    %v3978 = vpack.c.b16 %v3850, %v3846
    %4107 = vmatprep.subr.bf16.mxu0 %v3852
    %4108 = vmatpush1.bf16.msra.mxu0 %v3851
    %4109 = vmatprep.subr.bf16.mxu0 %v3856
    %4110 = vmatpush1.bf16.msra.mxu0 %v3855
    %4111 = vmatprep.subr.bf16.mxu0 %v3860
    %4112 = vmatpush1.bf16.msra.mxu0 %v3859
    %4113 = vmatprep.subr.bf16.mxu0 %v3864
    %4114 = vmatpush1.bf16.msra.mxu0 %v3863
    %4115 = vmatprep.subr.bf16.mxu0 %v3868
    %4116 = vmatpush1.bf16.msra.mxu0 %v3867
    %4117 = vmatprep.subr.bf16.mxu0 %v3872
    %4118 = vmatpush1.bf16.msra.mxu0 %v3871
    %4119 = vmatprep.subr.bf16.mxu0 %v3876
    %4120 = vmatpush1.bf16.msra.mxu0 %v3875
    %4121 = vmatprep.subr.bf16.mxu0 %v3880
    %4122 = vmatpush1.bf16.msra.mxu0 %v3879
    %4123 = vmatprep.subr.bf16.mxu0 %v3884
    %4124 = vmatpush1.bf16.msra.mxu0 %v3883
    %4125 = vmatprep.subr.bf16.mxu0 %v3888
    %4126 = vmatpush1.bf16.msra.mxu0 %v3887
    %4127 = vmatprep.subr.bf16.mxu0 %v3892
    %4128 = vmatpush1.bf16.msra.mxu0 %v3891
    %4129 = vmatprep.subr.bf16.mxu0 %v3896
    %4130 = vmatpush1.bf16.msra.mxu0 %v3895
    %4131 = vmatprep.subr.bf16.mxu0 %v3900
    %4132 = vmatpush1.bf16.msra.mxu0 %v3899
    %4133 = vmatprep.subr.bf16.mxu0 %v3904
    %4134 = vmatpush1.bf16.msra.mxu0 %v3903
    %4135 = vmatprep.subr.bf16.mxu0 %v3908
    %4136 = vmatpush1.bf16.msra.mxu0 %v3907
    %4137 = vmatprep.subr.bf16.mxu0 %v3912
    %4138 = vmatpush1.bf16.msra.mxu0 %v3911
    %4139 = vmatprep.mubr.bf16.mxu0 %v3335
    %4140 = vmatmul.mubr.bf16.gmra.mrb[0].mxu0 %v3334
    %v4141 = vpop.f32.mrb[0].mxu0
    %v4142 = vadd.f32 0.0, %v4141
    %v4143 = vpop.f32.mrb[0].mxu0
    %v4144 = vadd.f32 0.0, %v4143
    %v4145 = vpop.f32.mrb[0].mxu0
    %v4146 = vpop.f32.mrb[0].mxu0
    %4147 = vdwg.mxu0
    %4148 = vmatprep.subr.bf16.mxu0 %v3916
    %4149 = vmatpush1.bf16.msra.mxu0 %v3915
    %4150 = vmatprep.subr.bf16.mxu0 %v3920
    %4151 = vmatpush1.bf16.msra.mxu0 %v3919
    %4152 = vmatprep.subr.bf16.mxu0 %v3924
    %4153 = vmatpush1.bf16.msra.mxu0 %v3923
    %4154 = vmatprep.subr.bf16.mxu0 %v3928
    %4155 = vmatpush1.bf16.msra.mxu0 %v3927
    %4156 = vmatprep.subr.bf16.mxu0 %v3932
    %4157 = vmatpush1.bf16.msra.mxu0 %v3931
    %4158 = vmatprep.subr.bf16.mxu0 %v3936
    %4159 = vmatpush1.bf16.msra.mxu0 %v3935
    %4160 = vmatprep.subr.bf16.mxu0 %v3940
    %4161 = vmatpush1.bf16.msra.mxu0 %v3939
    %4162 = vmatprep.subr.bf16.mxu0 %v3944
    %4163 = vmatpush1.bf16.msra.mxu0 %v3943
    %4164 = vmatprep.subr.bf16.mxu0 %v3948
    %4165 = vmatpush1.bf16.msra.mxu0 %v3947
    %4166 = vmatprep.subr.bf16.mxu0 %v3952
    %4167 = vmatpush1.bf16.msra.mxu0 %v3951
    %4168 = vmatprep.subr.bf16.mxu0 %v3956
    %4169 = vmatpush1.bf16.msra.mxu0 %v3955
    %4170 = vmatprep.subr.bf16.mxu0 %v3960
    %4171 = vmatpush1.bf16.msra.mxu0 %v3959
    %4172 = vmatprep.subr.bf16.mxu0 %v3964
    %4173 = vmatpush1.bf16.msra.mxu0 %v3963
    %4174 = vmatprep.subr.bf16.mxu0 %v3968
    %4175 = vmatpush1.bf16.msra.mxu0 %v3967
    %4176 = vmatprep.subr.bf16.mxu0 %v3972
    %4177 = vmatpush1.bf16.msra.mxu0 %v3971
    %4178 = vmatprep.subr.bf16.mxu0 %v3976
    %4179 = vmatpush1.bf16.msra.mxu0 %v3975
    %4180 = vmatprep.mubr.bf16.mxu0 %v3337
    %4181 = vmatmul.mubr.bf16.gmra.mrb[0].mxu0 %v3336
    %v4182 = vpop.f32.mrb[0].mxu0
    %v4183 = vadd.f32 %v4142, %v4182
    %v4184 = vpop.f32.mrb[0].mxu0
    %v4185 = vadd.f32 %v4144, %v4184
    %v4186 = vpop.f32.mrb[0].mxu0
    %v4187 = vpop.f32.mrb[0].mxu0
    %4188 = vdwg.mxu0
    %4189 = vmatprep.subr.bf16.mxu0 %v3854
    %4190 = vmatpush1.bf16.msra.mxu0 %v3853
    %4191 = vmatprep.subr.bf16.mxu0 %v3858
    %4192 = vmatpush1.bf16.msra.mxu0 %v3857
    %4193 = vmatprep.subr.bf16.mxu0 %v3862
    %4194 = vmatpush1.bf16.msra.mxu0 %v3861
    %4195 = vmatprep.subr.bf16.mxu0 %v3866
    %4196 = vmatpush1.bf16.msra.mxu0 %v3865
    %4197 = vmatprep.subr.bf16.mxu0 %v3870
    %4198 = vmatpush1.bf16.msra.mxu0 %v3869
    %4199 = vmatprep.subr.bf16.mxu0 %v3874
    %4200 = vmatpush1.bf16.msra.mxu0 %v3873
    %4201 = vmatprep.subr.bf16.mxu0 %v3878
    %4202 = vmatpush1.bf16.msra.mxu0 %v3877
    %4203 = vmatprep.subr.bf16.mxu0 %v3882
    %4204 = vmatpush1.bf16.msra.mxu0 %v3881
    %4205 = vmatprep.subr.bf16.mxu0 %v3886
    %4206 = vmatpush1.bf16.msra.mxu0 %v3885
    %4207 = vmatprep.subr.bf16.mxu0 %v3890
    %4208 = vmatpush1.bf16.msra.mxu0 %v3889
    %4209 = vmatprep.subr.bf16.mxu0 %v3894
    %4210 = vmatpush1.bf16.msra.mxu0 %v3893
    %4211 = vmatprep.subr.bf16.mxu0 %v3898
    %4212 = vmatpush1.bf16.msra.mxu0 %v3897
    %4213 = vmatprep.subr.bf16.mxu0 %v3902
    %4214 = vmatpush1.bf16.msra.mxu0 %v3901
    %4215 = vmatprep.subr.bf16.mxu0 %v3906
    %4216 = vmatpush1.bf16.msra.mxu0 %v3905
    %4217 = vmatprep.subr.bf16.mxu0 %v3910
    %4218 = vmatpush1.bf16.msra.mxu0 %v3909
    %4219 = vmatprep.subr.bf16.mxu0 %v3914
    %4220 = vmatpush1.bf16.msra.mxu0 %v3913
    %4221 = vmatprep.mubr.bf16.mxu0 %v3335
    %4222 = vmatmul.mubr.bf16.gmra.mrb[0].mxu0 %v3334
    %v4223 = vpop.f32.mrb[0].mxu0
    %v4224 = vadd.f32 0.0, %v4223
    %v4225 = vpop.f32.mrb[0].mxu0
    %v4226 = vadd.f32 0.0, %v4225
    %v4227 = vpop.f32.mrb[0].mxu0
    %v4228 = vpop.f32.mrb[0].mxu0
    %4229 = vdwg.mxu0
    %4230 = vmatprep.subr.bf16.mxu0 %v3918
    %4231 = vmatpush1.bf16.msra.mxu0 %v3917
    %4232 = vmatprep.subr.bf16.mxu0 %v3922
    %4233 = vmatpush1.bf16.msra.mxu0 %v3921
    %4234 = vmatprep.subr.bf16.mxu0 %v3926
    %4235 = vmatpush1.bf16.msra.mxu0 %v3925
    %4236 = vmatprep.subr.bf16.mxu0 %v3930
    %4237 = vmatpush1.bf16.msra.mxu0 %v3929
    %4238 = vmatprep.subr.bf16.mxu0 %v3934
    %4239 = vmatpush1.bf16.msra.mxu0 %v3933
    %4240 = vmatprep.subr.bf16.mxu0 %v3938
    %4241 = vmatpush1.bf16.msra.mxu0 %v3937
    %4242 = vmatprep.subr.bf16.mxu0 %v3942
    %4243 = vmatpush1.bf16.msra.mxu0 %v3941
    %4244 = vmatprep.subr.bf16.mxu0 %v3946
    %4245 = vmatpush1.bf16.msra.mxu0 %v3945
    %4246 = vmatprep.subr.bf16.mxu0 %v3950
    %4247 = vmatpush1.bf16.msra.mxu0 %v3949
    %4248 = vmatprep.subr.bf16.mxu0 %v3954
    %4249 = vmatpush1.bf16.msra.mxu0 %v3953
    %4250 = vmatprep.subr.bf16.mxu0 %v3958
    %4251 = vmatpush1.bf16.msra.mxu0 %v3957
    %4252 = vmatprep.subr.bf16.mxu0 %v3962
    %4253 = vmatpush1.bf16.msra.mxu0 %v3961
    %4254 = vmatprep.subr.bf16.mxu0 %v3966
    %4255 = vmatpush1.bf16.msra.mxu0 %v3965
    %4256 = vmatprep.subr.bf16.mxu0 %v3970
    %4257 = vmatpush1.bf16.msra.mxu0 %v3969
    %4258 = vmatprep.subr.bf16.mxu0 %v3974
    %4259 = vmatpush1.bf16.msra.mxu0 %v3973
    %4260 = vmatprep.subr.bf16.mxu0 %v3978
    %4261 = vmatpush1.bf16.msra.mxu0 %v3977
    %4262 = vmatprep.mubr.bf16.mxu0 %v3337
    %4263 = vmatmul.mubr.bf16.gmra.mrb[0].mxu0 %v3336
    %v4264 = vpop.f32.mrb[0].mxu0
    %v4265 = vadd.f32 %v4224, %v4264
    %v4266 = vpop.f32.mrb[0].mxu0
    %v4267 = vadd.f32 %v4226, %v4266
    %v4268 = vpop.f32.mrb[0].mxu0
    %v4269 = vpop.f32.mrb[0].mxu0
    %4270 = vdwg.mxu0
    %v4271 = vrot.slane %v4183, 4
    %v4272 = vadd.f32 %v4183, %v4271
    %v4273 = vrot.slane %v4272, 2
    %v4274 = vadd.f32 %v4272, %v4273
    %v4275 = vrot.slane %v4274, 1
    %v4276 = vadd.f32 %v4274, %v4275
    %v4277 = vrot.slane %v4185, 4
    %v4278 = vadd.f32 %v4185, %v4277
    %v4279 = vrot.slane %v4278, 2
    %v4280 = vadd.f32 %v4278, %v4279
    %v4281 = vrot.slane %v4280, 1
    %v4282 = vadd.f32 %v4280, %v4281
    %v4283 = vrot.slane %v4265, 4
    %v4284 = vadd.f32 %v4265, %v4283
    %v4285 = vrot.slane %v4284, 2
    %v4286 = vadd.f32 %v4284, %v4285
    %v4287 = vrot.slane %v4286, 1
    %v4288 = vadd.f32 %v4286, %v4287
    %v4289 = vrot.slane %v4267, 4
    %v4290 = vadd.f32 %v4267, %v4289
    %v4291 = vrot.slane %v4290, 2
    %v4292 = vadd.f32 %v4290, %v4291
    %v4293 = vrot.slane %v4292, 1
    %v4294 = vadd.f32 %v4292, %v4293
    %v4295 = vmul.f32 %v4276, 0.125
    %v4296 = vmul.f32 %v4282, 0.125
    %v4297 = vmul.f32 %v4288, 0.125
    %v4298 = vmul.f32 %v4294, 0.125
    %v4299 = vmul.f32 %v4183, %v4183
    %v4300 = vmul.f32 %v4185, %v4185
    %v4301 = vmul.f32 %v4265, %v4265
    %v4302 = vmul.f32 %v4267, %v4267
    %v4303 = vrot.slane %v4299, 4
    %v4304 = vadd.f32 %v4299, %v4303
    %v4305 = vrot.slane %v4304, 2
    %v4306 = vadd.f32 %v4304, %v4305
    %v4307 = vrot.slane %v4306, 1
    %v4308 = vadd.f32 %v4306, %v4307
    %v4309 = vrot.slane %v4300, 4
    %v4310 = vadd.f32 %v4300, %v4309
    %v4311 = vrot.slane %v4310, 2
    %v4312 = vadd.f32 %v4310, %v4311
    %v4313 = vrot.slane %v4312, 1
    %v4314 = vadd.f32 %v4312, %v4313
    %v4315 = vrot.slane %v4301, 4
    %v4316 = vadd.f32 %v4301, %v4315
    %v4317 = vrot.slane %v4316, 2
    %v4318 = vadd.f32 %v4316, %v4317
    %v4319 = vrot.slane %v4318, 1
    %v4320 = vadd.f32 %v4318, %v4319
    %v4321 = vrot.slane %v4302, 4
    %v4322 = vadd.f32 %v4302, %v4321
    %v4323 = vrot.slane %v4322, 2
    %v4324 = vadd.f32 %v4322, %v4323
    %v4325 = vrot.slane %v4324, 1
    %v4326 = vadd.f32 %v4324, %v4325
    %v4327 = vmul.f32 %v4308, 0.125
    %v4328 = vmul.f32 %v4314, 0.125
    %v4329 = vmul.f32 %v4320, 0.125
    %v4330 = vmul.f32 %v4326, 0.125
    %v4331 = vmul.f32 %v4295, %v4295
    %v4332 = vmul.f32 %v4296, %v4296
    %v4333 = vmul.f32 %v4297, %v4297
    %v4334 = vmul.f32 %v4298, %v4298
    %v4335 = vsub.f32 %v4327, %v4331
    %v4336 = vsub.f32 %v4328, %v4332
    %v4337 = vsub.f32 %v4329, %v4333
    %v4338 = vsub.f32 %v4330, %v4334
    %v4339 = vadd.f32 %v4335, 1e-05
    %v4340 = vadd.f32 %v4336, 1e-05
    %v4341 = vadd.f32 %v4337, 1e-05
    %v4342 = vadd.f32 %v4338, 1e-05
    %v4343 = vrsqrt.pop %v4339
    %v4344 = vrsqrt.pop %v4340
    %v4345 = vrsqrt.pop %v4341
    %v4346 = vrsqrt.pop %v4342
    %v4347 = vmul.f32 %v84, %v4343
    %v4348 = vmul.f32 %v85, %v4344
    %v4349 = vmul.f32 %v86, %v4345
    %v4350 = vmul.f32 %v87, %v4346
    %v4351 = vmul.f32 %v4295, %v4347
    %v4352 = vmul.f32 %v4296, %v4348
    %v4353 = vmul.f32 %v4297, %v4349
    %v4354 = vmul.f32 %v4298, %v4350
    %v4359 = vrot.slane %v4351, 4
    %v4360 = vrot.slane %v4352, 4
    %v4361 = vrot.slane %v4353, 4
    %v4362 = vrot.slane %v4354, 4
    %v4367 = vsub.f32 %v84, %v4359
    %v4368 = vsub.f32 %v85, %v4360
    %v4369 = vsub.f32 %v86, %v4361
    %v4370 = vsub.f32 %v87, %v4362
    %v4371 = vlaneseq
    %v4372 = vshrl.u32 %v4371, 7
    %v4373 = vsub.s32 3, %v4372
    %v4374 = vrot.slane %v4347, %v4373
    %v4375 = vlaneseq
    %v4376 = vshrl.u32 %v4375, 7
    %v4377 = vsub.s32 3, %v4376
    %v4378 = vrot.slane %v4348, %v4377
    %v4379 = vlaneseq
    %v4380 = vshrl.u32 %v4379, 7
    %v4381 = vsub.s32 3, %v4380
    %v4382 = vrot.slane %v4349, %v4381
    %v4383 = vlaneseq
    %v4384 = vshrl.u32 %v4383, 7
    %v4385 = vsub.s32 3, %v4384
    %v4386 = vrot.slane %v4350, %v4385
    %v4387 = vmul.f32 %v4183, %v4374
    %v4388 = vmul.f32 %v4185, %v4378
    %v4389 = vmul.f32 %v4265, %v4382
    %v4390 = vmul.f32 %v4267, %v4386
    %v4391 = vlaneseq
    %v4392 = vshrl.u32 %v4391, 7
    %v4393 = vsub.s32 7, %v4392
    %v4394 = vrot.slane %v4367, %v4393
    %v4395 = vlaneseq
    %v4396 = vshrl.u32 %v4395, 7
    %v4397 = vsub.s32 7, %v4396
    %v4398 = vrot.slane %v4368, %v4397
    %v4399 = vlaneseq
    %v4400 = vshrl.u32 %v4399, 7
    %v4401 = vsub.s32 7, %v4400
    %v4402 = vrot.slane %v4369, %v4401
    %v4403 = vlaneseq
    %v4404 = vshrl.u32 %v4403, 7
    %v4405 = vsub.s32 7, %v4404
    %v4406 = vrot.slane %v4370, %v4405
    %v4407 = vadd.f32 %v4387, %v4394
    %v4408 = vadd.f32 %v4388, %v4398
    %v4409 = vadd.f32 %v4389, %v4402
    %v4410 = vadd.f32 %v4390, %v4406
    %v4411 = vmax.f32 %v4407, 0.0
    %v4412 = vmax.f32 %v4408, 0.0
    %v4413 = vmax.f32 %v4409, 0.0
    %v4414 = vmax.f32 %v4410, 0.0
    %v4415 = vpack.c.bf16 %v4411, %v4411
    %v4416 = vpack.c.bf16 %v4412, %v4412
    %v4417 = vpack.c.bf16 %v4413, %v4413
    %v4418 = vpack.c.bf16 %v4414, %v4414
    %v4419 = vld [vmem:[#allocation8] sm:$0xf]
    %v4420 = vld [vmem:[#allocation8 + $0x4] sm:$0xf]
    %v4421 = vld [vmem:[#allocation8 + $0x8] sm:$0xf]
    %v4422 = vld [vmem:[#allocation8 + $0xc] sm:$0xf]
    %v4423 = vld [vmem:[#allocation8 + $0x10] sm:$0xf]
    %v4424 = vld [vmem:[#allocation8 + $0x14] sm:$0xf]
    %v4425 = vld [vmem:[#allocation8 + $0x18] sm:$0xf]
    %v4426 = vld [vmem:[#allocation8 + $0x1c] sm:$0xf]
    %v4427 = vld [vmem:[#allocation8 + $0x20] sm:$0xf]
    %v4428 = vld [vmem:[#allocation8 + $0x24] sm:$0xf]
    %v4429 = vld [vmem:[#allocation8 + $0x28] sm:$0xf]
    %v4430 = vld [vmem:[#allocation8 + $0x2c] sm:$0xf]
    %v4431 = vld [vmem:[#allocation8 + $0x30] sm:$0xf]
    %v4432 = vld [vmem:[#allocation8 + $0x34] sm:$0xf]
    %v4433 = vld [vmem:[#allocation8 + $0x38] sm:$0xf]
    %v4434 = vld [vmem:[#allocation8 + $0x3c] sm:$0xf]
    %v4435 = vld [vmem:[#allocation8 + $0x40] sm:$0xf]
    %v4436 = vld [vmem:[#allocation8 + $0x44] sm:$0xf]
    %v4437 = vld [vmem:[#allocation8 + $0x48] sm:$0xf]
    %v4438 = vld [vmem:[#allocation8 + $0x4c] sm:$0xf]
    %v4439 = vld [vmem:[#allocation8 + $0x50] sm:$0xf]
    %v4440 = vld [vmem:[#allocation8 + $0x54] sm:$0xf]
    %v4441 = vld [vmem:[#allocation8 + $0x58] sm:$0xf]
    %v4442 = vld [vmem:[#allocation8 + $0x5c] sm:$0xf]
    %v4443 = vld [vmem:[#allocation8 + $0x60] sm:$0xf]
    %v4444 = vld [vmem:[#allocation8 + $0x64] sm:$0xf]
    %v4445 = vld [vmem:[#allocation8 + $0x68] sm:$0xf]
    %v4446 = vld [vmem:[#allocation8 + $0x6c] sm:$0xf]
    %v4447 = vld [vmem:[#allocation8 + $0x70] sm:$0xf]
    %v4448 = vld [vmem:[#allocation8 + $0x74] sm:$0xf]
    %v4449 = vld [vmem:[#allocation8 + $0x78] sm:$0xf]
    %v4450 = vld [vmem:[#allocation8 + $0x7c] sm:$0xf]
    %v4451 = vld [vmem:[#allocation8 + $0x80] sm:$0xf]
    %v4452 = vld [vmem:[#allocation8 + $0x84] sm:$0xf]
    %v4453 = vld [vmem:[#allocation8 + $0x88] sm:$0xf]
    %v4454 = vld [vmem:[#allocation8 + $0x8c] sm:$0xf]
    %v4455 = vld [vmem:[#allocation8 + $0x90] sm:$0xf]
    %v4456 = vld [vmem:[#allocation8 + $0x94] sm:$0xf]
    %v4457 = vld [vmem:[#allocation8 + $0x98] sm:$0xf]
    %v4458 = vld [vmem:[#allocation8 + $0x9c] sm:$0xf]
    %v4459 = vld [vmem:[#allocation8 + $0xa0] sm:$0xf]
    %v4460 = vld [vmem:[#allocation8 + $0xa4] sm:$0xf]
    %v4461 = vld [vmem:[#allocation8 + $0xa8] sm:$0xf]
    %v4462 = vld [vmem:[#allocation8 + $0xac] sm:$0xf]
    %v4463 = vld [vmem:[#allocation8 + $0xb0] sm:$0xf]
    %v4464 = vld [vmem:[#allocation8 + $0xb4] sm:$0xf]
    %v4465 = vld [vmem:[#allocation8 + $0xb8] sm:$0xf]
    %v4466 = vld [vmem:[#allocation8 + $0xbc] sm:$0xf]
    %v4467 = vld [vmem:[#allocation8 + $0xc0] sm:$0xf]
    %v4468 = vld [vmem:[#allocation8 + $0xc4] sm:$0xf]
    %v4469 = vld [vmem:[#allocation8 + $0xc8] sm:$0xf]
    %v4470 = vld [vmem:[#allocation8 + $0xcc] sm:$0xf]
    %v4471 = vld [vmem:[#allocation8 + $0xd0] sm:$0xf]
    %v4472 = vld [vmem:[#allocation8 + $0xd4] sm:$0xf]
    %v4473 = vld [vmem:[#allocation8 + $0xd8] sm:$0xf]
    %v4474 = vld [vmem:[#allocation8 + $0xdc] sm:$0xf]
    %v4475 = vld [vmem:[#allocation8 + $0xe0] sm:$0xf]
    %v4476 = vld [vmem:[#allocation8 + $0xe4] sm:$0xf]
    %v4477 = vld [vmem:[#allocation8 + $0xe8] sm:$0xf]
    %v4478 = vld [vmem:[#allocation8 + $0xec] sm:$0xf]
    %v4479 = vld [vmem:[#allocation8 + $0xf0] sm:$0xf]
    %v4480 = vld [vmem:[#allocation8 + $0xf4] sm:$0xf]
    %v4481 = vld [vmem:[#allocation8 + $0xf8] sm:$0xf]
    %v4482 = vld [vmem:[#allocation8 + $0xfc] sm:$0xf]
    %v4483 = vld [vmem:[#allocation10] sm:$0x1]
    %v4485 = vlaneseq
    %v4486 = vshrl.u32 %v4485, 7
    %v4487 = vsub.s32 0, %v4486
    %v4488 = vrot.slane %v4483, %v4487
    %v4554 = vunpack.c.l.b16 %v4419
    %v4555 = vunpack.c.l.b16 %v4420
    %v4556 = vunpack.c.l.b16 %v4421
    %v4557 = vunpack.c.l.b16 %v4422
    %v4558 = vunpack.c.l.b16 %v4423
    %v4559 = vunpack.c.l.b16 %v4424
    %v4560 = vunpack.c.l.b16 %v4425
    %v4561 = vunpack.c.l.b16 %v4426
    %v4562 = vunpack.c.l.b16 %v4427
    %v4563 = vunpack.c.l.b16 %v4428
    %v4564 = vunpack.c.l.b16 %v4429
    %v4565 = vunpack.c.l.b16 %v4430
    %v4566 = vunpack.c.l.b16 %v4431
    %v4567 = vunpack.c.l.b16 %v4432
    %v4568 = vunpack.c.l.b16 %v4433
    %v4569 = vunpack.c.l.b16 %v4434
    %v4570 = vunpack.c.l.b16 %v4435
    %v4571 = vunpack.c.l.b16 %v4436
    %v4572 = vunpack.c.l.b16 %v4437
    %v4573 = vunpack.c.l.b16 %v4438
    %v4574 = vunpack.c.l.b16 %v4439
    %v4575 = vunpack.c.l.b16 %v4440
    %v4576 = vunpack.c.l.b16 %v4441
    %v4577 = vunpack.c.l.b16 %v4442
    %v4578 = vunpack.c.l.b16 %v4443
    %v4579 = vunpack.c.l.b16 %v4444
    %v4580 = vunpack.c.l.b16 %v4445
    %v4581 = vunpack.c.l.b16 %v4446
    %v4582 = vunpack.c.l.b16 %v4447
    %v4583 = vunpack.c.l.b16 %v4448
    %v4584 = vunpack.c.l.b16 %v4449
    %v4585 = vunpack.c.l.b16 %v4450
    %v4586 = vunpack.c.l.b16 %v4451
    %v4587 = vunpack.c.l.b16 %v4452
    %v4588 = vunpack.c.l.b16 %v4453
    %v4589 = vunpack.c.l.b16 %v4454
    %v4590 = vunpack.c.l.b16 %v4455
    %v4591 = vunpack.c.l.b16 %v4456
    %v4592 = vunpack.c.l.b16 %v4457
    %v4593 = vunpack.c.l.b16 %v4458
    %v4594 = vunpack.c.l.b16 %v4459
    %v4595 = vunpack.c.l.b16 %v4460
    %v4596 = vunpack.c.l.b16 %v4461
    %v4597 = vunpack.c.l.b16 %v4462
    %v4598 = vunpack.c.l.b16 %v4463
    %v4599 = vunpack.c.l.b16 %v4464
    %v4600 = vunpack.c.l.b16 %v4465
    %v4601 = vunpack.c.l.b16 %v4466
    %v4602 = vunpack.c.l.b16 %v4467
    %v4603 = vunpack.c.l.b16 %v4468
    %v4604 = vunpack.c.l.b16 %v4469
    %v4605 = vunpack.c.l.b16 %v4470
    %v4606 = vunpack.c.l.b16 %v4471
    %v4607 = vunpack.c.l.b16 %v4472
    %v4608 = vunpack.c.l.b16 %v4473
    %v4609 = vunpack.c.l.b16 %v4474
    %v4610 = vunpack.c.l.b16 %v4475
    %v4611 = vunpack.c.l.b16 %v4476
    %v4612 = vunpack.c.l.b16 %v4477
    %v4613 = vunpack.c.l.b16 %v4478
    %v4614 = vunpack.c.l.b16 %v4479
    %v4615 = vunpack.c.l.b16 %v4480
    %v4616 = vunpack.c.l.b16 %v4481
    %v4617 = vunpack.c.l.b16 %v4482
    %v4618 = vpack.c.b16 %v4555, %v4554
    %v4619 = vpack.c.b16 %v4557, %v4556
    %v4620 = vpack.c.b16 %v4559, %v4558
    %v4621 = vpack.c.b16 %v4561, %v4560
    %v4622 = vpack.c.b16 %v4563, %v4562
    %v4623 = vpack.c.b16 %v4565, %v4564
    %v4624 = vpack.c.b16 %v4567, %v4566
    %v4625 = vpack.c.b16 %v4569, %v4568
    %v4626 = vpack.c.b16 %v4571, %v4570
    %v4627 = vpack.c.b16 %v4573, %v4572
    %v4628 = vpack.c.b16 %v4575, %v4574
    %v4629 = vpack.c.b16 %v4577, %v4576
    %v4630 = vpack.c.b16 %v4579, %v4578
    %v4631 = vpack.c.b16 %v4581, %v4580
    %v4632 = vpack.c.b16 %v4583, %v4582
    %v4633 = vpack.c.b16 %v4585, %v4584
    %v4634 = vpack.c.b16 %v4587, %v4586
    %v4635 = vpack.c.b16 %v4589, %v4588
    %v4636 = vpack.c.b16 %v4591, %v4590
    %v4637 = vpack.c.b16 %v4593, %v4592
    %v4638 = vpack.c.b16 %v4595, %v4594
    %v4639 = vpack.c.b16 %v4597, %v4596
    %v4640 = vpack.c.b16 %v4599, %v4598
    %v4641 = vpack.c.b16 %v4601, %v4600
    %v4642 = vpack.c.b16 %v4603, %v4602
    %v4643 = vpack.c.b16 %v4605, %v4604
    %v4644 = vpack.c.b16 %v4607, %v4606
    %v4645 = vpack.c.b16 %v4609, %v4608
    %v4646 = vpack.c.b16 %v4611, %v4610
    %v4647 = vpack.c.b16 %v4613, %v4612
    %v4648 = vpack.c.b16 %v4615, %v4614
    %v4649 = vpack.c.b16 %v4617, %v4616
    %4682 = vmatprep.subr.bf16.mxu0 0
    %4683 = vmatpush1.bf16.msra.mxu0 %v4618
    %4684 = vmatprep.subr.bf16.mxu0 0
    %4685 = vmatpush1.bf16.msra.mxu0 %v4619
    %4686 = vmatprep.subr.bf16.mxu0 0
    %4687 = vmatpush1.bf16.msra.mxu0 %v4620
    %4688 = vmatprep.subr.bf16.mxu0 0
    %4689 = vmatpush1.bf16.msra.mxu0 %v4621
    %4690 = vmatprep.subr.bf16.mxu0 0
    %4691 = vmatpush1.bf16.msra.mxu0 %v4622
    %4692 = vmatprep.subr.bf16.mxu0 0
    %4693 = vmatpush1.bf16.msra.mxu0 %v4623
    %4694 = vmatprep.subr.bf16.mxu0 0
    %4695 = vmatpush1.bf16.msra.mxu0 %v4624
    %4696 = vmatprep.subr.bf16.mxu0 0
    %4697 = vmatpush1.bf16.msra.mxu0 %v4625
    %4698 = vmatprep.subr.bf16.mxu0 0
    %4699 = vmatpush1.bf16.msra.mxu0 %v4626
    %4700 = vmatprep.subr.bf16.mxu0 0
    %4701 = vmatpush1.bf16.msra.mxu0 %v4627
    %4702 = vmatprep.subr.bf16.mxu0 0
    %4703 = vmatpush1.bf16.msra.mxu0 %v4628
    %4704 = vmatprep.subr.bf16.mxu0 0
    %4705 = vmatpush1.bf16.msra.mxu0 %v4629
    %4706 = vmatprep.subr.bf16.mxu0 0
    %4707 = vmatpush1.bf16.msra.mxu0 %v4630
    %4708 = vmatprep.subr.bf16.mxu0 0
    %4709 = vmatpush1.bf16.msra.mxu0 %v4631
    %4710 = vmatprep.subr.bf16.mxu0 0
    %4711 = vmatpush1.bf16.msra.mxu0 %v4632
    %4712 = vmatprep.subr.bf16.mxu0 0
    %4713 = vmatpush1.bf16.msra.mxu0 %v4633
    %4714 = vmatprep.mubr.bf16.mxu0 %v4416
    %4715 = vmatmul.mubr.bf16.gmra.mrb[0].mxu0 %v4415
    %v4716 = vpop.f32.mrb[0].mxu0
    %v4717 = vadd.f32 %v4488, %v4716
    %v4718 = vpop.f32.mrb[0].mxu0
    %v4719 = vpop.f32.mrb[0].mxu0
    %v4720 = vpop.f32.mrb[0].mxu0
    %4721 = vdwg.mxu0
    %4722 = vmatprep.subr.bf16.mxu0 0
    %4723 = vmatpush1.bf16.msra.mxu0 %v4634
    %4724 = vmatprep.subr.bf16.mxu0 0
    %4725 = vmatpush1.bf16.msra.mxu0 %v4635
    %4726 = vmatprep.subr.bf16.mxu0 0
    %4727 = vmatpush1.bf16.msra.mxu0 %v4636
    %4728 = vmatprep.subr.bf16.mxu0 0
    %4729 = vmatpush1.bf16.msra.mxu0 %v4637
    %4730 = vmatprep.subr.bf16.mxu0 0
    %4731 = vmatpush1.bf16.msra.mxu0 %v4638
    %4732 = vmatprep.subr.bf16.mxu0 0
    %4733 = vmatpush1.bf16.msra.mxu0 %v4639
    %4734 = vmatprep.subr.bf16.mxu0 0
    %4735 = vmatpush1.bf16.msra.mxu0 %v4640
    %4736 = vmatprep.subr.bf16.mxu0 0
    %4737 = vmatpush1.bf16.msra.mxu0 %v4641
    %4738 = vmatprep.subr.bf16.mxu0 0
    %4739 = vmatpush1.bf16.msra.mxu0 %v4642
    %4740 = vmatprep.subr.bf16.mxu0 0
    %4741 = vmatpush1.bf16.msra.mxu0 %v4643
    %4742 = vmatprep.subr.bf16.mxu0 0
    %4743 = vmatpush1.bf16.msra.mxu0 %v4644
    %4744 = vmatprep.subr.bf16.mxu0 0
    %4745 = vmatpush1.bf16.msra.mxu0 %v4645
    %4746 = vmatprep.subr.bf16.mxu0 0
    %4747 = vmatpush1.bf16.msra.mxu0 %v4646
    %4748 = vmatprep.subr.bf16.mxu0 0
    %4749 = vmatpush1.bf16.msra.mxu0 %v4647
    %4750 = vmatprep.subr.bf16.mxu0 0
    %4751 = vmatpush1.bf16.msra.mxu0 %v4648
    %4752 = vmatprep.subr.bf16.mxu0 0
    %4753 = vmatpush1.bf16.msra.mxu0 %v4649
    %4754 = vmatprep.mubr.bf16.mxu0 %v4418
    %4755 = vmatmul.mubr.bf16.gmra.mrb[0].mxu0 %v4417
    %v4756 = vpop.f32.mrb[0].mxu0
    %v4757 = vadd.f32 %v4717, %v4756
    %v4758 = vpop.f32.mrb[0].mxu0
    %v4759 = vpop.f32.mrb[0].mxu0
    %v4760 = vpop.f32.mrb[0].mxu0
    %4761 = vdwg.mxu0
    %4762 = vst [vmem:[#allocation11] sm:$0xff] %v4757
    // Predicated region
    $region42: #{tpu_custom_call.1} parent=1 // pred_check
      _
    $region43: #{tpu_custom_call.1} parent=1 // pred_check_branch
      %4764 = sbr.rel (0) target = $region45
    $region44: #{tpu_custom_call.1} parent=1 // pred_region
      %s4766 = ssub.s32 128, 128
      %4767 = vsyncadd [#allocation4], %s4766
      %s4769 = sshll.u32 [#allocation11], 4
      %s4770 = int_to_ptr.vmem [resolvable:$true] %s4769
      %4772 = dma.vmem_to_hbm [thread:$0]  %s4770, 128, %s5, [#allocation4]
    $region45: #{tpu_custom_call.1} parent=1 // pred_fallthru
      _
    // Predicated region
    $region46: #{tpu_custom_call.1} parent=1 // pred_check
      _
    $region47: #{tpu_custom_call.1} parent=1 // pred_check_branch
      %4774 = sbr.rel (0) target = $region49
    $region48: #{tpu_custom_call.1} parent=1 // pred_region
      %4775 = dma.done [#allocation4], 128
    $region49: #{tpu_custom_call.1} parent=1 // pred_fallthru
      _
    %4776 = vsyncpa [#allocation3], 1
    %4777 = vsyncpa [#allocation6], 1
    %4778 = vsyncpa [#allocation9], 1
    %4779 = vsyncpa [#allocation4], 1

</llo_original>
